<compile_context>
chip_gen: v7x
topology: tpu7x:2x2x1
jax: 0.10.0
libtpu: 0.0.40
codegen_flags: <defaults>
</compile_context>

<pallas_src>
import numpy as np
import jax
import jax.numpy as jnp
from jax import lax
from jax.experimental import pallas as pl
from jax.experimental.pallas import tpu as pltpu


LANE = 128   # lane width: channels padded to a multiple of this
ROW_PAD = 16  # flattened-plane rows padded to a multiple of this (bf16 sublane packing)


def _round_up(x, m):
    return (x + m - 1) // m * m


def _make_resblock_kernel(PPp, Mspan, shifts, center, Cip, Cop, has_downsample):
    """Fused residual block for one image.

    x_ref  : (PPp, Cip)  bf16  -- spatially zero-padded input plane, rows flattened
    mask   : (PPp, 1)    f32   -- 1.0 on rows that are real HxW output positions
    w1     : (9*Cip, Cop) bf16 -- conv1 weights, BN1 scale folded, tap-major K
    b1     : (1, Cop)    f32   -- folded BN1 bias
    w2     : (9*Cop, Cop) bf16 -- conv2 weights, BN2 scale folded
    b2     : (1, Cop)    f32
    wds/bds: optional 1x1 downsample conv (+ folded BN) weights/bias
    out    : (PPp, Cop)  f32   -- rows [0, Mspan) hold the (scattered) HxW outputs
    """

    def kernel(*refs):
        if has_downsample:
            (x_ref, mask_ref, w1_ref, b1_ref, w2_ref, b2_ref,
             wds_ref, bds_ref, out_ref) = refs
        else:
            (x_ref, mask_ref, w1_ref, b1_ref, w2_ref, b2_ref, out_ref) = refs

        # Load the padded plane once; all 9 taps and the identity path reuse it.
        xf = x_ref[...].astype(jnp.float32)            # (PPp, Cip)
        mask = mask_ref[0:Mspan, :]                    # (Mspan, 1)

        # ---- conv1 (+ folded BN1 scale) as ONE matmul: im2col over 9 row shifts ----
        cols1 = jnp.concatenate(
            [xf[s:s + Mspan, :] for s in shifts], axis=1).astype(jnp.bfloat16)
        acc1 = jnp.dot(cols1, w1_ref[...], preferred_element_type=jnp.float32)

        # bias + ReLU, then zero every row that is not a real output position so the
        # re-embedded plane below has clean zero borders.
        h = jnp.maximum(acc1 + b1_ref[...], 0.0) * mask            # (Mspan, Cop) f32

        # Re-embed h into a zero-padded (H+2, W+2) plane without a scratch round trip:
        # output row r maps to padded-plane row r + center, so pad `center` zero rows
        # on each side (2*center == max shift, so the total is exactly PPp rows).
        zband = jnp.zeros((center, Cop), jnp.float32)
        hpad = jnp.concatenate([zband, h, zband], axis=0)          # (PPp, Cop)

        # ---- conv2 (+ folded BN2 scale), same im2col structure ----
        cols2 = jnp.concatenate(
            [hpad[s:s + Mspan, :] for s in shifts], axis=1).astype(jnp.bfloat16)
        acc2 = jnp.dot(cols2, w2_ref[...],
                       preferred_element_type=jnp.float32) + b2_ref[...]

        # ---- identity / downsample: reuse the conv1 center tap ----
        xc = xf[center:center + Mspan, :]
        if has_downsample:
            ident = jnp.dot(xc.astype(jnp.bfloat16), wds_ref[...],
                            preferred_element_type=jnp.float32) + bds_ref[...]
        else:
            ident = xc

        # ---- residual add + final ReLU; lane-dense (x, 128) f32 store ----
        out = jnp.maximum(acc2 + ident, 0.0)
        out_ref[0:Mspan, :] = out
        out_ref[Mspan:PPp, :] = jnp.zeros((PPp - Mspan, Cop), jnp.float32)

    return kernel


def residual_block_forward(x_nchw, params):
    """Forward pass of ResidualBlock. Input/output are NCHW (PyTorch convention)."""
    N, Cin, H, W = x_nchw.shape
    Cout = params["w1"].shape[0]
    has_downsample = "wds" in params
    if not has_downsample and Cin != Cout:
        raise ValueError("identity path requires Cin == Cout")
    eps = 1e-5

    Cip = _round_up(Cin, LANE)
    Cop = _round_up(Cout, LANE)
    Hp, Wp = H + 2, W + 2
    PP = Hp * Wp                       # rows of one zero-padded plane
    PPp = _round_up(PP, ROW_PAD)       # padded so per-image blocks stay tile-aligned
    shifts = tuple(dy * Wp + dx for dy in range(3) for dx in range(3))
    center = Wp + 1                    # shift of the (1,1) tap; 2*center == max shift
    Mspan = PPp - 2 * center           # row range that covers every valid output row

    # ---- activations: NCHW -> NHWC, zero-pad spatial + channels, flatten, bf16 ----
    x = jnp.transpose(x_nchw, (0, 2, 3, 1))
    x = jnp.pad(x, ((0, 0), (1, 1), (1, 1), (0, Cip - Cin)))
    x = x.reshape(N, PP, Cip)
    x = jnp.pad(x, ((0, 0), (0, PPp - PP), (0, 0)))
    x = x.reshape(N * PPp, Cip).astype(jnp.bfloat16)

    # ---- fold BN scale into conv weights (trace-time); keep only the bias in-kernel ----
    def fold_bn(bn):
        gamma, beta, mean, var = bn
        s = gamma / jnp.sqrt(var + eps)
        return s, beta - mean * s

    def pad_bias(b):
        return jnp.pad(b, (0, Cop - Cout)).reshape(1, Cop).astype(jnp.float32)

    s1, b1 = fold_bn(params["bn1"])
    s2, b2 = fold_bn(params["bn2"])

    # PyTorch OIHW -> (kh, kw, Cin, Cout), scale folded, zero-padded, tap-major K, bf16.
    w1 = jnp.transpose(params["w1"], (2, 3, 1, 0)) * s1
    w1 = jnp.pad(w1, ((0, 0), (0, 0), (0, Cip - Cin), (0, Cop - Cout)))
    w1 = w1.reshape(9 * Cip, Cop).astype(jnp.bfloat16)

    w2 = jnp.transpose(params["w2"], (2, 3, 1, 0)) * s2
    w2 = jnp.pad(w2, ((0, 0), (0, 0), (0, Cop - Cout), (0, Cop - Cout)))
    w2 = w2.reshape(9 * Cop, Cop).astype(jnp.bfloat16)

    # ---- compile-time mask: 1.0 on flat rows r = y*(W+2)+x with y < H, x < W ----
    yy = np.arange(Hp)[:, None]
    xx = np.arange(Wp)[None, :]
    valid = ((yy < H) & (xx < W)).reshape(PP)
    mask_np = np.zeros((PPp, 1), np.float32)
    mask_np[:PP, 0] = valid.astype(np.float32)
    mask = jnp.asarray(mask_np)

    inputs = [x, mask, w1, pad_bias(b1), w2, pad_bias(b2)]
    in_specs = [
        pl.BlockSpec((PPp, Cip), lambda b: (b, 0)),        # x: one image per step
        pl.BlockSpec((PPp, 1), lambda b: (0, 0)),          # mask: grid-invariant
        pl.BlockSpec((9 * Cip, Cop), lambda b: (0, 0)),    # w1
        pl.BlockSpec((1, Cop), lambda b: (0, 0)),          # b1
        pl.BlockSpec((9 * Cop, Cop), lambda b: (0, 0)),    # w2
        pl.BlockSpec((1, Cop), lambda b: (0, 0)),          # b2
    ]

    if has_downsample:
        sds, bds = fold_bn(params["bnds"])
        wds = params["wds"].reshape(Cout, Cin).T * sds
        wds = jnp.pad(wds, ((0, Cip - Cin), (0, Cop - Cout))).astype(jnp.bfloat16)
        inputs += [wds, pad_bias(bds)]
        in_specs += [pl.BlockSpec((Cip, Cop), lambda b: (0, 0)),
                     pl.BlockSpec((1, Cop), lambda b: (0, 0))]

    kernel = _make_resblock_kernel(PPp, Mspan, shifts, center, Cip, Cop, has_downsample)

    out_flat = pl.pallas_call(
        kernel,
        out_shape=jax.ShapeDtypeStruct((N * PPp, Cop), jnp.float32),
        grid_spec=pltpu.PrefetchScalarGridSpec(
            num_scalar_prefetch=0,
            grid=(N,),
            in_specs=in_specs,
            out_specs=pl.BlockSpec((PPp, Cop), lambda b: (b, 0)),
        ),
        compiler_params=pltpu.CompilerParams(
            dimension_semantics=("parallel",)),
    )(*inputs)

    # Flat padded plane -> NHWC -> NCHW (cheap XLA slice/transpose on a small tensor).
    out = out_flat.reshape(N, PPp, Cop)[:, :PP, :]
    out = out.reshape(N, Hp, Wp, Cop)[:, :H, :W, :Cout]
    return jnp.transpose(out, (0, 3, 1, 2))


def reference_forward(x, params):
    """Pure-JAX f32 reference matching the PyTorch module (BN in eval mode)."""
    eps = 1e-5

    def conv(x, w, pad):
        return lax.conv_general_dilated(
            x, w, (1, 1), [(pad, pad), (pad, pad)],
            dimension_numbers=("NCHW", "OIHW", "NCHW"))

    def bn(x, p):
        gamma, beta, mean, var = p
        s = gamma / jnp.sqrt(var + eps)
        return x * s[None, :, None, None] + (beta - mean * s)[None, :, None, None]

    identity = x
    if "wds" in params:
        identity = bn(conv(x, params["wds"], 0), params["bnds"])
    out = jnp.maximum(bn(conv(x, params["w1"], 1), params["bn1"]), 0.0)
    out = bn(conv(out, params["w2"], 1), params["bn2"])
    return jnp.maximum(out + identity, 0.0)


def make_params(key, in_channels, out_channels, stride=1):
    ks = jax.random.split(key, 16)

    def bn_params(k, c):
        k1, k2, k3, k4 = jax.random.split(k, 4)
        gamma = 1.0 + 0.1 * jax.random.normal(k1, (c,), jnp.float32)
        beta = 0.1 * jax.random.normal(k2, (c,), jnp.float32)
        mean = 0.1 * jax.random.normal(k3, (c,), jnp.float32)
        var = jax.random.uniform(k4, (c,), jnp.float32, 0.5, 1.5)
        return (gamma, beta, mean, var)

    params = {
        "w1": 0.2 * jax.random.normal(ks[0], (out_channels, in_channels, 3, 3), jnp.float32),
        "bn1": bn_params(ks[1], out_channels),
        "w2": 0.2 * jax.random.normal(ks[2], (out_channels, out_channels, 3, 3), jnp.float32),
        "bn2": bn_params(ks[3], out_channels),
    }
    if stride != 1 or in_channels != out_channels:
        params["wds"] = 0.2 * jax.random.normal(
            ks[4], (out_channels, in_channels, 1, 1), jnp.float32)
        params["bnds"] = bn_params(ks[5], out_channels)
    return params


if __name__ == "__main__":
    key = jax.random.PRNGKey(0)
    k_x, k_p = jax.random.split(key)

    N, Cin, Cout, H, W = 2, 4, 8, 16, 16     # Cin != Cout -> downsample path, stride=1
    x = jax.random.normal(k_x, (N, Cin, H, W), jnp.float32)
    params = make_params(k_p, Cin, Cout, stride=1)

    fwd = jax.jit(residual_block_forward)
    out = jax.block_until_ready(fwd(x, params))
    ref = jax.block_until_ready(reference_forward(x, params))

    assert out.shape == (N, Cout, H, W), out.shape
    err = jnp.abs(out - ref)
    # bf16 MXU operands vs. f32 reference: loose elementwise bound, tight mean bound.
    assert float(err.max()) < 1.5e-1, float(err.max())
    assert float(err.mean()) < 3e-2, float(err.mean())

    print("KERNEL_OK")
</pallas_src>

<mosaic_0001>
module attributes {stable_mosaic.version = 11 : i64} {
  func.func @kernel(%arg0: i32, %arg1: memref<336x128xbf16, #tpu.memory_space<vmem>>, %arg2: memref<336x1xf32, #tpu.memory_space<vmem>>, %arg3: memref<1152x128xbf16, #tpu.memory_space<vmem>>, %arg4: memref<1x128xf32, #tpu.memory_space<vmem>>, %arg5: memref<1152x128xbf16, #tpu.memory_space<vmem>>, %arg6: memref<1x128xf32, #tpu.memory_space<vmem>>, %arg7: memref<128x128xbf16, #tpu.memory_space<vmem>>, %arg8: memref<1x128xf32, #tpu.memory_space<vmem>>, %arg9: memref<336x128xf32, #tpu.memory_space<vmem>>) attributes {dimension_semantics = [#tpu.dimension_semantics<parallel>], iteration_bounds = array<i64: 2>, scalar_prefetch = 0 : i64, scratch_operands = 0 : i64, tpu.core_type = #tpu.core_type<tc>, window_params = [{transform_indices = @transform_0, window_bounds = array<i64: 336, 128>}, {pipeline_mode = #tpu.pipeline_mode<synchronous>, transform_indices = @transform_1, window_bounds = array<i64: 336, 1>}, {pipeline_mode = #tpu.pipeline_mode<synchronous>, transform_indices = @transform_2, window_bounds = array<i64: 1152, 128>}, {pipeline_mode = #tpu.pipeline_mode<synchronous>, transform_indices = @transform_3, window_bounds = array<i64: 1, 128>}, {pipeline_mode = #tpu.pipeline_mode<synchronous>, transform_indices = @transform_4, window_bounds = array<i64: 1152, 128>}, {pipeline_mode = #tpu.pipeline_mode<synchronous>, transform_indices = @transform_5, window_bounds = array<i64: 1, 128>}, {pipeline_mode = #tpu.pipeline_mode<synchronous>, transform_indices = @transform_6, window_bounds = array<i64: 128, 128>}, {pipeline_mode = #tpu.pipeline_mode<synchronous>, transform_indices = @transform_7, window_bounds = array<i64: 1, 128>}, {transform_indices = @transform_8, window_bounds = array<i64: 336, 128>}]} {
    %c0 = arith.constant 0 : index
    %c0_0 = arith.constant 0 : index
    %0 = vector.load %arg1[%c0, %c0_0] : memref<336x128xbf16, #tpu.memory_space<vmem>>, vector<336x128xbf16>
    %1 = arith.extf %0 : vector<336x128xbf16> to vector<336x128xf32>
    %c0_1 = arith.constant 0 : index
    %c0_2 = arith.constant 0 : index
    %2 = vector.load %arg2[%c0_1, %c0_2] : memref<336x1xf32, #tpu.memory_space<vmem>>, vector<298x1xf32>
    %3 = vector.extract_strided_slice %1 {offsets = [0, 0], sizes = [298, 128], strides = [1, 1]} : vector<336x128xf32> to vector<298x128xf32>
    %4 = vector.extract_strided_slice %1 {offsets = [1, 0], sizes = [298, 128], strides = [1, 1]} : vector<336x128xf32> to vector<298x128xf32>
    %5 = vector.extract_strided_slice %1 {offsets = [2, 0], sizes = [298, 128], strides = [1, 1]} : vector<336x128xf32> to vector<298x128xf32>
    %6 = vector.extract_strided_slice %1 {offsets = [18, 0], sizes = [298, 128], strides = [1, 1]} : vector<336x128xf32> to vector<298x128xf32>
    %7 = vector.extract_strided_slice %1 {offsets = [19, 0], sizes = [298, 128], strides = [1, 1]} : vector<336x128xf32> to vector<298x128xf32>
    %8 = vector.extract_strided_slice %1 {offsets = [20, 0], sizes = [298, 128], strides = [1, 1]} : vector<336x128xf32> to vector<298x128xf32>
    %9 = vector.extract_strided_slice %1 {offsets = [36, 0], sizes = [298, 128], strides = [1, 1]} : vector<336x128xf32> to vector<298x128xf32>
    %10 = vector.extract_strided_slice %1 {offsets = [37, 0], sizes = [298, 128], strides = [1, 1]} : vector<336x128xf32> to vector<298x128xf32>
    %11 = vector.extract_strided_slice %1 {offsets = [38, 0], sizes = [298, 128], strides = [1, 1]} : vector<336x128xf32> to vector<298x128xf32>
    %12 = tpu.concatenate %3, %4, %5, %6, %7, %8, %9, %10, %11 in 1 : vector<298x128xf32>, vector<298x128xf32>, vector<298x128xf32>, vector<298x128xf32>, vector<298x128xf32>, vector<298x128xf32>, vector<298x128xf32>, vector<298x128xf32>, vector<298x128xf32> -> vector<298x1152xf32>
    %13 = arith.truncf %12 : vector<298x1152xf32> to vector<298x1152xbf16>
    %c0_3 = arith.constant 0 : index
    %c0_4 = arith.constant 0 : index
    %14 = vector.load %arg3[%c0_3, %c0_4] : memref<1152x128xbf16, #tpu.memory_space<vmem>>, vector<1152x128xbf16>
    %cst = arith.constant dense<0.000000e+00> : vector<298x128xf32>
    %15 = tpu.matmul %13, %14, %cst {dimension_numbers = #tpu.dot_dimension_numbers<[1], [0], [0], [1], [0, 0, 1, 1], [], []>} : vector<298x1152xbf16>, vector<1152x128xbf16>, vector<298x128xf32> -> vector<298x128xf32>
    %c0_5 = arith.constant 0 : index
    %c0_6 = arith.constant 0 : index
    %16 = vector.load %arg4[%c0_5, %c0_6] : memref<1x128xf32, #tpu.memory_space<vmem>>, vector<1x128xf32>
    %17 = vector.broadcast %16 : vector<1x128xf32> to vector<298x128xf32>
    %18 = arith.addf %15, %17 : vector<298x128xf32>
    %cst_7 = arith.constant 0.000000e+00 : f32
    %19 = vector.broadcast %cst_7 : f32 to vector<298x128xf32>
    %20 = arith.maximumf %18, %19 : vector<298x128xf32>
    %21 = vector.broadcast %2 : vector<298x1xf32> to vector<298x128xf32>
    %22 = arith.mulf %20, %21 : vector<298x128xf32>
    %cst_8 = arith.constant 0.000000e+00 : f32
    %23 = vector.broadcast %cst_8 : f32 to vector<19x128xf32>
    %24 = tpu.concatenate %23, %22, %23 in 0 : vector<19x128xf32>, vector<298x128xf32>, vector<19x128xf32> -> vector<336x128xf32>
    %25 = vector.extract_strided_slice %24 {offsets = [0, 0], sizes = [298, 128], strides = [1, 1]} : vector<336x128xf32> to vector<298x128xf32>
    %26 = vector.extract_strided_slice %24 {offsets = [1, 0], sizes = [298, 128], strides = [1, 1]} : vector<336x128xf32> to vector<298x128xf32>
    %27 = vector.extract_strided_slice %24 {offsets = [2, 0], sizes = [298, 128], strides = [1, 1]} : vector<336x128xf32> to vector<298x128xf32>
    %28 = vector.extract_strided_slice %24 {offsets = [18, 0], sizes = [298, 128], strides = [1, 1]} : vector<336x128xf32> to vector<298x128xf32>
    %29 = vector.extract_strided_slice %24 {offsets = [19, 0], sizes = [298, 128], strides = [1, 1]} : vector<336x128xf32> to vector<298x128xf32>
    %30 = vector.extract_strided_slice %24 {offsets = [20, 0], sizes = [298, 128], strides = [1, 1]} : vector<336x128xf32> to vector<298x128xf32>
    %31 = vector.extract_strided_slice %24 {offsets = [36, 0], sizes = [298, 128], strides = [1, 1]} : vector<336x128xf32> to vector<298x128xf32>
    %32 = vector.extract_strided_slice %24 {offsets = [37, 0], sizes = [298, 128], strides = [1, 1]} : vector<336x128xf32> to vector<298x128xf32>
    %33 = vector.extract_strided_slice %24 {offsets = [38, 0], sizes = [298, 128], strides = [1, 1]} : vector<336x128xf32> to vector<298x128xf32>
    %34 = tpu.concatenate %25, %26, %27, %28, %29, %30, %31, %32, %33 in 1 : vector<298x128xf32>, vector<298x128xf32>, vector<298x128xf32>, vector<298x128xf32>, vector<298x128xf32>, vector<298x128xf32>, vector<298x128xf32>, vector<298x128xf32>, vector<298x128xf32> -> vector<298x1152xf32>
    %35 = arith.truncf %34 : vector<298x1152xf32> to vector<298x1152xbf16>
    %c0_9 = arith.constant 0 : index
    %c0_10 = arith.constant 0 : index
    %36 = vector.load %arg5[%c0_9, %c0_10] : memref<1152x128xbf16, #tpu.memory_space<vmem>>, vector<1152x128xbf16>
    %cst_11 = arith.constant dense<0.000000e+00> : vector<298x128xf32>
    %37 = tpu.matmul %35, %36, %cst_11 {dimension_numbers = #tpu.dot_dimension_numbers<[1], [0], [0], [1], [0, 0, 1, 1], [], []>} : vector<298x1152xbf16>, vector<1152x128xbf16>, vector<298x128xf32> -> vector<298x128xf32>
    %c0_12 = arith.constant 0 : index
    %c0_13 = arith.constant 0 : index
    %38 = vector.load %arg6[%c0_12, %c0_13] : memref<1x128xf32, #tpu.memory_space<vmem>>, vector<1x128xf32>
    %39 = vector.broadcast %38 : vector<1x128xf32> to vector<298x128xf32>
    %40 = arith.addf %37, %39 : vector<298x128xf32>
    %41 = vector.extract_strided_slice %1 {offsets = [19, 0], sizes = [298, 128], strides = [1, 1]} : vector<336x128xf32> to vector<298x128xf32>
    %42 = arith.truncf %41 : vector<298x128xf32> to vector<298x128xbf16>
    %c0_14 = arith.constant 0 : index
    %c0_15 = arith.constant 0 : index
    %43 = vector.load %arg7[%c0_14, %c0_15] : memref<128x128xbf16, #tpu.memory_space<vmem>>, vector<128x128xbf16>
    %cst_16 = arith.constant dense<0.000000e+00> : vector<298x128xf32>
    %44 = tpu.matmul %42, %43, %cst_16 {dimension_numbers = #tpu.dot_dimension_numbers<[1], [0], [0], [1], [0, 0, 1, 1], [], []>} : vector<298x128xbf16>, vector<128x128xbf16>, vector<298x128xf32> -> vector<298x128xf32>
    %c0_17 = arith.constant 0 : index
    %c0_18 = arith.constant 0 : index
    %45 = vector.load %arg8[%c0_17, %c0_18] : memref<1x128xf32, #tpu.memory_space<vmem>>, vector<1x128xf32>
    %46 = vector.broadcast %45 : vector<1x128xf32> to vector<298x128xf32>
    %47 = arith.addf %44, %46 : vector<298x128xf32>
    %48 = arith.addf %40, %47 : vector<298x128xf32>
    %cst_19 = arith.constant 0.000000e+00 : f32
    %49 = vector.broadcast %cst_19 : f32 to vector<298x128xf32>
    %50 = arith.maximumf %48, %49 : vector<298x128xf32>
    %c0_20 = arith.constant 0 : index
    %c0_21 = arith.constant 0 : index
    %51 = vector.load %arg9[%c0_20, %c0_21] : memref<336x128xf32, #tpu.memory_space<vmem>>, vector<298x128xf32>
    tpu.vector_store %arg9[%c0_20, %c0_21], %50 {strides = array<i32>} : memref<336x128xf32, #tpu.memory_space<vmem>>, vector<298x128xf32>,
    %cst_22 = arith.constant 0.000000e+00 : f32
    %52 = vector.broadcast %cst_22 : f32 to vector<38x128xf32>
    %c298 = arith.constant 298 : index
    %c0_23 = arith.constant 0 : index
    %53 = vector.load %arg9[%c298, %c0_23] : memref<336x128xf32, #tpu.memory_space<vmem>>, vector<38x128xf32>
    tpu.vector_store %arg9[%c298, %c0_23], %52 {strides = array<i32>} : memref<336x128xf32, #tpu.memory_space<vmem>>, vector<38x128xf32>,
    return
  }
  func.func @transform_0(%arg0: i32) -> (i32, i32) {
    %c0_i32 = arith.constant 0 : i32
    %c0_i32_0 = arith.constant 0 : i32
    return %arg0, %c0_i32 : i32, i32
  }
  func.func @transform_1(%arg0: i32) -> (i32, i32) {
    %c0_i32 = arith.constant 0 : i32
    %c0_i32_0 = arith.constant 0 : i32
    %c0_i32_1 = arith.constant 0 : i32
    return %c0_i32, %c0_i32_0 : i32, i32
  }
  func.func @transform_2(%arg0: i32) -> (i32, i32) {
    %c0_i32 = arith.constant 0 : i32
    %c0_i32_0 = arith.constant 0 : i32
    %c0_i32_1 = arith.constant 0 : i32
    return %c0_i32, %c0_i32_0 : i32, i32
  }
  func.func @transform_3(%arg0: i32) -> (i32, i32) {
    %c0_i32 = arith.constant 0 : i32
    %c0_i32_0 = arith.constant 0 : i32
    %c0_i32_1 = arith.constant 0 : i32
    return %c0_i32, %c0_i32_0 : i32, i32
  }
  func.func @transform_4(%arg0: i32) -> (i32, i32) {
    %c0_i32 = arith.constant 0 : i32
    %c0_i32_0 = arith.constant 0 : i32
    %c0_i32_1 = arith.constant 0 : i32
    return %c0_i32, %c0_i32_0 : i32, i32
  }
  func.func @transform_5(%arg0: i32) -> (i32, i32) {
    %c0_i32 = arith.constant 0 : i32
    %c0_i32_0 = arith.constant 0 : i32
    %c0_i32_1 = arith.constant 0 : i32
    return %c0_i32, %c0_i32_0 : i32, i32
  }
  func.func @transform_6(%arg0: i32) -> (i32, i32) {
    %c0_i32 = arith.constant 0 : i32
    %c0_i32_0 = arith.constant 0 : i32
    %c0_i32_1 = arith.constant 0 : i32
    return %c0_i32, %c0_i32_0 : i32, i32
  }
  func.func @transform_7(%arg0: i32) -> (i32, i32) {
    %c0_i32 = arith.constant 0 : i32
    %c0_i32_0 = arith.constant 0 : i32
    %c0_i32_1 = arith.constant 0 : i32
    return %c0_i32, %c0_i32_0 : i32, i32
  }
  func.func @transform_8(%arg0: i32) -> (i32, i32) {
    %c0_i32 = arith.constant 0 : i32
    %c0_i32_0 = arith.constant 0 : i32
    return %arg0, %c0_i32 : i32, i32
  }
}

</mosaic_0001>

<llo_original>
// kernel: residual_block_forward.1
$region0: #{residual_block_forward.1}
  #allocation0 [shape = 'u32[]', space=smem, size = 0x4, offset = 0x4, fixed_abs, tag = 'smem constant byte address 0x4 - core index']
  #allocation1 [shape = 'u32[144,128]{1,0:T(1,128)}', space=vmem, size = 0x12000, scoped, tag = 'internal scratch']
  %s0 = inlined_call_operand.vmem [shape: bf16[672,128], index: 0, kind: input, shape index: {}]
  %s1 = inlined_call_operand.vmem [shape: f32[336,1], index: 1, kind: input, shape index: {}]
  %s2 = inlined_call_operand.vmem [shape: bf16[1152,128], index: 2, kind: input, shape index: {}]
  %s3 = inlined_call_operand.vmem [shape: f32[1,128], index: 3, kind: input, shape index: {}]
  %s4 = inlined_call_operand.vmem [shape: bf16[1152,128], index: 4, kind: input, shape index: {}]
  %s5 = inlined_call_operand.vmem [shape: f32[1,128], index: 5, kind: input, shape index: {}]
  %s6 = inlined_call_operand.vmem [shape: bf16[128,128], index: 6, kind: input, shape index: {}]
  %s7 = inlined_call_operand.vmem [shape: f32[1,128], index: 7, kind: input, shape index: {}]
  %s8 = inlined_call_operand.vmem [shape: f32[672,128], index: 8, kind: output, shape index: {}]
  %s9 = sld [smem:[#allocation0]]
  $region65: #{residual_block_forward.1} parent=0
    _
  %s11 = ssub.s32 1, %s9
  %s12 = scalar_select 0, %s11, %s9
  loop: start=0, step=1, limit=4
  $region2: #{residual_block_forward.1} parent=0 // loop_pre_header
    _
  $region3: #{residual_block_forward.1} parent=0 // loop_header
    %s14 = sphi 0, %s18
    %p15 = scmp.ge.s32.totalorder %s14, 4
    %s24 = sphi 0, %s26
    %s27 = sphi 0, %s24
    %s28 = sphi 0, %s27
    %s44 = sphi 0, %s28
    %s48 = sphi 0, %s48
    %s50 = sphi 0, %s48
    %s51 = sphi 0, %s50
    %s65 = sphi 0, %s51
    %s69 = sphi 0, %s69
    %s71 = sphi 0, %s69
    %s72 = sphi 0, %s71
    %s86 = sphi 0, %s72
    %s90 = sphi 0, %s90
    %s92 = sphi 0, %s90
    %s93 = sphi 0, %s92
    %s107 = sphi 0, %s93
    %s111 = sphi 0, %s111
    %s113 = sphi 0, %s111
    %s114 = sphi 0, %s113
    %s128 = sphi 0, %s114
    %s132 = sphi 0, %s132
    %s134 = sphi 0, %s132
    %s135 = sphi 0, %s134
    %s149 = sphi 0, %s135
    %s153 = sphi 0, %s153
    %s155 = sphi 0, %s153
    %s156 = sphi 0, %s155
    %s170 = sphi 0, %s156
    %s174 = sphi 0, %s174
    %s176 = sphi 0, %s174
    %s177 = sphi 0, %s176
    %s191 = sphi 0, %s177
    %s197 = sphi 0, %s199
    %s200 = sphi 0, %s197
    %s201 = sphi 0, %s200
    %s217 = sphi 0, %s201
  $region4: #{residual_block_forward.1} parent=0 // loop_header_branch
    %17 = sbr.rel (%p15) target = $region8
  $region5: #{residual_block_forward.1} parent=0 // loop_body
    %s19 = ssub.s32 %s14, 1
    %s20 = ssub.s32 %s14, 2
    %s21 = sadd.s32 %s14, 1
    %s22 = ssub.s32 %s14, %s21
    %p23 = scmp.eq.s32.totalorder %s22, 0
    %s25 = sadd.s32 %s24, 1
    %s26 = scalar_select %p23, %s24, %s25
    %p29 = pneg %p23
    %p30 = scmp.eq.s32.totalorder %s14, 1
    %p31 = por %p29, %p30
    %p32 = scmp.ne.s32.totalorder %s24, %s27
    %p33 = scmp.eq.s32.totalorder %s14, 0
    %p34 = por %p32, %p33
    %p35 = scmp.ne.s32.totalorder %s24, %s27
    %p36 = scmp.eq.s32.totalorder %s19, 1
    %p37 = por %p35, %p36
    %p38 = scmp.ne.s32.totalorder %s27, %s28
    %p39 = scmp.eq.s32.totalorder %s19, 0
    %p40 = por %p38, %p39
    %p41 = scmp.ne.s32.totalorder %s27, %s28
    %p42 = scmp.eq.s32.totalorder %s20, 1
    %p43 = por %p41, %p42
    %p45 = scmp.ne.s32.totalorder %s28, %s44
    %p46 = scmp.eq.s32.totalorder %s20, 0
    %p47 = por %p45, %p46
    %s49 = sadd.s32 %s48, 1
    %p52 = scmp.eq.s32.totalorder %s14, 1
    %p53 = scmp.ne.s32.totalorder %s48, %s50
    %p54 = scmp.eq.s32.totalorder %s14, 0
    %p55 = por %p53, %p54
    %p56 = scmp.ne.s32.totalorder %s48, %s50
    %p57 = scmp.eq.s32.totalorder %s19, 1
    %p58 = por %p56, %p57
    %p59 = scmp.ne.s32.totalorder %s50, %s51
    %p60 = scmp.eq.s32.totalorder %s19, 0
    %p61 = por %p59, %p60
    %p62 = scmp.ne.s32.totalorder %s50, %s51
    %p63 = scmp.eq.s32.totalorder %s20, 1
    %p64 = por %p62, %p63
    %p66 = scmp.ne.s32.totalorder %s51, %s65
    %p67 = scmp.eq.s32.totalorder %s20, 0
    %p68 = por %p66, %p67
    %s70 = sadd.s32 %s69, 1
    %p73 = scmp.eq.s32.totalorder %s14, 1
    %p74 = scmp.ne.s32.totalorder %s69, %s71
    %p75 = scmp.eq.s32.totalorder %s14, 0
    %p76 = por %p74, %p75
    %p77 = scmp.ne.s32.totalorder %s69, %s71
    %p78 = scmp.eq.s32.totalorder %s19, 1
    %p79 = por %p77, %p78
    %p80 = scmp.ne.s32.totalorder %s71, %s72
    %p81 = scmp.eq.s32.totalorder %s19, 0
    %p82 = por %p80, %p81
    %p83 = scmp.ne.s32.totalorder %s71, %s72
    %p84 = scmp.eq.s32.totalorder %s20, 1
    %p85 = por %p83, %p84
    %p87 = scmp.ne.s32.totalorder %s72, %s86
    %p88 = scmp.eq.s32.totalorder %s20, 0
    %p89 = por %p87, %p88
    %s91 = sadd.s32 %s90, 1
    %p94 = scmp.eq.s32.totalorder %s14, 1
    %p95 = scmp.ne.s32.totalorder %s90, %s92
    %p96 = scmp.eq.s32.totalorder %s14, 0
    %p97 = por %p95, %p96
    %p98 = scmp.ne.s32.totalorder %s90, %s92
    %p99 = scmp.eq.s32.totalorder %s19, 1
    %p100 = por %p98, %p99
    %p101 = scmp.ne.s32.totalorder %s92, %s93
    %p102 = scmp.eq.s32.totalorder %s19, 0
    %p103 = por %p101, %p102
    %p104 = scmp.ne.s32.totalorder %s92, %s93
    %p105 = scmp.eq.s32.totalorder %s20, 1
    %p106 = por %p104, %p105
    %p108 = scmp.ne.s32.totalorder %s93, %s107
    %p109 = scmp.eq.s32.totalorder %s20, 0
    %p110 = por %p108, %p109
    %s112 = sadd.s32 %s111, 1
    %p115 = scmp.eq.s32.totalorder %s14, 1
    %p116 = scmp.ne.s32.totalorder %s111, %s113
    %p117 = scmp.eq.s32.totalorder %s14, 0
    %p118 = por %p116, %p117
    %p119 = scmp.ne.s32.totalorder %s111, %s113
    %p120 = scmp.eq.s32.totalorder %s19, 1
    %p121 = por %p119, %p120
    %p122 = scmp.ne.s32.totalorder %s113, %s114
    %p123 = scmp.eq.s32.totalorder %s19, 0
    %p124 = por %p122, %p123
    %p125 = scmp.ne.s32.totalorder %s113, %s114
    %p126 = scmp.eq.s32.totalorder %s20, 1
    %p127 = por %p125, %p126
    %p129 = scmp.ne.s32.totalorder %s114, %s128
    %p130 = scmp.eq.s32.totalorder %s20, 0
    %p131 = por %p129, %p130
    %s133 = sadd.s32 %s132, 1
    %p136 = scmp.eq.s32.totalorder %s14, 1
    %p137 = scmp.ne.s32.totalorder %s132, %s134
    %p138 = scmp.eq.s32.totalorder %s14, 0
    %p139 = por %p137, %p138
    %p140 = scmp.ne.s32.totalorder %s132, %s134
    %p141 = scmp.eq.s32.totalorder %s19, 1
    %p142 = por %p140, %p141
    %p143 = scmp.ne.s32.totalorder %s134, %s135
    %p144 = scmp.eq.s32.totalorder %s19, 0
    %p145 = por %p143, %p144
    %p146 = scmp.ne.s32.totalorder %s134, %s135
    %p147 = scmp.eq.s32.totalorder %s20, 1
    %p148 = por %p146, %p147
    %p150 = scmp.ne.s32.totalorder %s135, %s149
    %p151 = scmp.eq.s32.totalorder %s20, 0
    %p152 = por %p150, %p151
    %s154 = sadd.s32 %s153, 1
    %p157 = scmp.eq.s32.totalorder %s14, 1
    %p158 = scmp.ne.s32.totalorder %s153, %s155
    %p159 = scmp.eq.s32.totalorder %s14, 0
    %p160 = por %p158, %p159
    %p161 = scmp.ne.s32.totalorder %s153, %s155
    %p162 = scmp.eq.s32.totalorder %s19, 1
    %p163 = por %p161, %p162
    %p164 = scmp.ne.s32.totalorder %s155, %s156
    %p165 = scmp.eq.s32.totalorder %s19, 0
    %p166 = por %p164, %p165
    %p167 = scmp.ne.s32.totalorder %s155, %s156
    %p168 = scmp.eq.s32.totalorder %s20, 1
    %p169 = por %p167, %p168
    %p171 = scmp.ne.s32.totalorder %s156, %s170
    %p172 = scmp.eq.s32.totalorder %s20, 0
    %p173 = por %p171, %p172
    %s175 = sadd.s32 %s174, 1
    %p178 = scmp.eq.s32.totalorder %s14, 1
    %p179 = scmp.ne.s32.totalorder %s174, %s176
    %p180 = scmp.eq.s32.totalorder %s14, 0
    %p181 = por %p179, %p180
    %p182 = scmp.ne.s32.totalorder %s174, %s176
    %p183 = scmp.eq.s32.totalorder %s19, 1
    %p184 = por %p182, %p183
    %p185 = scmp.ne.s32.totalorder %s176, %s177
    %p186 = scmp.eq.s32.totalorder %s19, 0
    %p187 = por %p185, %p186
    %p188 = scmp.ne.s32.totalorder %s176, %s177
    %p189 = scmp.eq.s32.totalorder %s20, 1
    %p190 = por %p188, %p189
    %p192 = scmp.ne.s32.totalorder %s177, %s191
    %p193 = scmp.eq.s32.totalorder %s20, 0
    %p194 = por %p192, %p193
    %s195 = ssub.s32 %s14, %s21
    %p196 = scmp.eq.s32.totalorder %s195, 0
    %s198 = sadd.s32 %s197, 1
    %s199 = scalar_select %p196, %s197, %s198
    %p202 = pneg %p196
    %p203 = scmp.eq.s32.totalorder %s14, 1
    %p204 = por %p202, %p203
    %p205 = scmp.ne.s32.totalorder %s197, %s200
    %p206 = scmp.eq.s32.totalorder %s14, 0
    %p207 = por %p205, %p206
    %p208 = scmp.ne.s32.totalorder %s197, %s200
    %p209 = scmp.eq.s32.totalorder %s19, 1
    %p210 = por %p208, %p209
    %p211 = scmp.ne.s32.totalorder %s200, %s201
    %p212 = scmp.eq.s32.totalorder %s19, 0
    %p213 = por %p211, %p212
    %p214 = scmp.ne.s32.totalorder %s200, %s201
    %p215 = scmp.eq.s32.totalorder %s20, 1
    %p216 = por %p214, %p215
    %p218 = scmp.ne.s32.totalorder %s201, %s217
    %p219 = scmp.eq.s32.totalorder %s20, 0
    %p220 = por %p218, %p219
    %p221 = scmp.le.s32.totalorder 1, %s14
    %p222 = scmp.lt.s32.totalorder %s14, 3
    %p223 = pnand %p221, %p222
    %p224 = pneg %p223
    // Predicated region
    $region9: #{residual_block_forward.1} parent=5 // pred_check
      _
    $region10: #{residual_block_forward.1} parent=5 // pred_check_branch
      %226 = sbr.rel (%p223) target = $region12
    $region11: #{residual_block_forward.1} parent=5 // pred_region
      %s227 = ssub.s32 %s14, 1
      // Predicated region
      $region13: #{residual_block_forward.1} parent=11 // pred_check
        %p228 = pneg %p61
      $region14: #{residual_block_forward.1} parent=11 // pred_check_branch
        %230 = sbr.rel (%p228) target = $region16
      $region15: #{residual_block_forward.1} parent=11 // pred_region
        _
      $region16: #{residual_block_forward.1} parent=11 // pred_fallthru
        _
      // Predicated region
      $region17: #{residual_block_forward.1} parent=11 // pred_check
        %p231 = pneg %p82
      $region18: #{residual_block_forward.1} parent=11 // pred_check_branch
        %233 = sbr.rel (%p231) target = $region20
      $region19: #{residual_block_forward.1} parent=11 // pred_region
        _
      $region20: #{residual_block_forward.1} parent=11 // pred_fallthru
        _
      // Predicated region
      $region21: #{residual_block_forward.1} parent=11 // pred_check
        %p234 = pneg %p103
      $region22: #{residual_block_forward.1} parent=11 // pred_check_branch
        %236 = sbr.rel (%p234) target = $region24
      $region23: #{residual_block_forward.1} parent=11 // pred_region
        _
      $region24: #{residual_block_forward.1} parent=11 // pred_fallthru
        _
      // Predicated region
      $region25: #{residual_block_forward.1} parent=11 // pred_check
        %p237 = pneg %p124
      $region26: #{residual_block_forward.1} parent=11 // pred_check_branch
        %239 = sbr.rel (%p237) target = $region28
      $region27: #{residual_block_forward.1} parent=11 // pred_region
        _
      $region28: #{residual_block_forward.1} parent=11 // pred_fallthru
        _
      // Predicated region
      $region29: #{residual_block_forward.1} parent=11 // pred_check
        %p240 = pneg %p145
      $region30: #{residual_block_forward.1} parent=11 // pred_check_branch
        %242 = sbr.rel (%p240) target = $region32
      $region31: #{residual_block_forward.1} parent=11 // pred_region
        _
      $region32: #{residual_block_forward.1} parent=11 // pred_fallthru
        _
      // Predicated region
      $region33: #{residual_block_forward.1} parent=11 // pred_check
        %p243 = pneg %p166
      $region34: #{residual_block_forward.1} parent=11 // pred_check_branch
        %245 = sbr.rel (%p243) target = $region36
      $region35: #{residual_block_forward.1} parent=11 // pred_region
        _
      $region36: #{residual_block_forward.1} parent=11 // pred_fallthru
        _
      // Predicated region
      $region37: #{residual_block_forward.1} parent=11 // pred_check
        %p246 = pneg %p187
      $region38: #{residual_block_forward.1} parent=11 // pred_check_branch
        %248 = sbr.rel (%p246) target = $region40
      $region39: #{residual_block_forward.1} parent=11 // pred_region
        _
      $region40: #{residual_block_forward.1} parent=11 // pred_fallthru
        _
    $region12: #{residual_block_forward.1} parent=5 // pred_fallthru
      _
    %p249 = scmp.lt.s32.totalorder %s14, 2
    // Predicated region
    $region41: #{residual_block_forward.1} parent=5 // pred_check
      %p250 = pneg %p249
    $region42: #{residual_block_forward.1} parent=5 // pred_check_branch
      %252 = sbr.rel (%p250) target = $region44
    $region43: #{residual_block_forward.1} parent=5 // pred_region
      // Predicated region
      $region45: #{residual_block_forward.1} parent=43 // pred_check
        %p253 = pneg %p34
      $region46: #{residual_block_forward.1} parent=43 // pred_check_branch
        %255 = sbr.rel (%p253) target = $region48
      $region47: #{residual_block_forward.1} parent=43 // pred_region
        %s256 = smul.u32 42, %s14
        %p257 = scmp.lt.s32.totalorder %s256, 83
        %s258 = scalar_select %p257, %s256, 83
        %s259 = smul.addr %s258, 4
        %s260 = scalar_lea.vmem %s0, %s259
        %s261 = smul.u32 42, %s14
      $region48: #{residual_block_forward.1} parent=43 // pred_fallthru
        _
    $region44: #{residual_block_forward.1} parent=5 // pred_fallthru
      _
    %p262 = scmp.le.s32.totalorder 1, %s14
    %p263 = scmp.lt.s32.totalorder %s14, 3
    %p264 = pnand %p262, %p263
    %p265 = pneg %p264
    // Predicated region
    $region49: #{residual_block_forward.1} parent=5 // pred_check
      _
    $region50: #{residual_block_forward.1} parent=5 // pred_check_branch
      %267 = sbr.rel (%p264) target = $region52
    $region51: #{residual_block_forward.1} parent=5 // pred_region
      %s268 = ssub.s32 %s14, 1
      %s269 = smul.u32 42, %s19
      %p270 = scmp.lt.s32.totalorder %s269, 83
      %s271 = scalar_select %p270, %s269, 83
      %s272 = smul.addr %s271, 4
      %s273 = scalar_lea.vmem %s0, %s272
      %p274 = pneg %p40
      %p275 = pneg %p37
      %p276 = pneg %p61
      %p277 = pneg %p58
      %p278 = pneg %p82
      %p279 = pneg %p79
      %p280 = pneg %p103
      %p281 = pneg %p100
      %p282 = pneg %p124
      %p283 = pneg %p121
      %p284 = pneg %p145
      %p285 = pneg %p142
      %p286 = pneg %p166
      %p287 = pneg %p163
      %p288 = pneg %p187
      %p289 = pneg %p184
      %p290 = pneg %p213
      %p291 = pneg %p210
      %s292 = smul.u32 42, %s19
      %p293 = scmp.lt.s32.totalorder %s292, 83
      %s294 = scalar_select %p293, %s292, 83
      %s295 = smul.addr %s294, 8
      %s296 = scalar_lea.vmem %s8, %s295
      %s297 = smul.u32 42, %s19
      %p298 = scmp.lt.s32.totalorder %s297, 83
      %s299 = scalar_select %p298, %s297, 83
      %s300 = smul.addr %s299, 4
      %s301 = scalar_lea.vmem %s0, %s300
      %s302 = smul.u32 42, %s19
      %s303 = smul.u32 42, %s19
      %p304 = scmp.lt.s32.totalorder %s303, 83
      %s305 = scalar_select %p304, %s303, 83
      %s306 = smul.addr %s305, 8
      %s307 = scalar_lea.vmem %s8, %s306
      %s308 = smul.u32 42, %s19
      %v310 = vld [vmem:[%s301] sm:$0xf]
      %v311 = vld [vmem:[%s301 + $0x4] sm:$0xf]
      %v312 = vld [vmem:[%s301 + $0x8] sm:$0xf]
      %v313 = vld [vmem:[%s301 + $0xc] sm:$0xf]
      %v314 = vld [vmem:[%s301 + $0x10] sm:$0xf]
      %v315 = vld [vmem:[%s301 + $0x14] sm:$0xf]
      %v316 = vld [vmem:[%s301 + $0x18] sm:$0xf]
      %v317 = vld [vmem:[%s301 + $0x1c] sm:$0xf]
      %v318 = vld [vmem:[%s301 + $0x20] sm:$0xf]
      %v319 = vld [vmem:[%s301 + $0x24] sm:$0xf]
      %v320 = vld [vmem:[%s301 + $0x28] sm:$0xf]
      %v321 = vld [vmem:[%s301 + $0x2c] sm:$0xf]
      %v322 = vld [vmem:[%s301 + $0x30] sm:$0xf]
      %v323 = vld [vmem:[%s301 + $0x34] sm:$0xf]
      %v324 = vld [vmem:[%s301 + $0x38] sm:$0xf]
      %v325 = vld [vmem:[%s301 + $0x3c] sm:$0xf]
      %v326 = vld [vmem:[%s301 + $0x40] sm:$0xf]
      %v327 = vld [vmem:[%s301 + $0x44] sm:$0xf]
      %v328 = vld [vmem:[%s301 + $0x48] sm:$0xf]
      %v329 = vld [vmem:[%s301 + $0x4c] sm:$0xf]
      %v330 = vld [vmem:[%s301 + $0x50] sm:$0xf]
      %v331 = vld [vmem:[%s301 + $0x54] sm:$0xf]
      %v332 = vld [vmem:[%s301 + $0x58] sm:$0xf]
      %v333 = vld [vmem:[%s301 + $0x5c] sm:$0xf]
      %v334 = vld [vmem:[%s301 + $0x60] sm:$0xf]
      %v335 = vld [vmem:[%s301 + $0x64] sm:$0xf]
      %v336 = vld [vmem:[%s301 + $0x68] sm:$0xf]
      %v337 = vld [vmem:[%s301 + $0x6c] sm:$0xf]
      %v338 = vld [vmem:[%s301 + $0x70] sm:$0xf]
      %v339 = vld [vmem:[%s301 + $0x74] sm:$0xf]
      %v340 = vld [vmem:[%s301 + $0x78] sm:$0xf]
      %v341 = vld [vmem:[%s301 + $0x7c] sm:$0xf]
      %v342 = vld [vmem:[%s301 + $0x80] sm:$0xf]
      %v343 = vld [vmem:[%s301 + $0x84] sm:$0xf]
      %v344 = vld [vmem:[%s301 + $0x88] sm:$0xf]
      %v345 = vld [vmem:[%s301 + $0x8c] sm:$0xf]
      %v346 = vld [vmem:[%s301 + $0x90] sm:$0xf]
      %v347 = vld [vmem:[%s301 + $0x94] sm:$0xf]
      %v348 = vld [vmem:[%s301 + $0x98] sm:$0xf]
      %v349 = vld [vmem:[%s301 + $0x9c] sm:$0xf]
      %v350 = vld [vmem:[%s301 + $0xa0] sm:$0xf]
      %v351 = vld [vmem:[%s301 + $0xa4] sm:$0xf]
      %v352 = vunpack.c.l.bf16 %v310
      %v353 = vunpack.c.l.bf16 %v311
      %v354 = vunpack.c.l.bf16 %v312
      %v355 = vunpack.c.l.bf16 %v313
      %v356 = vunpack.c.l.bf16 %v314
      %v357 = vunpack.c.l.bf16 %v315
      %v358 = vunpack.c.l.bf16 %v316
      %v359 = vunpack.c.l.bf16 %v317
      %v360 = vunpack.c.l.bf16 %v318
      %v361 = vunpack.c.l.bf16 %v319
      %v362 = vunpack.c.l.bf16 %v320
      %v363 = vunpack.c.l.bf16 %v321
      %v364 = vunpack.c.l.bf16 %v322
      %v365 = vunpack.c.l.bf16 %v323
      %v366 = vunpack.c.l.bf16 %v324
      %v367 = vunpack.c.l.bf16 %v325
      %v368 = vunpack.c.l.bf16 %v326
      %v369 = vunpack.c.l.bf16 %v327
      %v370 = vunpack.c.l.bf16 %v328
      %v371 = vunpack.c.l.bf16 %v329
      %v372 = vunpack.c.l.bf16 %v330
      %v373 = vunpack.c.l.bf16 %v331
      %v374 = vunpack.c.l.bf16 %v332
      %v375 = vunpack.c.l.bf16 %v333
      %v376 = vunpack.c.l.bf16 %v334
      %v377 = vunpack.c.l.bf16 %v335
      %v378 = vunpack.c.l.bf16 %v336
      %v379 = vunpack.c.l.bf16 %v337
      %v380 = vunpack.c.l.bf16 %v338
      %v381 = vunpack.c.l.bf16 %v339
      %v382 = vunpack.c.l.bf16 %v340
      %v383 = vunpack.c.l.bf16 %v341
      %v384 = vunpack.c.l.bf16 %v342
      %v385 = vunpack.c.l.bf16 %v343
      %v386 = vunpack.c.l.bf16 %v344
      %v387 = vunpack.c.l.bf16 %v345
      %v388 = vunpack.c.l.bf16 %v346
      %v389 = vunpack.c.l.bf16 %v347
      %v390 = vunpack.c.l.bf16 %v348
      %v391 = vunpack.c.l.bf16 %v349
      %v392 = vunpack.c.l.bf16 %v350
      %v393 = vunpack.c.l.bf16 %v351
      %v394 = vld [vmem:[%s1] sm:$0xff]
      %v395 = vld [vmem:[%s1 + $0x8] sm:$0xff]
      %v396 = vld [vmem:[%s1 + $0x10] sm:$0xff]
      %v397 = vld [vmem:[%s1 + $0x18] sm:$0xff]
      %v398 = vld [vmem:[%s1 + $0x20] sm:$0xff]
      %v399 = vld [vmem:[%s1 + $0x28] sm:$0xff]
      %v400 = vld [vmem:[%s1 + $0x30] sm:$0xff]
      %v401 = vld [vmem:[%s1 + $0x38] sm:$0xff]
      %v402 = vld [vmem:[%s1 + $0x40] sm:$0xff]
      %v403 = vld [vmem:[%s1 + $0x48] sm:$0xff]
      %v404 = vld [vmem:[%s1 + $0x50] sm:$0xff]
      %v405 = vld [vmem:[%s1 + $0x58] sm:$0xff]
      %v406 = vld [vmem:[%s1 + $0x60] sm:$0xff]
      %v407 = vld [vmem:[%s1 + $0x68] sm:$0xff]
      %v408 = vld [vmem:[%s1 + $0x70] sm:$0xff]
      %v409 = vld [vmem:[%s1 + $0x78] sm:$0xff]
      %v410 = vld [vmem:[%s1 + $0x80] sm:$0xff]
      %v411 = vld [vmem:[%s1 + $0x88] sm:$0xff]
      %v412 = vld [vmem:[%s1 + $0x90] sm:$0xff]
      %v413 = vld [vmem:[%s1 + $0x98] sm:$0xff]
      %v414 = vld [vmem:[%s1 + $0xa0] sm:$0xff]
      %v415 = vld [vmem:[%s1 + $0xa8] sm:$0xff]
      %v416 = vld [vmem:[%s1 + $0xb0] sm:$0xff]
      %v417 = vld [vmem:[%s1 + $0xb8] sm:$0xff]
      %v418 = vld [vmem:[%s1 + $0xc0] sm:$0xff]
      %v419 = vld [vmem:[%s1 + $0xc8] sm:$0xff]
      %v420 = vld [vmem:[%s1 + $0xd0] sm:$0xff]
      %v421 = vld [vmem:[%s1 + $0xd8] sm:$0xff]
      %v422 = vld [vmem:[%s1 + $0xe0] sm:$0xff]
      %v423 = vld [vmem:[%s1 + $0xe8] sm:$0xff]
      %v424 = vld [vmem:[%s1 + $0xf0] sm:$0xff]
      %v425 = vld [vmem:[%s1 + $0xf8] sm:$0xff]
      %v426 = vld [vmem:[%s1 + $0x100] sm:$0xff]
      %v427 = vld [vmem:[%s1 + $0x108] sm:$0xff]
      %v428 = vld [vmem:[%s1 + $0x110] sm:$0xff]
      %v429 = vld [vmem:[%s1 + $0x118] sm:$0xff]
      %v430 = vld [vmem:[%s1 + $0x120] sm:$0xff]
      %v431 = vld [vmem:[%s1 + $0x128] sm:$0x3]
      %vm470 = vcmask 1046528
      %v471 = vrot.slane %v352, 1
      %v472 = vrot.slane %v353, 1
      %v473 = vsel %vm470, %v471, %v472
      %v474 = vrot.slane %v354, 1
      %v475 = vsel %vm470, %v472, %v474
      %v476 = vrot.slane %v355, 1
      %v477 = vsel %vm470, %v474, %v476
      %v478 = vrot.slane %v356, 1
      %v479 = vsel %vm470, %v476, %v478
      %v480 = vrot.slane %v357, 1
      %v481 = vsel %vm470, %v478, %v480
      %v482 = vrot.slane %v358, 1
      %v483 = vsel %vm470, %v480, %v482
      %v484 = vrot.slane %v359, 1
      %v485 = vsel %vm470, %v482, %v484
      %v486 = vrot.slane %v360, 1
      %v487 = vsel %vm470, %v484, %v486
      %v488 = vrot.slane %v361, 1
      %v489 = vsel %vm470, %v486, %v488
      %v490 = vrot.slane %v362, 1
      %v491 = vsel %vm470, %v488, %v490
      %v492 = vrot.slane %v363, 1
      %v493 = vsel %vm470, %v490, %v492
      %v494 = vrot.slane %v364, 1
      %v495 = vsel %vm470, %v492, %v494
      %v496 = vrot.slane %v365, 1
      %v497 = vsel %vm470, %v494, %v496
      %v498 = vrot.slane %v366, 1
      %v499 = vsel %vm470, %v496, %v498
      %v500 = vrot.slane %v367, 1
      %v501 = vsel %vm470, %v498, %v500
      %v502 = vrot.slane %v368, 1
      %v503 = vsel %vm470, %v500, %v502
      %v504 = vrot.slane %v369, 1
      %v505 = vsel %vm470, %v502, %v504
      %v506 = vrot.slane %v370, 1
      %v507 = vsel %vm470, %v504, %v506
      %v508 = vrot.slane %v371, 1
      %v509 = vsel %vm470, %v506, %v508
      %v510 = vrot.slane %v372, 1
      %v511 = vsel %vm470, %v508, %v510
      %v512 = vrot.slane %v373, 1
      %v513 = vsel %vm470, %v510, %v512
      %v514 = vrot.slane %v374, 1
      %v515 = vsel %vm470, %v512, %v514
      %v516 = vrot.slane %v375, 1
      %v517 = vsel %vm470, %v514, %v516
      %v518 = vrot.slane %v376, 1
      %v519 = vsel %vm470, %v516, %v518
      %v520 = vrot.slane %v377, 1
      %v521 = vsel %vm470, %v518, %v520
      %v522 = vrot.slane %v378, 1
      %v523 = vsel %vm470, %v520, %v522
      %v524 = vrot.slane %v379, 1
      %v525 = vsel %vm470, %v522, %v524
      %v526 = vrot.slane %v380, 1
      %v527 = vsel %vm470, %v524, %v526
      %v528 = vrot.slane %v381, 1
      %v529 = vsel %vm470, %v526, %v528
      %v530 = vrot.slane %v382, 1
      %v531 = vsel %vm470, %v528, %v530
      %v532 = vrot.slane %v383, 1
      %v533 = vsel %vm470, %v530, %v532
      %v534 = vrot.slane %v384, 1
      %v535 = vsel %vm470, %v532, %v534
      %v536 = vrot.slane %v385, 1
      %v537 = vsel %vm470, %v534, %v536
      %v538 = vrot.slane %v386, 1
      %v539 = vsel %vm470, %v536, %v538
      %v540 = vrot.slane %v387, 1
      %v541 = vsel %vm470, %v538, %v540
      %v542 = vrot.slane %v388, 1
      %v543 = vsel %vm470, %v540, %v542
      %v544 = vrot.slane %v389, 1
      %v545 = vsel %vm470, %v542, %v544
      %vm584 = vcmask 1045504
      %v585 = vrot.slane %v352, 2
      %v586 = vrot.slane %v353, 2
      %v587 = vsel %vm584, %v585, %v586
      %v588 = vrot.slane %v354, 2
      %v589 = vsel %vm584, %v586, %v588
      %v590 = vrot.slane %v355, 2
      %v591 = vsel %vm584, %v588, %v590
      %v592 = vrot.slane %v356, 2
      %v593 = vsel %vm584, %v590, %v592
      %v594 = vrot.slane %v357, 2
      %v595 = vsel %vm584, %v592, %v594
      %v596 = vrot.slane %v358, 2
      %v597 = vsel %vm584, %v594, %v596
      %v598 = vrot.slane %v359, 2
      %v599 = vsel %vm584, %v596, %v598
      %v600 = vrot.slane %v360, 2
      %v601 = vsel %vm584, %v598, %v600
      %v602 = vrot.slane %v361, 2
      %v603 = vsel %vm584, %v600, %v602
      %v604 = vrot.slane %v362, 2
      %v605 = vsel %vm584, %v602, %v604
      %v606 = vrot.slane %v363, 2
      %v607 = vsel %vm584, %v604, %v606
      %v608 = vrot.slane %v364, 2
      %v609 = vsel %vm584, %v606, %v608
      %v610 = vrot.slane %v365, 2
      %v611 = vsel %vm584, %v608, %v610
      %v612 = vrot.slane %v366, 2
      %v613 = vsel %vm584, %v610, %v612
      %v614 = vrot.slane %v367, 2
      %v615 = vsel %vm584, %v612, %v614
      %v616 = vrot.slane %v368, 2
      %v617 = vsel %vm584, %v614, %v616
      %v618 = vrot.slane %v369, 2
      %v619 = vsel %vm584, %v616, %v618
      %v620 = vrot.slane %v370, 2
      %v621 = vsel %vm584, %v618, %v620
      %v622 = vrot.slane %v371, 2
      %v623 = vsel %vm584, %v620, %v622
      %v624 = vrot.slane %v372, 2
      %v625 = vsel %vm584, %v622, %v624
      %v626 = vrot.slane %v373, 2
      %v627 = vsel %vm584, %v624, %v626
      %v628 = vrot.slane %v374, 2
      %v629 = vsel %vm584, %v626, %v628
      %v630 = vrot.slane %v375, 2
      %v631 = vsel %vm584, %v628, %v630
      %v632 = vrot.slane %v376, 2
      %v633 = vsel %vm584, %v630, %v632
      %v634 = vrot.slane %v377, 2
      %v635 = vsel %vm584, %v632, %v634
      %v636 = vrot.slane %v378, 2
      %v637 = vsel %vm584, %v634, %v636
      %v638 = vrot.slane %v379, 2
      %v639 = vsel %vm584, %v636, %v638
      %v640 = vrot.slane %v380, 2
      %v641 = vsel %vm584, %v638, %v640
      %v642 = vrot.slane %v381, 2
      %v643 = vsel %vm584, %v640, %v642
      %v644 = vrot.slane %v382, 2
      %v645 = vsel %vm584, %v642, %v644
      %v646 = vrot.slane %v383, 2
      %v647 = vsel %vm584, %v644, %v646
      %v648 = vrot.slane %v384, 2
      %v649 = vsel %vm584, %v646, %v648
      %v650 = vrot.slane %v385, 2
      %v651 = vsel %vm584, %v648, %v650
      %v652 = vrot.slane %v386, 2
      %v653 = vsel %vm584, %v650, %v652
      %v654 = vrot.slane %v387, 2
      %v655 = vsel %vm584, %v652, %v654
      %v656 = vrot.slane %v388, 2
      %v657 = vsel %vm584, %v654, %v656
      %v658 = vrot.slane %v389, 2
      %v659 = vsel %vm584, %v656, %v658
      %v700 = vrot.slane %v390, 2
      %v701 = vsel %vm584, %v658, %v700
      %v702 = vrot.slane %v391, 2
      %v703 = vsel %vm584, %v700, %v702
      %vm707 = vcmask 1044480
      %v708 = vrot.slane %v354, 3
      %v709 = vrot.slane %v355, 3
      %v710 = vsel %vm707, %v708, %v709
      %v711 = vrot.slane %v356, 3
      %v712 = vsel %vm707, %v709, %v711
      %v713 = vrot.slane %v357, 3
      %v714 = vsel %vm707, %v711, %v713
      %v715 = vrot.slane %v358, 3
      %v716 = vsel %vm707, %v713, %v715
      %v717 = vrot.slane %v359, 3
      %v718 = vsel %vm707, %v715, %v717
      %v719 = vrot.slane %v360, 3
      %v720 = vsel %vm707, %v717, %v719
      %v721 = vrot.slane %v361, 3
      %v722 = vsel %vm707, %v719, %v721
      %v723 = vrot.slane %v362, 3
      %v724 = vsel %vm707, %v721, %v723
      %v725 = vrot.slane %v363, 3
      %v726 = vsel %vm707, %v723, %v725
      %v727 = vrot.slane %v364, 3
      %v728 = vsel %vm707, %v725, %v727
      %v729 = vrot.slane %v365, 3
      %v730 = vsel %vm707, %v727, %v729
      %v731 = vrot.slane %v366, 3
      %v732 = vsel %vm707, %v729, %v731
      %v733 = vrot.slane %v367, 3
      %v734 = vsel %vm707, %v731, %v733
      %v735 = vrot.slane %v368, 3
      %v736 = vsel %vm707, %v733, %v735
      %v737 = vrot.slane %v369, 3
      %v738 = vsel %vm707, %v735, %v737
      %v739 = vrot.slane %v370, 3
      %v740 = vsel %vm707, %v737, %v739
      %v741 = vrot.slane %v371, 3
      %v742 = vsel %vm707, %v739, %v741
      %v743 = vrot.slane %v372, 3
      %v744 = vsel %vm707, %v741, %v743
      %v745 = vrot.slane %v373, 3
      %v746 = vsel %vm707, %v743, %v745
      %v747 = vrot.slane %v374, 3
      %v748 = vsel %vm707, %v745, %v747
      %v749 = vrot.slane %v375, 3
      %v750 = vsel %vm707, %v747, %v749
      %v751 = vrot.slane %v376, 3
      %v752 = vsel %vm707, %v749, %v751
      %v753 = vrot.slane %v377, 3
      %v754 = vsel %vm707, %v751, %v753
      %v755 = vrot.slane %v378, 3
      %v756 = vsel %vm707, %v753, %v755
      %v757 = vrot.slane %v379, 3
      %v758 = vsel %vm707, %v755, %v757
      %v759 = vrot.slane %v380, 3
      %v760 = vsel %vm707, %v757, %v759
      %v761 = vrot.slane %v381, 3
      %v762 = vsel %vm707, %v759, %v761
      %v763 = vrot.slane %v382, 3
      %v764 = vsel %vm707, %v761, %v763
      %v765 = vrot.slane %v383, 3
      %v766 = vsel %vm707, %v763, %v765
      %v767 = vrot.slane %v384, 3
      %v768 = vsel %vm707, %v765, %v767
      %v769 = vrot.slane %v385, 3
      %v770 = vsel %vm707, %v767, %v769
      %v771 = vrot.slane %v386, 3
      %v772 = vsel %vm707, %v769, %v771
      %v773 = vrot.slane %v387, 3
      %v774 = vsel %vm707, %v771, %v773
      %v775 = vrot.slane %v388, 3
      %v776 = vsel %vm707, %v773, %v775
      %v777 = vrot.slane %v389, 3
      %v778 = vsel %vm707, %v775, %v777
      %v779 = vrot.slane %v390, 3
      %v780 = vsel %vm707, %v777, %v779
      %v781 = vrot.slane %v391, 3
      %v782 = vsel %vm707, %v779, %v781
      %vm821 = vcmask 1043456
      %v822 = vrot.slane %v354, 4
      %v823 = vrot.slane %v355, 4
      %v824 = vsel %vm821, %v822, %v823
      %v825 = vrot.slane %v356, 4
      %v826 = vsel %vm821, %v823, %v825
      %v827 = vrot.slane %v357, 4
      %v828 = vsel %vm821, %v825, %v827
      %v829 = vrot.slane %v358, 4
      %v830 = vsel %vm821, %v827, %v829
      %v831 = vrot.slane %v359, 4
      %v832 = vsel %vm821, %v829, %v831
      %v833 = vrot.slane %v360, 4
      %v834 = vsel %vm821, %v831, %v833
      %v835 = vrot.slane %v361, 4
      %v836 = vsel %vm821, %v833, %v835
      %v837 = vrot.slane %v362, 4
      %v838 = vsel %vm821, %v835, %v837
      %v839 = vrot.slane %v363, 4
      %v840 = vsel %vm821, %v837, %v839
      %v841 = vrot.slane %v364, 4
      %v842 = vsel %vm821, %v839, %v841
      %v843 = vrot.slane %v365, 4
      %v844 = vsel %vm821, %v841, %v843
      %v845 = vrot.slane %v366, 4
      %v846 = vsel %vm821, %v843, %v845
      %v847 = vrot.slane %v367, 4
      %v848 = vsel %vm821, %v845, %v847
      %v849 = vrot.slane %v368, 4
      %v850 = vsel %vm821, %v847, %v849
      %v851 = vrot.slane %v369, 4
      %v852 = vsel %vm821, %v849, %v851
      %v853 = vrot.slane %v370, 4
      %v854 = vsel %vm821, %v851, %v853
      %v855 = vrot.slane %v371, 4
      %v856 = vsel %vm821, %v853, %v855
      %v857 = vrot.slane %v372, 4
      %v858 = vsel %vm821, %v855, %v857
      %v859 = vrot.slane %v373, 4
      %v860 = vsel %vm821, %v857, %v859
      %v861 = vrot.slane %v374, 4
      %v862 = vsel %vm821, %v859, %v861
      %v863 = vrot.slane %v375, 4
      %v864 = vsel %vm821, %v861, %v863
      %v865 = vrot.slane %v376, 4
      %v866 = vsel %vm821, %v863, %v865
      %v867 = vrot.slane %v377, 4
      %v868 = vsel %vm821, %v865, %v867
      %v869 = vrot.slane %v378, 4
      %v870 = vsel %vm821, %v867, %v869
      %v871 = vrot.slane %v379, 4
      %v872 = vsel %vm821, %v869, %v871
      %v873 = vrot.slane %v380, 4
      %v874 = vsel %vm821, %v871, %v873
      %v875 = vrot.slane %v381, 4
      %v876 = vsel %vm821, %v873, %v875
      %v877 = vrot.slane %v382, 4
      %v878 = vsel %vm821, %v875, %v877
      %v879 = vrot.slane %v383, 4
      %v880 = vsel %vm821, %v877, %v879
      %v881 = vrot.slane %v384, 4
      %v882 = vsel %vm821, %v879, %v881
      %v883 = vrot.slane %v385, 4
      %v884 = vsel %vm821, %v881, %v883
      %v885 = vrot.slane %v386, 4
      %v886 = vsel %vm821, %v883, %v885
      %v887 = vrot.slane %v387, 4
      %v888 = vsel %vm821, %v885, %v887
      %v889 = vrot.slane %v388, 4
      %v890 = vsel %vm821, %v887, %v889
      %v891 = vrot.slane %v389, 4
      %v892 = vsel %vm821, %v889, %v891
      %v893 = vrot.slane %v390, 4
      %v894 = vsel %vm821, %v891, %v893
      %v895 = vrot.slane %v391, 4
      %v896 = vsel %vm821, %v893, %v895
      %v937 = vrot.slane %v392, 4
      %v938 = vsel %vm821, %v895, %v937
      %v939 = vrot.slane %v393, 4
      %v940 = vsel %vm821, %v937, %v939
      %vm944 = vcmask 1042432
      %v945 = vrot.slane %v356, 5
      %v946 = vrot.slane %v357, 5
      %v947 = vsel %vm944, %v945, %v946
      %v948 = vrot.slane %v358, 5
      %v949 = vsel %vm944, %v946, %v948
      %v950 = vrot.slane %v359, 5
      %v951 = vsel %vm944, %v948, %v950
      %v952 = vrot.slane %v360, 5
      %v953 = vsel %vm944, %v950, %v952
      %v954 = vrot.slane %v361, 5
      %v955 = vsel %vm944, %v952, %v954
      %v956 = vrot.slane %v362, 5
      %v957 = vsel %vm944, %v954, %v956
      %v958 = vrot.slane %v363, 5
      %v959 = vsel %vm944, %v956, %v958
      %v960 = vrot.slane %v364, 5
      %v961 = vsel %vm944, %v958, %v960
      %v962 = vrot.slane %v365, 5
      %v963 = vsel %vm944, %v960, %v962
      %v964 = vrot.slane %v366, 5
      %v965 = vsel %vm944, %v962, %v964
      %v966 = vrot.slane %v367, 5
      %v967 = vsel %vm944, %v964, %v966
      %v968 = vrot.slane %v368, 5
      %v969 = vsel %vm944, %v966, %v968
      %v970 = vrot.slane %v369, 5
      %v971 = vsel %vm944, %v968, %v970
      %v972 = vrot.slane %v370, 5
      %v973 = vsel %vm944, %v970, %v972
      %v974 = vrot.slane %v371, 5
      %v975 = vsel %vm944, %v972, %v974
      %v976 = vrot.slane %v372, 5
      %v977 = vsel %vm944, %v974, %v976
      %v978 = vrot.slane %v373, 5
      %v979 = vsel %vm944, %v976, %v978
      %v980 = vrot.slane %v374, 5
      %v981 = vsel %vm944, %v978, %v980
      %v982 = vrot.slane %v375, 5
      %v983 = vsel %vm944, %v980, %v982
      %v984 = vrot.slane %v376, 5
      %v985 = vsel %vm944, %v982, %v984
      %v986 = vrot.slane %v377, 5
      %v987 = vsel %vm944, %v984, %v986
      %v988 = vrot.slane %v378, 5
      %v989 = vsel %vm944, %v986, %v988
      %v990 = vrot.slane %v379, 5
      %v991 = vsel %vm944, %v988, %v990
      %v992 = vrot.slane %v380, 5
      %v993 = vsel %vm944, %v990, %v992
      %v994 = vrot.slane %v381, 5
      %v995 = vsel %vm944, %v992, %v994
      %v996 = vrot.slane %v382, 5
      %v997 = vsel %vm944, %v994, %v996
      %v998 = vrot.slane %v383, 5
      %v999 = vsel %vm944, %v996, %v998
      %v1000 = vrot.slane %v384, 5
      %v1001 = vsel %vm944, %v998, %v1000
      %v1002 = vrot.slane %v385, 5
      %v1003 = vsel %vm944, %v1000, %v1002
      %v1004 = vrot.slane %v386, 5
      %v1005 = vsel %vm944, %v1002, %v1004
      %v1006 = vrot.slane %v387, 5
      %v1007 = vsel %vm944, %v1004, %v1006
      %v1008 = vrot.slane %v388, 5
      %v1009 = vsel %vm944, %v1006, %v1008
      %v1010 = vrot.slane %v389, 5
      %v1011 = vsel %vm944, %v1008, %v1010
      %v1012 = vrot.slane %v390, 5
      %v1013 = vsel %vm944, %v1010, %v1012
      %v1014 = vrot.slane %v391, 5
      %v1015 = vsel %vm944, %v1012, %v1014
      %v1016 = vrot.slane %v392, 5
      %v1017 = vsel %vm944, %v1014, %v1016
      %v1018 = vrot.slane %v393, 5
      %v1019 = vsel %vm944, %v1016, %v1018
      %vm1058 = vcmask 1041408
      %v1059 = vrot.slane %v356, 6
      %v1060 = vrot.slane %v357, 6
      %v1061 = vsel %vm1058, %v1059, %v1060
      %v1062 = vrot.slane %v358, 6
      %v1063 = vsel %vm1058, %v1060, %v1062
      %v1064 = vrot.slane %v359, 6
      %v1065 = vsel %vm1058, %v1062, %v1064
      %v1066 = vrot.slane %v360, 6
      %v1067 = vsel %vm1058, %v1064, %v1066
      %v1068 = vrot.slane %v361, 6
      %v1069 = vsel %vm1058, %v1066, %v1068
      %v1070 = vrot.slane %v362, 6
      %v1071 = vsel %vm1058, %v1068, %v1070
      %v1072 = vrot.slane %v363, 6
      %v1073 = vsel %vm1058, %v1070, %v1072
      %v1074 = vrot.slane %v364, 6
      %v1075 = vsel %vm1058, %v1072, %v1074
      %v1076 = vrot.slane %v365, 6
      %v1077 = vsel %vm1058, %v1074, %v1076
      %v1078 = vrot.slane %v366, 6
      %v1079 = vsel %vm1058, %v1076, %v1078
      %v1080 = vrot.slane %v367, 6
      %v1081 = vsel %vm1058, %v1078, %v1080
      %v1082 = vrot.slane %v368, 6
      %v1083 = vsel %vm1058, %v1080, %v1082
      %v1084 = vrot.slane %v369, 6
      %v1085 = vsel %vm1058, %v1082, %v1084
      %v1086 = vrot.slane %v370, 6
      %v1087 = vsel %vm1058, %v1084, %v1086
      %v1088 = vrot.slane %v371, 6
      %v1089 = vsel %vm1058, %v1086, %v1088
      %v1090 = vrot.slane %v372, 6
      %v1091 = vsel %vm1058, %v1088, %v1090
      %v1092 = vrot.slane %v373, 6
      %v1093 = vsel %vm1058, %v1090, %v1092
      %v1094 = vrot.slane %v374, 6
      %v1095 = vsel %vm1058, %v1092, %v1094
      %v1096 = vrot.slane %v375, 6
      %v1097 = vsel %vm1058, %v1094, %v1096
      %v1098 = vrot.slane %v376, 6
      %v1099 = vsel %vm1058, %v1096, %v1098
      %v1100 = vrot.slane %v377, 6
      %v1101 = vsel %vm1058, %v1098, %v1100
      %v1102 = vrot.slane %v378, 6
      %v1103 = vsel %vm1058, %v1100, %v1102
      %v1104 = vrot.slane %v379, 6
      %v1105 = vsel %vm1058, %v1102, %v1104
      %v1106 = vrot.slane %v380, 6
      %v1107 = vsel %vm1058, %v1104, %v1106
      %v1108 = vrot.slane %v381, 6
      %v1109 = vsel %vm1058, %v1106, %v1108
      %v1110 = vrot.slane %v382, 6
      %v1111 = vsel %vm1058, %v1108, %v1110
      %v1112 = vrot.slane %v383, 6
      %v1113 = vsel %vm1058, %v1110, %v1112
      %v1114 = vrot.slane %v384, 6
      %v1115 = vsel %vm1058, %v1112, %v1114
      %v1116 = vrot.slane %v385, 6
      %v1117 = vsel %vm1058, %v1114, %v1116
      %v1118 = vrot.slane %v386, 6
      %v1119 = vsel %vm1058, %v1116, %v1118
      %v1120 = vrot.slane %v387, 6
      %v1121 = vsel %vm1058, %v1118, %v1120
      %v1122 = vrot.slane %v388, 6
      %v1123 = vsel %vm1058, %v1120, %v1122
      %v1124 = vrot.slane %v389, 6
      %v1125 = vsel %vm1058, %v1122, %v1124
      %v1126 = vrot.slane %v390, 6
      %v1127 = vsel %vm1058, %v1124, %v1126
      %v1128 = vrot.slane %v391, 6
      %v1129 = vsel %vm1058, %v1126, %v1128
      %v1130 = vrot.slane %v392, 6
      %v1131 = vsel %vm1058, %v1128, %v1130
      %v1132 = vrot.slane %v393, 6
      %v1133 = vsel %vm1058, %v1130, %v1132
      %v1172 = vpack.c.bf16 %v353, %v352
      %v1173 = vpack.c.bf16 %v475, %v473
      %v1174 = vpack.c.bf16 %v589, %v587
      %v1175 = vpack.c.bf16 %v593, %v591
      %v1176 = vpack.c.bf16 %v712, %v710
      %v1177 = vpack.c.bf16 %v826, %v824
      %v1178 = vpack.c.bf16 %v830, %v828
      %v1179 = vpack.c.bf16 %v949, %v947
      %v1180 = vpack.c.bf16 %v1063, %v1061
      %v1181 = vpack.c.bf16 %v355, %v354
      %v1182 = vpack.c.bf16 %v479, %v477
      %v1183 = vpack.c.bf16 %v597, %v595
      %v1184 = vpack.c.bf16 %v716, %v714
      %v1185 = vpack.c.bf16 %v834, %v832
      %v1186 = vpack.c.bf16 %v953, %v951
      %v1187 = vpack.c.bf16 %v1067, %v1065
      %v1188 = vpack.c.bf16 %v357, %v356
      %v1189 = vpack.c.bf16 %v483, %v481
      %v1190 = vpack.c.bf16 %v601, %v599
      %v1191 = vpack.c.bf16 %v720, %v718
      %v1192 = vpack.c.bf16 %v838, %v836
      %v1193 = vpack.c.bf16 %v957, %v955
      %v1194 = vpack.c.bf16 %v1071, %v1069
      %v1195 = vpack.c.bf16 %v359, %v358
      %v1196 = vpack.c.bf16 %v487, %v485
      %v1197 = vpack.c.bf16 %v605, %v603
      %v1198 = vpack.c.bf16 %v724, %v722
      %v1199 = vpack.c.bf16 %v842, %v840
      %v1200 = vpack.c.bf16 %v961, %v959
      %v1201 = vpack.c.bf16 %v1075, %v1073
      %v1202 = vpack.c.bf16 %v361, %v360
      %v1203 = vpack.c.bf16 %v491, %v489
      %v1204 = vpack.c.bf16 %v609, %v607
      %v1205 = vpack.c.bf16 %v728, %v726
      %v1206 = vpack.c.bf16 %v846, %v844
      %v1207 = vpack.c.bf16 %v965, %v963
      %v1208 = vpack.c.bf16 %v1079, %v1077
      %v1209 = vpack.c.bf16 %v363, %v362
      %v1210 = vpack.c.bf16 %v495, %v493
      %v1211 = vpack.c.bf16 %v613, %v611
      %v1212 = vpack.c.bf16 %v732, %v730
      %v1213 = vpack.c.bf16 %v850, %v848
      %v1214 = vpack.c.bf16 %v969, %v967
      %v1215 = vpack.c.bf16 %v1083, %v1081
      %v1216 = vpack.c.bf16 %v365, %v364
      %v1217 = vpack.c.bf16 %v499, %v497
      %v1218 = vpack.c.bf16 %v617, %v615
      %v1219 = vpack.c.bf16 %v736, %v734
      %v1220 = vpack.c.bf16 %v854, %v852
      %v1221 = vpack.c.bf16 %v973, %v971
      %v1222 = vpack.c.bf16 %v1087, %v1085
      %v1223 = vpack.c.bf16 %v367, %v366
      %v1224 = vpack.c.bf16 %v503, %v501
      %v1225 = vpack.c.bf16 %v621, %v619
      %v1226 = vpack.c.bf16 %v740, %v738
      %v1227 = vpack.c.bf16 %v858, %v856
      %v1228 = vpack.c.bf16 %v977, %v975
      %v1229 = vpack.c.bf16 %v1091, %v1089
      %v1230 = vpack.c.bf16 %v369, %v368
      %v1231 = vpack.c.bf16 %v507, %v505
      %v1232 = vpack.c.bf16 %v625, %v623
      %v1233 = vpack.c.bf16 %v744, %v742
      %v1234 = vpack.c.bf16 %v862, %v860
      %v1235 = vpack.c.bf16 %v981, %v979
      %v1236 = vpack.c.bf16 %v1095, %v1093
      %v1237 = vpack.c.bf16 %v371, %v370
      %v1238 = vpack.c.bf16 %v511, %v509
      %v1239 = vpack.c.bf16 %v629, %v627
      %v1240 = vpack.c.bf16 %v748, %v746
      %v1241 = vpack.c.bf16 %v866, %v864
      %v1242 = vpack.c.bf16 %v985, %v983
      %v1243 = vpack.c.bf16 %v1099, %v1097
      %v1244 = vpack.c.bf16 %v373, %v372
      %v1245 = vpack.c.bf16 %v515, %v513
      %v1246 = vpack.c.bf16 %v633, %v631
      %v1247 = vpack.c.bf16 %v752, %v750
      %v1248 = vpack.c.bf16 %v870, %v868
      %v1249 = vpack.c.bf16 %v989, %v987
      %v1250 = vpack.c.bf16 %v1103, %v1101
      %v1251 = vpack.c.bf16 %v375, %v374
      %v1252 = vpack.c.bf16 %v519, %v517
      %v1253 = vpack.c.bf16 %v637, %v635
      %v1254 = vpack.c.bf16 %v756, %v754
      %v1255 = vpack.c.bf16 %v874, %v872
      %v1256 = vpack.c.bf16 %v993, %v991
      %v1257 = vpack.c.bf16 %v1107, %v1105
      %v1258 = vpack.c.bf16 %v377, %v376
      %v1259 = vpack.c.bf16 %v523, %v521
      %v1260 = vpack.c.bf16 %v641, %v639
      %v1261 = vpack.c.bf16 %v760, %v758
      %v1262 = vpack.c.bf16 %v878, %v876
      %v1263 = vpack.c.bf16 %v997, %v995
      %v1264 = vpack.c.bf16 %v1111, %v1109
      %v1265 = vpack.c.bf16 %v379, %v378
      %v1266 = vpack.c.bf16 %v527, %v525
      %v1267 = vpack.c.bf16 %v645, %v643
      %v1268 = vpack.c.bf16 %v764, %v762
      %v1269 = vpack.c.bf16 %v882, %v880
      %v1270 = vpack.c.bf16 %v1001, %v999
      %v1271 = vpack.c.bf16 %v1115, %v1113
      %v1272 = vpack.c.bf16 %v381, %v380
      %v1273 = vpack.c.bf16 %v531, %v529
      %v1274 = vpack.c.bf16 %v649, %v647
      %v1275 = vpack.c.bf16 %v768, %v766
      %v1276 = vpack.c.bf16 %v886, %v884
      %v1277 = vpack.c.bf16 %v1005, %v1003
      %v1278 = vpack.c.bf16 %v1119, %v1117
      %v1279 = vpack.c.bf16 %v383, %v382
      %v1280 = vpack.c.bf16 %v535, %v533
      %v1281 = vpack.c.bf16 %v653, %v651
      %v1282 = vpack.c.bf16 %v772, %v770
      %v1283 = vpack.c.bf16 %v890, %v888
      %v1284 = vpack.c.bf16 %v1009, %v1007
      %v1285 = vpack.c.bf16 %v1123, %v1121
      %v1286 = vpack.c.bf16 %v385, %v384
      %v1287 = vpack.c.bf16 %v539, %v537
      %v1288 = vpack.c.bf16 %v657, %v655
      %v1289 = vpack.c.bf16 %v776, %v774
      %v1290 = vpack.c.bf16 %v894, %v892
      %v1291 = vpack.c.bf16 %v1013, %v1011
      %v1292 = vpack.c.bf16 %v1127, %v1125
      %v1293 = vpack.c.bf16 %v387, %v386
      %v1294 = vpack.c.bf16 %v543, %v541
      %v1295 = vpack.c.bf16 %v701, %v659
      %v1296 = vpack.c.bf16 %v780, %v778
      %v1297 = vpack.c.bf16 %v938, %v896
      %v1298 = vpack.c.bf16 %v1017, %v1015
      %v1299 = vpack.c.bf16 %v1131, %v1129
      %v1300 = vpack.c.bf16 %v389, %v388
      %v1301 = vpack.c.bf16 %v544, %v545
      %v1302 = vpack.c.bf16 %v658, %v659
      %v1303 = vpack.c.bf16 %v702, %v703
      %v1304 = vpack.c.bf16 %v781, %v782
      %v1305 = vpack.c.bf16 %v895, %v896
      %v1306 = vpack.c.bf16 %v939, %v940
      %v1307 = vpack.c.bf16 %v1018, %v1019
      %v1308 = vpack.c.bf16 %v1132, %v1133
      %v1309 = vld [vmem:[%s2] sm:$0xf]
      %v1310 = vld [vmem:[%s2 + $0x4] sm:$0xf]
      %v1311 = vld [vmem:[%s2 + $0x8] sm:$0xf]
      %v1312 = vld [vmem:[%s2 + $0xc] sm:$0xf]
      %v1313 = vld [vmem:[%s2 + $0x10] sm:$0xf]
      %v1314 = vld [vmem:[%s2 + $0x14] sm:$0xf]
      %v1315 = vld [vmem:[%s2 + $0x18] sm:$0xf]
      %v1316 = vld [vmem:[%s2 + $0x1c] sm:$0xf]
      %v1317 = vld [vmem:[%s2 + $0x20] sm:$0xf]
      %v1318 = vld [vmem:[%s2 + $0x24] sm:$0xf]
      %v1319 = vld [vmem:[%s2 + $0x28] sm:$0xf]
      %v1320 = vld [vmem:[%s2 + $0x2c] sm:$0xf]
      %v1321 = vld [vmem:[%s2 + $0x30] sm:$0xf]
      %v1322 = vld [vmem:[%s2 + $0x34] sm:$0xf]
      %v1323 = vld [vmem:[%s2 + $0x38] sm:$0xf]
      %v1324 = vld [vmem:[%s2 + $0x3c] sm:$0xf]
      %v1325 = vld [vmem:[%s2 + $0x40] sm:$0xf]
      %v1326 = vld [vmem:[%s2 + $0x44] sm:$0xf]
      %v1327 = vld [vmem:[%s2 + $0x48] sm:$0xf]
      %v1328 = vld [vmem:[%s2 + $0x4c] sm:$0xf]
      %v1329 = vld [vmem:[%s2 + $0x50] sm:$0xf]
      %v1330 = vld [vmem:[%s2 + $0x54] sm:$0xf]
      %v1331 = vld [vmem:[%s2 + $0x58] sm:$0xf]
      %v1332 = vld [vmem:[%s2 + $0x5c] sm:$0xf]
      %v1333 = vld [vmem:[%s2 + $0x60] sm:$0xf]
      %v1334 = vld [vmem:[%s2 + $0x64] sm:$0xf]
      %v1335 = vld [vmem:[%s2 + $0x68] sm:$0xf]
      %v1336 = vld [vmem:[%s2 + $0x6c] sm:$0xf]
      %v1337 = vld [vmem:[%s2 + $0x70] sm:$0xf]
      %v1338 = vld [vmem:[%s2 + $0x74] sm:$0xf]
      %v1339 = vld [vmem:[%s2 + $0x78] sm:$0xf]
      %v1340 = vld [vmem:[%s2 + $0x7c] sm:$0xf]
      %v1341 = vld [vmem:[%s2 + $0x80] sm:$0xf]
      %v1342 = vld [vmem:[%s2 + $0x84] sm:$0xf]
      %v1343 = vld [vmem:[%s2 + $0x88] sm:$0xf]
      %v1344 = vld [vmem:[%s2 + $0x8c] sm:$0xf]
      %v1345 = vld [vmem:[%s2 + $0x90] sm:$0xf]
      %v1346 = vld [vmem:[%s2 + $0x94] sm:$0xf]
      %v1347 = vld [vmem:[%s2 + $0x98] sm:$0xf]
      %v1348 = vld [vmem:[%s2 + $0x9c] sm:$0xf]
      %v1349 = vld [vmem:[%s2 + $0xa0] sm:$0xf]
      %v1350 = vld [vmem:[%s2 + $0xa4] sm:$0xf]
      %v1351 = vld [vmem:[%s2 + $0xa8] sm:$0xf]
      %v1352 = vld [vmem:[%s2 + $0xac] sm:$0xf]
      %v1353 = vld [vmem:[%s2 + $0xb0] sm:$0xf]
      %v1354 = vld [vmem:[%s2 + $0xb4] sm:$0xf]
      %v1355 = vld [vmem:[%s2 + $0xb8] sm:$0xf]
      %v1356 = vld [vmem:[%s2 + $0xbc] sm:$0xf]
      %v1357 = vld [vmem:[%s2 + $0xc0] sm:$0xf]
      %v1358 = vld [vmem:[%s2 + $0xc4] sm:$0xf]
      %v1359 = vld [vmem:[%s2 + $0xc8] sm:$0xf]
      %v1360 = vld [vmem:[%s2 + $0xcc] sm:$0xf]
      %v1361 = vld [vmem:[%s2 + $0xd0] sm:$0xf]
      %v1362 = vld [vmem:[%s2 + $0xd4] sm:$0xf]
      %v1363 = vld [vmem:[%s2 + $0xd8] sm:$0xf]
      %v1364 = vld [vmem:[%s2 + $0xdc] sm:$0xf]
      %v1365 = vld [vmem:[%s2 + $0xe0] sm:$0xf]
      %v1366 = vld [vmem:[%s2 + $0xe4] sm:$0xf]
      %v1367 = vld [vmem:[%s2 + $0xe8] sm:$0xf]
      %v1368 = vld [vmem:[%s2 + $0xec] sm:$0xf]
      %v1369 = vld [vmem:[%s2 + $0xf0] sm:$0xf]
      %v1370 = vld [vmem:[%s2 + $0xf4] sm:$0xf]
      %v1371 = vld [vmem:[%s2 + $0xf8] sm:$0xf]
      %v1372 = vld [vmem:[%s2 + $0xfc] sm:$0xf]
      %v1373 = vld [vmem:[%s2 + $0x100] sm:$0xf]
      %v1374 = vld [vmem:[%s2 + $0x104] sm:$0xf]
      %v1375 = vld [vmem:[%s2 + $0x108] sm:$0xf]
      %v1376 = vld [vmem:[%s2 + $0x10c] sm:$0xf]
      %v1377 = vld [vmem:[%s2 + $0x110] sm:$0xf]
      %v1378 = vld [vmem:[%s2 + $0x114] sm:$0xf]
      %v1379 = vld [vmem:[%s2 + $0x118] sm:$0xf]
      %v1380 = vld [vmem:[%s2 + $0x11c] sm:$0xf]
      %v1381 = vld [vmem:[%s2 + $0x120] sm:$0xf]
      %v1382 = vld [vmem:[%s2 + $0x124] sm:$0xf]
      %v1383 = vld [vmem:[%s2 + $0x128] sm:$0xf]
      %v1384 = vld [vmem:[%s2 + $0x12c] sm:$0xf]
      %v1385 = vld [vmem:[%s2 + $0x130] sm:$0xf]
      %v1386 = vld [vmem:[%s2 + $0x134] sm:$0xf]
      %v1387 = vld [vmem:[%s2 + $0x138] sm:$0xf]
      %v1388 = vld [vmem:[%s2 + $0x13c] sm:$0xf]
      %v1389 = vld [vmem:[%s2 + $0x140] sm:$0xf]
      %v1390 = vld [vmem:[%s2 + $0x144] sm:$0xf]
      %v1391 = vld [vmem:[%s2 + $0x148] sm:$0xf]
      %v1392 = vld [vmem:[%s2 + $0x14c] sm:$0xf]
      %v1393 = vld [vmem:[%s2 + $0x150] sm:$0xf]
      %v1394 = vld [vmem:[%s2 + $0x154] sm:$0xf]
      %v1395 = vld [vmem:[%s2 + $0x158] sm:$0xf]
      %v1396 = vld [vmem:[%s2 + $0x15c] sm:$0xf]
      %v1397 = vld [vmem:[%s2 + $0x160] sm:$0xf]
      %v1398 = vld [vmem:[%s2 + $0x164] sm:$0xf]
      %v1399 = vld [vmem:[%s2 + $0x168] sm:$0xf]
      %v1400 = vld [vmem:[%s2 + $0x16c] sm:$0xf]
      %v1401 = vld [vmem:[%s2 + $0x170] sm:$0xf]
      %v1402 = vld [vmem:[%s2 + $0x174] sm:$0xf]
      %v1403 = vld [vmem:[%s2 + $0x178] sm:$0xf]
      %v1404 = vld [vmem:[%s2 + $0x17c] sm:$0xf]
      %v1405 = vld [vmem:[%s2 + $0x180] sm:$0xf]
      %v1406 = vld [vmem:[%s2 + $0x184] sm:$0xf]
      %v1407 = vld [vmem:[%s2 + $0x188] sm:$0xf]
      %v1408 = vld [vmem:[%s2 + $0x18c] sm:$0xf]
      %v1409 = vld [vmem:[%s2 + $0x190] sm:$0xf]
      %v1410 = vld [vmem:[%s2 + $0x194] sm:$0xf]
      %v1411 = vld [vmem:[%s2 + $0x198] sm:$0xf]
      %v1412 = vld [vmem:[%s2 + $0x19c] sm:$0xf]
      %v1413 = vld [vmem:[%s2 + $0x1a0] sm:$0xf]
      %v1414 = vld [vmem:[%s2 + $0x1a4] sm:$0xf]
      %v1415 = vld [vmem:[%s2 + $0x1a8] sm:$0xf]
      %v1416 = vld [vmem:[%s2 + $0x1ac] sm:$0xf]
      %v1417 = vld [vmem:[%s2 + $0x1b0] sm:$0xf]
      %v1418 = vld [vmem:[%s2 + $0x1b4] sm:$0xf]
      %v1419 = vld [vmem:[%s2 + $0x1b8] sm:$0xf]
      %v1420 = vld [vmem:[%s2 + $0x1bc] sm:$0xf]
      %v1421 = vld [vmem:[%s2 + $0x1c0] sm:$0xf]
      %v1422 = vld [vmem:[%s2 + $0x1c4] sm:$0xf]
      %v1423 = vld [vmem:[%s2 + $0x1c8] sm:$0xf]
      %v1424 = vld [vmem:[%s2 + $0x1cc] sm:$0xf]
      %v1425 = vld [vmem:[%s2 + $0x1d0] sm:$0xf]
      %v1426 = vld [vmem:[%s2 + $0x1d4] sm:$0xf]
      %v1427 = vld [vmem:[%s2 + $0x1d8] sm:$0xf]
      %v1428 = vld [vmem:[%s2 + $0x1dc] sm:$0xf]
      %v1429 = vld [vmem:[%s2 + $0x1e0] sm:$0xf]
      %v1430 = vld [vmem:[%s2 + $0x1e4] sm:$0xf]
      %v1431 = vld [vmem:[%s2 + $0x1e8] sm:$0xf]
      %v1432 = vld [vmem:[%s2 + $0x1ec] sm:$0xf]
      %v1433 = vld [vmem:[%s2 + $0x1f0] sm:$0xf]
      %v1434 = vld [vmem:[%s2 + $0x1f4] sm:$0xf]
      %v1435 = vld [vmem:[%s2 + $0x1f8] sm:$0xf]
      %v1436 = vld [vmem:[%s2 + $0x1fc] sm:$0xf]
      %v1437 = vld [vmem:[%s2 + $0x200] sm:$0xf]
      %v1438 = vld [vmem:[%s2 + $0x204] sm:$0xf]
      %v1439 = vld [vmem:[%s2 + $0x208] sm:$0xf]
      %v1440 = vld [vmem:[%s2 + $0x20c] sm:$0xf]
      %v1441 = vld [vmem:[%s2 + $0x210] sm:$0xf]
      %v1442 = vld [vmem:[%s2 + $0x214] sm:$0xf]
      %v1443 = vld [vmem:[%s2 + $0x218] sm:$0xf]
      %v1444 = vld [vmem:[%s2 + $0x21c] sm:$0xf]
      %v1445 = vld [vmem:[%s2 + $0x220] sm:$0xf]
      %v1446 = vld [vmem:[%s2 + $0x224] sm:$0xf]
      %v1447 = vld [vmem:[%s2 + $0x228] sm:$0xf]
      %v1448 = vld [vmem:[%s2 + $0x22c] sm:$0xf]
      %v1449 = vld [vmem:[%s2 + $0x230] sm:$0xf]
      %v1450 = vld [vmem:[%s2 + $0x234] sm:$0xf]
      %v1451 = vld [vmem:[%s2 + $0x238] sm:$0xf]
      %v1452 = vld [vmem:[%s2 + $0x23c] sm:$0xf]
      %v1453 = vld [vmem:[%s3] sm:$0x1]
      %v1455 = vlaneseq
      %v1456 = vshrl.u32 %v1455, 7
      %v1457 = vsub.s32 0, %v1456
      %v1458 = vrot.slane %v1453, %v1457
      %v1604 = vunpack.c.l.b16 %v1309
      %v1605 = vunpack.c.l.b16 %v1310
      %v1606 = vunpack.c.l.b16 %v1311
      %v1607 = vunpack.c.l.b16 %v1312
      %v1608 = vunpack.c.l.b16 %v1313
      %v1609 = vunpack.c.l.b16 %v1314
      %v1610 = vunpack.c.l.b16 %v1315
      %v1611 = vunpack.c.l.b16 %v1316
      %v1612 = vunpack.c.l.b16 %v1317
      %v1613 = vunpack.c.l.b16 %v1318
      %v1614 = vunpack.c.l.b16 %v1319
      %v1615 = vunpack.c.l.b16 %v1320
      %v1616 = vunpack.c.l.b16 %v1321
      %v1617 = vunpack.c.l.b16 %v1322
      %v1618 = vunpack.c.l.b16 %v1323
      %v1619 = vunpack.c.l.b16 %v1324
      %v1620 = vunpack.c.l.b16 %v1325
      %v1621 = vunpack.c.l.b16 %v1326
      %v1622 = vunpack.c.l.b16 %v1327
      %v1623 = vunpack.c.l.b16 %v1328
      %v1624 = vunpack.c.l.b16 %v1329
      %v1625 = vunpack.c.l.b16 %v1330
      %v1626 = vunpack.c.l.b16 %v1331
      %v1627 = vunpack.c.l.b16 %v1332
      %v1628 = vunpack.c.l.b16 %v1333
      %v1629 = vunpack.c.l.b16 %v1334
      %v1630 = vunpack.c.l.b16 %v1335
      %v1631 = vunpack.c.l.b16 %v1336
      %v1632 = vunpack.c.l.b16 %v1337
      %v1633 = vunpack.c.l.b16 %v1338
      %v1634 = vunpack.c.l.b16 %v1339
      %v1635 = vunpack.c.l.b16 %v1340
      %v1636 = vunpack.c.l.b16 %v1341
      %v1637 = vunpack.c.l.b16 %v1342
      %v1638 = vunpack.c.l.b16 %v1343
      %v1639 = vunpack.c.l.b16 %v1344
      %v1640 = vunpack.c.l.b16 %v1345
      %v1641 = vunpack.c.l.b16 %v1346
      %v1642 = vunpack.c.l.b16 %v1347
      %v1643 = vunpack.c.l.b16 %v1348
      %v1644 = vunpack.c.l.b16 %v1349
      %v1645 = vunpack.c.l.b16 %v1350
      %v1646 = vunpack.c.l.b16 %v1351
      %v1647 = vunpack.c.l.b16 %v1352
      %v1648 = vunpack.c.l.b16 %v1353
      %v1649 = vunpack.c.l.b16 %v1354
      %v1650 = vunpack.c.l.b16 %v1355
      %v1651 = vunpack.c.l.b16 %v1356
      %v1652 = vunpack.c.l.b16 %v1357
      %v1653 = vunpack.c.l.b16 %v1358
      %v1654 = vunpack.c.l.b16 %v1359
      %v1655 = vunpack.c.l.b16 %v1360
      %v1656 = vunpack.c.l.b16 %v1361
      %v1657 = vunpack.c.l.b16 %v1362
      %v1658 = vunpack.c.l.b16 %v1363
      %v1659 = vunpack.c.l.b16 %v1364
      %v1660 = vunpack.c.l.b16 %v1365
      %v1661 = vunpack.c.l.b16 %v1366
      %v1662 = vunpack.c.l.b16 %v1367
      %v1663 = vunpack.c.l.b16 %v1368
      %v1664 = vunpack.c.l.b16 %v1369
      %v1665 = vunpack.c.l.b16 %v1370
      %v1666 = vunpack.c.l.b16 %v1371
      %v1667 = vunpack.c.l.b16 %v1372
      %v1668 = vunpack.c.l.b16 %v1373
      %v1669 = vunpack.c.l.b16 %v1374
      %v1670 = vunpack.c.l.b16 %v1375
      %v1671 = vunpack.c.l.b16 %v1376
      %v1672 = vunpack.c.l.b16 %v1377
      %v1673 = vunpack.c.l.b16 %v1378
      %v1674 = vunpack.c.l.b16 %v1379
      %v1675 = vunpack.c.l.b16 %v1380
      %v1676 = vunpack.c.l.b16 %v1381
      %v1677 = vunpack.c.l.b16 %v1382
      %v1678 = vunpack.c.l.b16 %v1383
      %v1679 = vunpack.c.l.b16 %v1384
      %v1680 = vunpack.c.l.b16 %v1385
      %v1681 = vunpack.c.l.b16 %v1386
      %v1682 = vunpack.c.l.b16 %v1387
      %v1683 = vunpack.c.l.b16 %v1388
      %v1684 = vunpack.c.l.b16 %v1389
      %v1685 = vunpack.c.l.b16 %v1390
      %v1686 = vunpack.c.l.b16 %v1391
      %v1687 = vunpack.c.l.b16 %v1392
      %v1688 = vunpack.c.l.b16 %v1393
      %v1689 = vunpack.c.l.b16 %v1394
      %v1690 = vunpack.c.l.b16 %v1395
      %v1691 = vunpack.c.l.b16 %v1396
      %v1692 = vunpack.c.l.b16 %v1397
      %v1693 = vunpack.c.l.b16 %v1398
      %v1694 = vunpack.c.l.b16 %v1399
      %v1695 = vunpack.c.l.b16 %v1400
      %v1696 = vunpack.c.l.b16 %v1401
      %v1697 = vunpack.c.l.b16 %v1402
      %v1698 = vunpack.c.l.b16 %v1403
      %v1699 = vunpack.c.l.b16 %v1404
      %v1700 = vunpack.c.l.b16 %v1405
      %v1701 = vunpack.c.l.b16 %v1406
      %v1702 = vunpack.c.l.b16 %v1407
      %v1703 = vunpack.c.l.b16 %v1408
      %v1704 = vunpack.c.l.b16 %v1409
      %v1705 = vunpack.c.l.b16 %v1410
      %v1706 = vunpack.c.l.b16 %v1411
      %v1707 = vunpack.c.l.b16 %v1412
      %v1708 = vunpack.c.l.b16 %v1413
      %v1709 = vunpack.c.l.b16 %v1414
      %v1710 = vunpack.c.l.b16 %v1415
      %v1711 = vunpack.c.l.b16 %v1416
      %v1712 = vunpack.c.l.b16 %v1417
      %v1713 = vunpack.c.l.b16 %v1418
      %v1714 = vunpack.c.l.b16 %v1419
      %v1715 = vunpack.c.l.b16 %v1420
      %v1716 = vunpack.c.l.b16 %v1421
      %v1717 = vunpack.c.l.b16 %v1422
      %v1718 = vunpack.c.l.b16 %v1423
      %v1719 = vunpack.c.l.b16 %v1424
      %v1720 = vunpack.c.l.b16 %v1425
      %v1721 = vunpack.c.l.b16 %v1426
      %v1722 = vunpack.c.l.b16 %v1427
      %v1723 = vunpack.c.l.b16 %v1428
      %v1724 = vunpack.c.l.b16 %v1429
      %v1725 = vunpack.c.l.b16 %v1430
      %v1726 = vunpack.c.l.b16 %v1431
      %v1727 = vunpack.c.l.b16 %v1432
      %v1728 = vunpack.c.l.b16 %v1433
      %v1729 = vunpack.c.l.b16 %v1434
      %v1730 = vunpack.c.l.b16 %v1435
      %v1731 = vunpack.c.l.b16 %v1436
      %v1732 = vunpack.c.l.b16 %v1437
      %v1733 = vunpack.c.l.b16 %v1438
      %v1734 = vunpack.c.l.b16 %v1439
      %v1735 = vunpack.c.l.b16 %v1440
      %v1736 = vunpack.c.l.b16 %v1441
      %v1737 = vunpack.c.l.b16 %v1442
      %v1738 = vunpack.c.l.b16 %v1443
      %v1739 = vunpack.c.l.b16 %v1444
      %v1740 = vunpack.c.l.b16 %v1445
      %v1741 = vunpack.c.l.b16 %v1446
      %v1742 = vunpack.c.l.b16 %v1447
      %v1743 = vunpack.c.l.b16 %v1448
      %v1744 = vunpack.c.l.b16 %v1449
      %v1745 = vunpack.c.l.b16 %v1450
      %v1746 = vunpack.c.l.b16 %v1451
      %v1747 = vunpack.c.l.b16 %v1452
      %v1748 = vpack.c.b16 %v1605, %v1604
      %v1749 = vpack.c.b16 %v1607, %v1606
      %v1750 = vpack.c.b16 %v1609, %v1608
      %v1751 = vpack.c.b16 %v1611, %v1610
      %v1752 = vpack.c.b16 %v1613, %v1612
      %v1753 = vpack.c.b16 %v1615, %v1614
      %v1754 = vpack.c.b16 %v1617, %v1616
      %v1755 = vpack.c.b16 %v1619, %v1618
      %v1756 = vpack.c.b16 %v1621, %v1620
      %v1757 = vpack.c.b16 %v1623, %v1622
      %v1758 = vpack.c.b16 %v1625, %v1624
      %v1759 = vpack.c.b16 %v1627, %v1626
      %v1760 = vpack.c.b16 %v1629, %v1628
      %v1761 = vpack.c.b16 %v1631, %v1630
      %v1762 = vpack.c.b16 %v1633, %v1632
      %v1763 = vpack.c.b16 %v1635, %v1634
      %v1764 = vpack.c.b16 %v1637, %v1636
      %v1765 = vpack.c.b16 %v1639, %v1638
      %v1766 = vpack.c.b16 %v1641, %v1640
      %v1767 = vpack.c.b16 %v1643, %v1642
      %v1768 = vpack.c.b16 %v1645, %v1644
      %v1769 = vpack.c.b16 %v1647, %v1646
      %v1770 = vpack.c.b16 %v1649, %v1648
      %v1771 = vpack.c.b16 %v1651, %v1650
      %v1772 = vpack.c.b16 %v1653, %v1652
      %v1773 = vpack.c.b16 %v1655, %v1654
      %v1774 = vpack.c.b16 %v1657, %v1656
      %v1775 = vpack.c.b16 %v1659, %v1658
      %v1776 = vpack.c.b16 %v1661, %v1660
      %v1777 = vpack.c.b16 %v1663, %v1662
      %v1778 = vpack.c.b16 %v1665, %v1664
      %v1779 = vpack.c.b16 %v1667, %v1666
      %v1780 = vpack.c.b16 %v1669, %v1668
      %v1781 = vpack.c.b16 %v1671, %v1670
      %v1782 = vpack.c.b16 %v1673, %v1672
      %v1783 = vpack.c.b16 %v1675, %v1674
      %v1784 = vpack.c.b16 %v1677, %v1676
      %v1785 = vpack.c.b16 %v1679, %v1678
      %v1786 = vpack.c.b16 %v1681, %v1680
      %v1787 = vpack.c.b16 %v1683, %v1682
      %v1788 = vpack.c.b16 %v1685, %v1684
      %v1789 = vpack.c.b16 %v1687, %v1686
      %v1790 = vpack.c.b16 %v1689, %v1688
      %v1791 = vpack.c.b16 %v1691, %v1690
      %v1792 = vpack.c.b16 %v1693, %v1692
      %v1793 = vpack.c.b16 %v1695, %v1694
      %v1794 = vpack.c.b16 %v1697, %v1696
      %v1795 = vpack.c.b16 %v1699, %v1698
      %v1796 = vpack.c.b16 %v1701, %v1700
      %v1797 = vpack.c.b16 %v1703, %v1702
      %v1798 = vpack.c.b16 %v1705, %v1704
      %v1799 = vpack.c.b16 %v1707, %v1706
      %v1800 = vpack.c.b16 %v1709, %v1708
      %v1801 = vpack.c.b16 %v1711, %v1710
      %v1802 = vpack.c.b16 %v1713, %v1712
      %v1803 = vpack.c.b16 %v1715, %v1714
      %v1804 = vpack.c.b16 %v1717, %v1716
      %v1805 = vpack.c.b16 %v1719, %v1718
      %v1806 = vpack.c.b16 %v1721, %v1720
      %v1807 = vpack.c.b16 %v1723, %v1722
      %v1808 = vpack.c.b16 %v1725, %v1724
      %v1809 = vpack.c.b16 %v1727, %v1726
      %v1810 = vpack.c.b16 %v1729, %v1728
      %v1811 = vpack.c.b16 %v1731, %v1730
      %v1812 = vpack.c.b16 %v1733, %v1732
      %v1813 = vpack.c.b16 %v1735, %v1734
      %v1814 = vpack.c.b16 %v1737, %v1736
      %v1815 = vpack.c.b16 %v1739, %v1738
      %v1816 = vpack.c.b16 %v1741, %v1740
      %v1817 = vpack.c.b16 %v1743, %v1742
      %v1818 = vpack.c.b16 %v1745, %v1744
      %v1819 = vpack.c.b16 %v1747, %v1746
      %1892 = vmatprep.subr.bf16.mxu0 0
      %1893 = vmatpush1.bf16.msra.mxu0 %v1748
      %1894 = vmatprep.subr.bf16.mxu0 0
      %1895 = vmatpush1.bf16.msra.mxu0 %v1749
      %1896 = vmatprep.subr.bf16.mxu0 0
      %1897 = vmatpush1.bf16.msra.mxu0 %v1750
      %1898 = vmatprep.subr.bf16.mxu0 0
      %1899 = vmatpush1.bf16.msra.mxu0 %v1751
      %1900 = vmatprep.subr.bf16.mxu0 0
      %1901 = vmatpush1.bf16.msra.mxu0 %v1752
      %1902 = vmatprep.subr.bf16.mxu0 0
      %1903 = vmatpush1.bf16.msra.mxu0 %v1753
      %1904 = vmatprep.subr.bf16.mxu0 0
      %1905 = vmatpush1.bf16.msra.mxu0 %v1754
      %1906 = vmatprep.subr.bf16.mxu0 0
      %1907 = vmatpush1.bf16.msra.mxu0 %v1755
      %1908 = vmatprep.subr.bf16.mxu0 0
      %1909 = vmatpush1.bf16.msra.mxu0 %v1756
      %1910 = vmatprep.subr.bf16.mxu0 0
      %1911 = vmatpush1.bf16.msra.mxu0 %v1757
      %1912 = vmatprep.subr.bf16.mxu0 0
      %1913 = vmatpush1.bf16.msra.mxu0 %v1758
      %1914 = vmatprep.subr.bf16.mxu0 0
      %1915 = vmatpush1.bf16.msra.mxu0 %v1759
      %1916 = vmatprep.subr.bf16.mxu0 0
      %1917 = vmatpush1.bf16.msra.mxu0 %v1760
      %1918 = vmatprep.subr.bf16.mxu0 0
      %1919 = vmatpush1.bf16.msra.mxu0 %v1761
      %1920 = vmatprep.subr.bf16.mxu0 0
      %1921 = vmatpush1.bf16.msra.mxu0 %v1762
      %1922 = vmatprep.subr.bf16.mxu0 0
      %1923 = vmatpush1.bf16.msra.mxu0 %v1763
      %1924 = vmatprep.mubr.bf16.mxu0 %v1173
      %1925 = vmatmul.mubr.bf16.gmra.mrb[0].mxu0 %v1172
      %v1926 = vpop.f32.mrb[0].mxu0
      %v1927 = vadd.f32 %v1458, %v1926
      %v1928 = vpop.f32.mrb[0].mxu0
      %v1929 = vpop.f32.mrb[0].mxu0
      %v1930 = vadd.f32 %v1458, %v1929
      %v1931 = vpop.f32.mrb[0].mxu0
      %1932 = vmatprep.mubr.bf16.mxu0 %v1182
      %1933 = vmatmul.mubr.bf16.gmra.mrb[0].mxu0 %v1181
      %v1934 = vpop.f32.mrb[0].mxu0
      %v1935 = vadd.f32 %v1458, %v1934
      %v1936 = vpop.f32.mrb[0].mxu0
      %v1937 = vpop.f32.mrb[0].mxu0
      %v1938 = vadd.f32 %v1458, %v1937
      %v1939 = vpop.f32.mrb[0].mxu0
      %1940 = vmatprep.mubr.bf16.mxu0 %v1189
      %1941 = vmatmul.mubr.bf16.gmra.mrb[0].mxu0 %v1188
      %v1942 = vpop.f32.mrb[0].mxu0
      %v1943 = vadd.f32 %v1458, %v1942
      %v1944 = vpop.f32.mrb[0].mxu0
      %v1945 = vpop.f32.mrb[0].mxu0
      %v1946 = vadd.f32 %v1458, %v1945
      %v1947 = vpop.f32.mrb[0].mxu0
      %1948 = vmatprep.mubr.bf16.mxu0 %v1196
      %1949 = vmatmul.mubr.bf16.gmra.mrb[0].mxu0 %v1195
      %v1950 = vpop.f32.mrb[0].mxu0
      %v1951 = vadd.f32 %v1458, %v1950
      %v1952 = vpop.f32.mrb[0].mxu0
      %v1953 = vpop.f32.mrb[0].mxu0
      %v1954 = vadd.f32 %v1458, %v1953
      %v1955 = vpop.f32.mrb[0].mxu0
      %1956 = vmatprep.mubr.bf16.mxu0 %v1203
      %1957 = vmatmul.mubr.bf16.gmra.mrb[0].mxu0 %v1202
      %v1958 = vpop.f32.mrb[0].mxu0
      %v1959 = vadd.f32 %v1458, %v1958
      %v1960 = vpop.f32.mrb[0].mxu0
      %v1961 = vpop.f32.mrb[0].mxu0
      %v1962 = vadd.f32 %v1458, %v1961
      %v1963 = vpop.f32.mrb[0].mxu0
      %1964 = vmatprep.mubr.bf16.mxu0 %v1210
      %1965 = vmatmul.mubr.bf16.gmra.mrb[0].mxu0 %v1209
      %v1966 = vpop.f32.mrb[0].mxu0
      %v1967 = vadd.f32 %v1458, %v1966
      %v1968 = vpop.f32.mrb[0].mxu0
      %v1969 = vpop.f32.mrb[0].mxu0
      %v1970 = vadd.f32 %v1458, %v1969
      %v1971 = vpop.f32.mrb[0].mxu0
      %1972 = vmatprep.mubr.bf16.mxu0 %v1217
      %1973 = vmatmul.mubr.bf16.gmra.mrb[0].mxu0 %v1216
      %v1974 = vpop.f32.mrb[0].mxu0
      %v1975 = vadd.f32 %v1458, %v1974
      %v1976 = vpop.f32.mrb[0].mxu0
      %v1977 = vpop.f32.mrb[0].mxu0
      %v1978 = vadd.f32 %v1458, %v1977
      %v1979 = vpop.f32.mrb[0].mxu0
      %1980 = vmatprep.mubr.bf16.mxu0 %v1224
      %1981 = vmatmul.mubr.bf16.gmra.mrb[0].mxu0 %v1223
      %v1982 = vpop.f32.mrb[0].mxu0
      %v1983 = vadd.f32 %v1458, %v1982
      %v1984 = vpop.f32.mrb[0].mxu0
      %v1985 = vpop.f32.mrb[0].mxu0
      %v1986 = vadd.f32 %v1458, %v1985
      %v1987 = vpop.f32.mrb[0].mxu0
      %1988 = vmatprep.mubr.bf16.mxu0 %v1231
      %1989 = vmatmul.mubr.bf16.gmra.mrb[0].mxu0 %v1230
      %v1990 = vpop.f32.mrb[0].mxu0
      %v1991 = vadd.f32 %v1458, %v1990
      %v1992 = vpop.f32.mrb[0].mxu0
      %v1993 = vpop.f32.mrb[0].mxu0
      %v1994 = vadd.f32 %v1458, %v1993
      %v1995 = vpop.f32.mrb[0].mxu0
      %1996 = vmatprep.mubr.bf16.mxu0 %v1238
      %1997 = vmatmul.mubr.bf16.gmra.mrb[0].mxu0 %v1237
      %v1998 = vpop.f32.mrb[0].mxu0
      %v1999 = vadd.f32 %v1458, %v1998
      %v2000 = vpop.f32.mrb[0].mxu0
      %v2001 = vpop.f32.mrb[0].mxu0
      %v2002 = vadd.f32 %v1458, %v2001
      %v2003 = vpop.f32.mrb[0].mxu0
      %2004 = vmatprep.mubr.bf16.mxu0 %v1245
      %2005 = vmatmul.mubr.bf16.gmra.mrb[0].mxu0 %v1244
      %v2006 = vpop.f32.mrb[0].mxu0
      %v2007 = vadd.f32 %v1458, %v2006
      %v2008 = vpop.f32.mrb[0].mxu0
      %v2009 = vpop.f32.mrb[0].mxu0
      %v2010 = vadd.f32 %v1458, %v2009
      %v2011 = vpop.f32.mrb[0].mxu0
      %2012 = vmatprep.mubr.bf16.mxu0 %v1252
      %2013 = vmatmul.mubr.bf16.gmra.mrb[0].mxu0 %v1251
      %v2014 = vpop.f32.mrb[0].mxu0
      %v2015 = vadd.f32 %v1458, %v2014
      %v2016 = vpop.f32.mrb[0].mxu0
      %v2017 = vpop.f32.mrb[0].mxu0
      %v2018 = vadd.f32 %v1458, %v2017
      %v2019 = vpop.f32.mrb[0].mxu0
      %2020 = vmatprep.mubr.bf16.mxu0 %v1259
      %2021 = vmatmul.mubr.bf16.gmra.mrb[0].mxu0 %v1258
      %v2022 = vpop.f32.mrb[0].mxu0
      %v2023 = vadd.f32 %v1458, %v2022
      %v2024 = vpop.f32.mrb[0].mxu0
      %v2025 = vpop.f32.mrb[0].mxu0
      %v2026 = vadd.f32 %v1458, %v2025
      %v2027 = vpop.f32.mrb[0].mxu0
      %2028 = vmatprep.mubr.bf16.mxu0 %v1266
      %2029 = vmatmul.mubr.bf16.gmra.mrb[0].mxu0 %v1265
      %v2030 = vpop.f32.mrb[0].mxu0
      %v2031 = vadd.f32 %v1458, %v2030
      %v2032 = vpop.f32.mrb[0].mxu0
      %v2033 = vpop.f32.mrb[0].mxu0
      %v2034 = vadd.f32 %v1458, %v2033
      %v2035 = vpop.f32.mrb[0].mxu0
      %2036 = vmatprep.mubr.bf16.mxu0 %v1273
      %2037 = vmatmul.mubr.bf16.gmra.mrb[0].mxu0 %v1272
      %v2038 = vpop.f32.mrb[0].mxu0
      %v2039 = vadd.f32 %v1458, %v2038
      %v2040 = vpop.f32.mrb[0].mxu0
      %v2041 = vpop.f32.mrb[0].mxu0
      %v2042 = vadd.f32 %v1458, %v2041
      %v2043 = vpop.f32.mrb[0].mxu0
      %2044 = vmatprep.mubr.bf16.mxu0 %v1280
      %2045 = vmatmul.mubr.bf16.gmra.mrb[0].mxu0 %v1279
      %v2046 = vpop.f32.mrb[0].mxu0
      %v2047 = vadd.f32 %v1458, %v2046
      %v2048 = vpop.f32.mrb[0].mxu0
      %v2049 = vpop.f32.mrb[0].mxu0
      %v2050 = vadd.f32 %v1458, %v2049
      %v2051 = vpop.f32.mrb[0].mxu0
      %2052 = vmatprep.mubr.bf16.mxu0 %v1287
      %2053 = vmatmul.mubr.bf16.gmra.mrb[0].mxu0 %v1286
      %v2054 = vpop.f32.mrb[0].mxu0
      %v2055 = vadd.f32 %v1458, %v2054
      %v2056 = vpop.f32.mrb[0].mxu0
      %v2057 = vpop.f32.mrb[0].mxu0
      %v2058 = vadd.f32 %v1458, %v2057
      %v2059 = vpop.f32.mrb[0].mxu0
      %2060 = vmatprep.mubr.bf16.mxu0 %v1294
      %2061 = vmatmul.mubr.bf16.gmra.mrb[0].mxu0 %v1293
      %v2062 = vpop.f32.mrb[0].mxu0
      %v2063 = vadd.f32 %v1458, %v2062
      %v2064 = vpop.f32.mrb[0].mxu0
      %v2065 = vpop.f32.mrb[0].mxu0
      %v2066 = vadd.f32 %v1458, %v2065
      %v2067 = vpop.f32.mrb[0].mxu0
      %2068 = vmatprep.mubr.bf16.mxu0 %v1301
      %2069 = vmatmul.mubr.bf16.gmra.mrb[0].mxu0 %v1300
      %v2070 = vpop.f32.mrb[0].mxu0
      %v2071 = vadd.f32 %v1458, %v2070
      %v2072 = vpop.f32.mrb[0].mxu0
      %v2073 = vpop.f32.mrb[0].mxu0
      %v2074 = vadd.f32 %v1458, %v2073
      %v2075 = vpop.f32.mrb[0].mxu0
      %2076 = vdwg.mxu0
      %2077 = vmatprep.subr.bf16.mxu0 0
      %2078 = vmatpush1.bf16.msra.mxu0 %v1764
      %2079 = vmatprep.subr.bf16.mxu0 0
      %2080 = vmatpush1.bf16.msra.mxu0 %v1765
      %2081 = vmatprep.subr.bf16.mxu0 0
      %2082 = vmatpush1.bf16.msra.mxu0 %v1766
      %2083 = vmatprep.subr.bf16.mxu0 0
      %2084 = vmatpush1.bf16.msra.mxu0 %v1767
      %2085 = vmatprep.subr.bf16.mxu0 0
      %2086 = vmatpush1.bf16.msra.mxu0 %v1768
      %2087 = vmatprep.subr.bf16.mxu0 0
      %2088 = vmatpush1.bf16.msra.mxu0 %v1769
      %2089 = vmatprep.subr.bf16.mxu0 0
      %2090 = vmatpush1.bf16.msra.mxu0 %v1770
      %2091 = vmatprep.subr.bf16.mxu0 0
      %2092 = vmatpush1.bf16.msra.mxu0 %v1771
      %2093 = vmatprep.subr.bf16.mxu0 0
      %2094 = vmatpush1.bf16.msra.mxu0 %v1772
      %2095 = vmatprep.subr.bf16.mxu0 0
      %2096 = vmatpush1.bf16.msra.mxu0 %v1773
      %2097 = vmatprep.subr.bf16.mxu0 0
      %2098 = vmatpush1.bf16.msra.mxu0 %v1774
      %2099 = vmatprep.subr.bf16.mxu0 0
      %2100 = vmatpush1.bf16.msra.mxu0 %v1775
      %2101 = vmatprep.subr.bf16.mxu0 0
      %2102 = vmatpush1.bf16.msra.mxu0 %v1776
      %2103 = vmatprep.subr.bf16.mxu0 0
      %2104 = vmatpush1.bf16.msra.mxu0 %v1777
      %2105 = vmatprep.subr.bf16.mxu0 0
      %2106 = vmatpush1.bf16.msra.mxu0 %v1778
      %2107 = vmatprep.subr.bf16.mxu0 0
      %2108 = vmatpush1.bf16.msra.mxu0 %v1779
      %2109 = vmatprep.mubr.bf16.mxu0 %v1175
      %2110 = vmatmul.mubr.bf16.gmra.mrb[0].mxu0 %v1174
      %v2111 = vpop.f32.mrb[0].mxu0
      %v2112 = vadd.f32 %v1927, %v2111
      %v2113 = vpop.f32.mrb[0].mxu0
      %v2114 = vpop.f32.mrb[0].mxu0
      %v2115 = vadd.f32 %v1930, %v2114
      %v2116 = vpop.f32.mrb[0].mxu0
      %2117 = vmatprep.mubr.bf16.mxu0 %v1183
      %2118 = vmatmul.mubr.bf16.gmra.mrb[0].mxu0 %v1175
      %v2119 = vpop.f32.mrb[0].mxu0
      %v2120 = vadd.f32 %v1935, %v2119
      %v2121 = vpop.f32.mrb[0].mxu0
      %v2122 = vpop.f32.mrb[0].mxu0
      %v2123 = vadd.f32 %v1938, %v2122
      %v2124 = vpop.f32.mrb[0].mxu0
      %2125 = vmatprep.mubr.bf16.mxu0 %v1190
      %2126 = vmatmul.mubr.bf16.gmra.mrb[0].mxu0 %v1183
      %v2127 = vpop.f32.mrb[0].mxu0
      %v2128 = vadd.f32 %v1943, %v2127
      %v2129 = vpop.f32.mrb[0].mxu0
      %v2130 = vpop.f32.mrb[0].mxu0
      %v2131 = vadd.f32 %v1946, %v2130
      %v2132 = vpop.f32.mrb[0].mxu0
      %2133 = vmatprep.mubr.bf16.mxu0 %v1197
      %2134 = vmatmul.mubr.bf16.gmra.mrb[0].mxu0 %v1190
      %v2135 = vpop.f32.mrb[0].mxu0
      %v2136 = vadd.f32 %v1951, %v2135
      %v2137 = vpop.f32.mrb[0].mxu0
      %v2138 = vpop.f32.mrb[0].mxu0
      %v2139 = vadd.f32 %v1954, %v2138
      %v2140 = vpop.f32.mrb[0].mxu0
      %2141 = vmatprep.mubr.bf16.mxu0 %v1204
      %2142 = vmatmul.mubr.bf16.gmra.mrb[0].mxu0 %v1197
      %v2143 = vpop.f32.mrb[0].mxu0
      %v2144 = vadd.f32 %v1959, %v2143
      %v2145 = vpop.f32.mrb[0].mxu0
      %v2146 = vpop.f32.mrb[0].mxu0
      %v2147 = vadd.f32 %v1962, %v2146
      %v2148 = vpop.f32.mrb[0].mxu0
      %2149 = vmatprep.mubr.bf16.mxu0 %v1211
      %2150 = vmatmul.mubr.bf16.gmra.mrb[0].mxu0 %v1204
      %v2151 = vpop.f32.mrb[0].mxu0
      %v2152 = vadd.f32 %v1967, %v2151
      %v2153 = vpop.f32.mrb[0].mxu0
      %v2154 = vpop.f32.mrb[0].mxu0
      %v2155 = vadd.f32 %v1970, %v2154
      %v2156 = vpop.f32.mrb[0].mxu0
      %2157 = vmatprep.mubr.bf16.mxu0 %v1218
      %2158 = vmatmul.mubr.bf16.gmra.mrb[0].mxu0 %v1211
      %v2159 = vpop.f32.mrb[0].mxu0
      %v2160 = vadd.f32 %v1975, %v2159
      %v2161 = vpop.f32.mrb[0].mxu0
      %v2162 = vpop.f32.mrb[0].mxu0
      %v2163 = vadd.f32 %v1978, %v2162
      %v2164 = vpop.f32.mrb[0].mxu0
      %2165 = vmatprep.mubr.bf16.mxu0 %v1225
      %2166 = vmatmul.mubr.bf16.gmra.mrb[0].mxu0 %v1218
      %v2167 = vpop.f32.mrb[0].mxu0
      %v2168 = vadd.f32 %v1983, %v2167
      %v2169 = vpop.f32.mrb[0].mxu0
      %v2170 = vpop.f32.mrb[0].mxu0
      %v2171 = vadd.f32 %v1986, %v2170
      %v2172 = vpop.f32.mrb[0].mxu0
      %2173 = vmatprep.mubr.bf16.mxu0 %v1232
      %2174 = vmatmul.mubr.bf16.gmra.mrb[0].mxu0 %v1225
      %v2175 = vpop.f32.mrb[0].mxu0
      %v2176 = vadd.f32 %v1991, %v2175
      %v2177 = vpop.f32.mrb[0].mxu0
      %v2178 = vpop.f32.mrb[0].mxu0
      %v2179 = vadd.f32 %v1994, %v2178
      %v2180 = vpop.f32.mrb[0].mxu0
      %2181 = vmatprep.mubr.bf16.mxu0 %v1239
      %2182 = vmatmul.mubr.bf16.gmra.mrb[0].mxu0 %v1232
      %v2183 = vpop.f32.mrb[0].mxu0
      %v2184 = vadd.f32 %v1999, %v2183
      %v2185 = vpop.f32.mrb[0].mxu0
      %v2186 = vpop.f32.mrb[0].mxu0
      %v2187 = vadd.f32 %v2002, %v2186
      %v2188 = vpop.f32.mrb[0].mxu0
      %2189 = vmatprep.mubr.bf16.mxu0 %v1246
      %2190 = vmatmul.mubr.bf16.gmra.mrb[0].mxu0 %v1239
      %v2191 = vpop.f32.mrb[0].mxu0
      %v2192 = vadd.f32 %v2007, %v2191
      %v2193 = vpop.f32.mrb[0].mxu0
      %v2194 = vpop.f32.mrb[0].mxu0
      %v2195 = vadd.f32 %v2010, %v2194
      %v2196 = vpop.f32.mrb[0].mxu0
      %2197 = vmatprep.mubr.bf16.mxu0 %v1253
      %2198 = vmatmul.mubr.bf16.gmra.mrb[0].mxu0 %v1246
      %v2199 = vpop.f32.mrb[0].mxu0
      %v2200 = vadd.f32 %v2015, %v2199
      %v2201 = vpop.f32.mrb[0].mxu0
      %v2202 = vpop.f32.mrb[0].mxu0
      %v2203 = vadd.f32 %v2018, %v2202
      %v2204 = vpop.f32.mrb[0].mxu0
      %2205 = vmatprep.mubr.bf16.mxu0 %v1260
      %2206 = vmatmul.mubr.bf16.gmra.mrb[0].mxu0 %v1253
      %v2207 = vpop.f32.mrb[0].mxu0
      %v2208 = vadd.f32 %v2023, %v2207
      %v2209 = vpop.f32.mrb[0].mxu0
      %v2210 = vpop.f32.mrb[0].mxu0
      %v2211 = vadd.f32 %v2026, %v2210
      %v2212 = vpop.f32.mrb[0].mxu0
      %2213 = vmatprep.mubr.bf16.mxu0 %v1267
      %2214 = vmatmul.mubr.bf16.gmra.mrb[0].mxu0 %v1260
      %v2215 = vpop.f32.mrb[0].mxu0
      %v2216 = vadd.f32 %v2031, %v2215
      %v2217 = vpop.f32.mrb[0].mxu0
      %v2218 = vpop.f32.mrb[0].mxu0
      %v2219 = vadd.f32 %v2034, %v2218
      %v2220 = vpop.f32.mrb[0].mxu0
      %2221 = vmatprep.mubr.bf16.mxu0 %v1274
      %2222 = vmatmul.mubr.bf16.gmra.mrb[0].mxu0 %v1267
      %v2223 = vpop.f32.mrb[0].mxu0
      %v2224 = vadd.f32 %v2039, %v2223
      %v2225 = vpop.f32.mrb[0].mxu0
      %v2226 = vpop.f32.mrb[0].mxu0
      %v2227 = vadd.f32 %v2042, %v2226
      %v2228 = vpop.f32.mrb[0].mxu0
      %2229 = vmatprep.mubr.bf16.mxu0 %v1281
      %2230 = vmatmul.mubr.bf16.gmra.mrb[0].mxu0 %v1274
      %v2231 = vpop.f32.mrb[0].mxu0
      %v2232 = vadd.f32 %v2047, %v2231
      %v2233 = vpop.f32.mrb[0].mxu0
      %v2234 = vpop.f32.mrb[0].mxu0
      %v2235 = vadd.f32 %v2050, %v2234
      %v2236 = vpop.f32.mrb[0].mxu0
      %2237 = vmatprep.mubr.bf16.mxu0 %v1288
      %2238 = vmatmul.mubr.bf16.gmra.mrb[0].mxu0 %v1281
      %v2239 = vpop.f32.mrb[0].mxu0
      %v2240 = vadd.f32 %v2055, %v2239
      %v2241 = vpop.f32.mrb[0].mxu0
      %v2242 = vpop.f32.mrb[0].mxu0
      %v2243 = vadd.f32 %v2058, %v2242
      %v2244 = vpop.f32.mrb[0].mxu0
      %2245 = vmatprep.mubr.bf16.mxu0 %v1295
      %2246 = vmatmul.mubr.bf16.gmra.mrb[0].mxu0 %v1288
      %v2247 = vpop.f32.mrb[0].mxu0
      %v2248 = vadd.f32 %v2063, %v2247
      %v2249 = vpop.f32.mrb[0].mxu0
      %v2250 = vpop.f32.mrb[0].mxu0
      %v2251 = vadd.f32 %v2066, %v2250
      %v2252 = vpop.f32.mrb[0].mxu0
      %2253 = vmatprep.mubr.bf16.mxu0 %v1303
      %2254 = vmatmul.mubr.bf16.gmra.mrb[0].mxu0 %v1302
      %v2255 = vpop.f32.mrb[0].mxu0
      %v2256 = vadd.f32 %v2071, %v2255
      %v2257 = vpop.f32.mrb[0].mxu0
      %v2258 = vpop.f32.mrb[0].mxu0
      %v2259 = vadd.f32 %v2074, %v2258
      %v2260 = vpop.f32.mrb[0].mxu0
      %2261 = vdwg.mxu0
      %2262 = vmatprep.subr.bf16.mxu0 0
      %2263 = vmatpush1.bf16.msra.mxu0 %v1780
      %2264 = vmatprep.subr.bf16.mxu0 0
      %2265 = vmatpush1.bf16.msra.mxu0 %v1781
      %2266 = vmatprep.subr.bf16.mxu0 0
      %2267 = vmatpush1.bf16.msra.mxu0 %v1782
      %2268 = vmatprep.subr.bf16.mxu0 0
      %2269 = vmatpush1.bf16.msra.mxu0 %v1783
      %2270 = vmatprep.subr.bf16.mxu0 0
      %2271 = vmatpush1.bf16.msra.mxu0 %v1784
      %2272 = vmatprep.subr.bf16.mxu0 0
      %2273 = vmatpush1.bf16.msra.mxu0 %v1785
      %2274 = vmatprep.subr.bf16.mxu0 0
      %2275 = vmatpush1.bf16.msra.mxu0 %v1786
      %2276 = vmatprep.subr.bf16.mxu0 0
      %2277 = vmatpush1.bf16.msra.mxu0 %v1787
      %2278 = vmatprep.subr.bf16.mxu0 0
      %2279 = vmatpush1.bf16.msra.mxu0 %v1788
      %2280 = vmatprep.subr.bf16.mxu0 0
      %2281 = vmatpush1.bf16.msra.mxu0 %v1789
      %2282 = vmatprep.subr.bf16.mxu0 0
      %2283 = vmatpush1.bf16.msra.mxu0 %v1790
      %2284 = vmatprep.subr.bf16.mxu0 0
      %2285 = vmatpush1.bf16.msra.mxu0 %v1791
      %2286 = vmatprep.subr.bf16.mxu0 0
      %2287 = vmatpush1.bf16.msra.mxu0 %v1792
      %2288 = vmatprep.subr.bf16.mxu0 0
      %2289 = vmatpush1.bf16.msra.mxu0 %v1793
      %2290 = vmatprep.subr.bf16.mxu0 0
      %2291 = vmatpush1.bf16.msra.mxu0 %v1794
      %2292 = vmatprep.subr.bf16.mxu0 0
      %2293 = vmatpush1.bf16.msra.mxu0 %v1795
      %2294 = vmatprep.mubr.bf16.mxu0 %v1177
      %2295 = vmatmul.mubr.bf16.gmra.mrb[0].mxu0 %v1176
      %v2296 = vpop.f32.mrb[0].mxu0
      %v2297 = vadd.f32 %v2112, %v2296
      %v2298 = vpop.f32.mrb[0].mxu0
      %v2299 = vpop.f32.mrb[0].mxu0
      %v2300 = vadd.f32 %v2115, %v2299
      %v2301 = vpop.f32.mrb[0].mxu0
      %2302 = vmatprep.mubr.bf16.mxu0 %v1178
      %2303 = vmatmul.mubr.bf16.gmra.mrb[0].mxu0 %v1184
      %v2304 = vpop.f32.mrb[0].mxu0
      %v2305 = vadd.f32 %v2120, %v2304
      %v2306 = vpop.f32.mrb[0].mxu0
      %v2307 = vpop.f32.mrb[0].mxu0
      %v2308 = vadd.f32 %v2123, %v2307
      %v2309 = vpop.f32.mrb[0].mxu0
      %2310 = vmatprep.mubr.bf16.mxu0 %v1185
      %2311 = vmatmul.mubr.bf16.gmra.mrb[0].mxu0 %v1191
      %v2312 = vpop.f32.mrb[0].mxu0
      %v2313 = vadd.f32 %v2128, %v2312
      %v2314 = vpop.f32.mrb[0].mxu0
      %v2315 = vpop.f32.mrb[0].mxu0
      %v2316 = vadd.f32 %v2131, %v2315
      %v2317 = vpop.f32.mrb[0].mxu0
      %2318 = vmatprep.mubr.bf16.mxu0 %v1192
      %2319 = vmatmul.mubr.bf16.gmra.mrb[0].mxu0 %v1198
      %v2320 = vpop.f32.mrb[0].mxu0
      %v2321 = vadd.f32 %v2136, %v2320
      %v2322 = vpop.f32.mrb[0].mxu0
      %v2323 = vpop.f32.mrb[0].mxu0
      %v2324 = vadd.f32 %v2139, %v2323
      %v2325 = vpop.f32.mrb[0].mxu0
      %2326 = vmatprep.mubr.bf16.mxu0 %v1199
      %2327 = vmatmul.mubr.bf16.gmra.mrb[0].mxu0 %v1205
      %v2328 = vpop.f32.mrb[0].mxu0
      %v2329 = vadd.f32 %v2144, %v2328
      %v2330 = vpop.f32.mrb[0].mxu0
      %v2331 = vpop.f32.mrb[0].mxu0
      %v2332 = vadd.f32 %v2147, %v2331
      %v2333 = vpop.f32.mrb[0].mxu0
      %2334 = vmatprep.mubr.bf16.mxu0 %v1206
      %2335 = vmatmul.mubr.bf16.gmra.mrb[0].mxu0 %v1212
      %v2336 = vpop.f32.mrb[0].mxu0
      %v2337 = vadd.f32 %v2152, %v2336
      %v2338 = vpop.f32.mrb[0].mxu0
      %v2339 = vpop.f32.mrb[0].mxu0
      %v2340 = vadd.f32 %v2155, %v2339
      %v2341 = vpop.f32.mrb[0].mxu0
      %2342 = vmatprep.mubr.bf16.mxu0 %v1213
      %2343 = vmatmul.mubr.bf16.gmra.mrb[0].mxu0 %v1219
      %v2344 = vpop.f32.mrb[0].mxu0
      %v2345 = vadd.f32 %v2160, %v2344
      %v2346 = vpop.f32.mrb[0].mxu0
      %v2347 = vpop.f32.mrb[0].mxu0
      %v2348 = vadd.f32 %v2163, %v2347
      %v2349 = vpop.f32.mrb[0].mxu0
      %2350 = vmatprep.mubr.bf16.mxu0 %v1220
      %2351 = vmatmul.mubr.bf16.gmra.mrb[0].mxu0 %v1226
      %v2352 = vpop.f32.mrb[0].mxu0
      %v2353 = vadd.f32 %v2168, %v2352
      %v2354 = vpop.f32.mrb[0].mxu0
      %v2355 = vpop.f32.mrb[0].mxu0
      %v2356 = vadd.f32 %v2171, %v2355
      %v2357 = vpop.f32.mrb[0].mxu0
      %2358 = vmatprep.mubr.bf16.mxu0 %v1227
      %2359 = vmatmul.mubr.bf16.gmra.mrb[0].mxu0 %v1233
      %v2360 = vpop.f32.mrb[0].mxu0
      %v2361 = vadd.f32 %v2176, %v2360
      %v2362 = vpop.f32.mrb[0].mxu0
      %v2363 = vpop.f32.mrb[0].mxu0
      %v2364 = vadd.f32 %v2179, %v2363
      %v2365 = vpop.f32.mrb[0].mxu0
      %2366 = vmatprep.mubr.bf16.mxu0 %v1234
      %2367 = vmatmul.mubr.bf16.gmra.mrb[0].mxu0 %v1240
      %v2368 = vpop.f32.mrb[0].mxu0
      %v2369 = vadd.f32 %v2184, %v2368
      %v2370 = vpop.f32.mrb[0].mxu0
      %v2371 = vpop.f32.mrb[0].mxu0
      %v2372 = vadd.f32 %v2187, %v2371
      %v2373 = vpop.f32.mrb[0].mxu0
      %2374 = vmatprep.mubr.bf16.mxu0 %v1241
      %2375 = vmatmul.mubr.bf16.gmra.mrb[0].mxu0 %v1247
      %v2376 = vpop.f32.mrb[0].mxu0
      %v2377 = vadd.f32 %v2192, %v2376
      %v2378 = vpop.f32.mrb[0].mxu0
      %v2379 = vpop.f32.mrb[0].mxu0
      %v2380 = vadd.f32 %v2195, %v2379
      %v2381 = vpop.f32.mrb[0].mxu0
      %2382 = vmatprep.mubr.bf16.mxu0 %v1248
      %2383 = vmatmul.mubr.bf16.gmra.mrb[0].mxu0 %v1254
      %v2384 = vpop.f32.mrb[0].mxu0
      %v2385 = vadd.f32 %v2200, %v2384
      %v2386 = vpop.f32.mrb[0].mxu0
      %v2387 = vpop.f32.mrb[0].mxu0
      %v2388 = vadd.f32 %v2203, %v2387
      %v2389 = vpop.f32.mrb[0].mxu0
      %2390 = vmatprep.mubr.bf16.mxu0 %v1255
      %2391 = vmatmul.mubr.bf16.gmra.mrb[0].mxu0 %v1261
      %v2392 = vpop.f32.mrb[0].mxu0
      %v2393 = vadd.f32 %v2208, %v2392
      %v2394 = vpop.f32.mrb[0].mxu0
      %v2395 = vpop.f32.mrb[0].mxu0
      %v2396 = vadd.f32 %v2211, %v2395
      %v2397 = vpop.f32.mrb[0].mxu0
      %2398 = vmatprep.mubr.bf16.mxu0 %v1262
      %2399 = vmatmul.mubr.bf16.gmra.mrb[0].mxu0 %v1268
      %v2400 = vpop.f32.mrb[0].mxu0
      %v2401 = vadd.f32 %v2216, %v2400
      %v2402 = vpop.f32.mrb[0].mxu0
      %v2403 = vpop.f32.mrb[0].mxu0
      %v2404 = vadd.f32 %v2219, %v2403
      %v2405 = vpop.f32.mrb[0].mxu0
      %2406 = vmatprep.mubr.bf16.mxu0 %v1269
      %2407 = vmatmul.mubr.bf16.gmra.mrb[0].mxu0 %v1275
      %v2408 = vpop.f32.mrb[0].mxu0
      %v2409 = vadd.f32 %v2224, %v2408
      %v2410 = vpop.f32.mrb[0].mxu0
      %v2411 = vpop.f32.mrb[0].mxu0
      %v2412 = vadd.f32 %v2227, %v2411
      %v2413 = vpop.f32.mrb[0].mxu0
      %2414 = vmatprep.mubr.bf16.mxu0 %v1276
      %2415 = vmatmul.mubr.bf16.gmra.mrb[0].mxu0 %v1282
      %v2416 = vpop.f32.mrb[0].mxu0
      %v2417 = vadd.f32 %v2232, %v2416
      %v2418 = vpop.f32.mrb[0].mxu0
      %v2419 = vpop.f32.mrb[0].mxu0
      %v2420 = vadd.f32 %v2235, %v2419
      %v2421 = vpop.f32.mrb[0].mxu0
      %2422 = vmatprep.mubr.bf16.mxu0 %v1283
      %2423 = vmatmul.mubr.bf16.gmra.mrb[0].mxu0 %v1289
      %v2424 = vpop.f32.mrb[0].mxu0
      %v2425 = vadd.f32 %v2240, %v2424
      %v2426 = vpop.f32.mrb[0].mxu0
      %v2427 = vpop.f32.mrb[0].mxu0
      %v2428 = vadd.f32 %v2243, %v2427
      %v2429 = vpop.f32.mrb[0].mxu0
      %2430 = vmatprep.mubr.bf16.mxu0 %v1290
      %2431 = vmatmul.mubr.bf16.gmra.mrb[0].mxu0 %v1296
      %v2432 = vpop.f32.mrb[0].mxu0
      %v2433 = vadd.f32 %v2248, %v2432
      %v2434 = vpop.f32.mrb[0].mxu0
      %v2435 = vpop.f32.mrb[0].mxu0
      %v2436 = vadd.f32 %v2251, %v2435
      %v2437 = vpop.f32.mrb[0].mxu0
      %2438 = vmatprep.mubr.bf16.mxu0 %v1305
      %2439 = vmatmul.mubr.bf16.gmra.mrb[0].mxu0 %v1304
      %v2440 = vpop.f32.mrb[0].mxu0
      %v2441 = vadd.f32 %v2256, %v2440
      %v2442 = vpop.f32.mrb[0].mxu0
      %v2443 = vpop.f32.mrb[0].mxu0
      %v2444 = vadd.f32 %v2259, %v2443
      %v2445 = vpop.f32.mrb[0].mxu0
      %2446 = vdwg.mxu0
      %2447 = vmatprep.subr.bf16.mxu0 0
      %2448 = vmatpush1.bf16.msra.mxu0 %v1796
      %2449 = vmatprep.subr.bf16.mxu0 0
      %2450 = vmatpush1.bf16.msra.mxu0 %v1797
      %2451 = vmatprep.subr.bf16.mxu0 0
      %2452 = vmatpush1.bf16.msra.mxu0 %v1798
      %2453 = vmatprep.subr.bf16.mxu0 0
      %2454 = vmatpush1.bf16.msra.mxu0 %v1799
      %2455 = vmatprep.subr.bf16.mxu0 0
      %2456 = vmatpush1.bf16.msra.mxu0 %v1800
      %2457 = vmatprep.subr.bf16.mxu0 0
      %2458 = vmatpush1.bf16.msra.mxu0 %v1801
      %2459 = vmatprep.subr.bf16.mxu0 0
      %2460 = vmatpush1.bf16.msra.mxu0 %v1802
      %2461 = vmatprep.subr.bf16.mxu0 0
      %2462 = vmatpush1.bf16.msra.mxu0 %v1803
      %2463 = vmatprep.subr.bf16.mxu0 0
      %2464 = vmatpush1.bf16.msra.mxu0 %v1804
      %2465 = vmatprep.subr.bf16.mxu0 0
      %2466 = vmatpush1.bf16.msra.mxu0 %v1805
      %2467 = vmatprep.subr.bf16.mxu0 0
      %2468 = vmatpush1.bf16.msra.mxu0 %v1806
      %2469 = vmatprep.subr.bf16.mxu0 0
      %2470 = vmatpush1.bf16.msra.mxu0 %v1807
      %2471 = vmatprep.subr.bf16.mxu0 0
      %2472 = vmatpush1.bf16.msra.mxu0 %v1808
      %2473 = vmatprep.subr.bf16.mxu0 0
      %2474 = vmatpush1.bf16.msra.mxu0 %v1809
      %2475 = vmatprep.subr.bf16.mxu0 0
      %2476 = vmatpush1.bf16.msra.mxu0 %v1810
      %2477 = vmatprep.subr.bf16.mxu0 0
      %2478 = vmatpush1.bf16.msra.mxu0 %v1811
      %2479 = vmatprep.mubr.bf16.mxu0 %v1179
      %2480 = vmatmul.mubr.bf16.gmra.mrb[0].mxu0 %v1178
      %v2481 = vpop.f32.mrb[0].mxu0
      %v2482 = vadd.f32 %v2297, %v2481
      %v2483 = vpop.f32.mrb[0].mxu0
      %v2484 = vpop.f32.mrb[0].mxu0
      %v2485 = vadd.f32 %v2300, %v2484
      %v2486 = vpop.f32.mrb[0].mxu0
      %2487 = vmatprep.mubr.bf16.mxu0 %v1186
      %2488 = vmatmul.mubr.bf16.gmra.mrb[0].mxu0 %v1185
      %v2489 = vpop.f32.mrb[0].mxu0
      %v2490 = vadd.f32 %v2305, %v2489
      %v2491 = vpop.f32.mrb[0].mxu0
      %v2492 = vpop.f32.mrb[0].mxu0
      %v2493 = vadd.f32 %v2308, %v2492
      %v2494 = vpop.f32.mrb[0].mxu0
      %2495 = vmatprep.mubr.bf16.mxu0 %v1193
      %2496 = vmatmul.mubr.bf16.gmra.mrb[0].mxu0 %v1192
      %v2497 = vpop.f32.mrb[0].mxu0
      %v2498 = vadd.f32 %v2313, %v2497
      %v2499 = vpop.f32.mrb[0].mxu0
      %v2500 = vpop.f32.mrb[0].mxu0
      %v2501 = vadd.f32 %v2316, %v2500
      %v2502 = vpop.f32.mrb[0].mxu0
      %2503 = vmatprep.mubr.bf16.mxu0 %v1200
      %2504 = vmatmul.mubr.bf16.gmra.mrb[0].mxu0 %v1199
      %v2505 = vpop.f32.mrb[0].mxu0
      %v2506 = vadd.f32 %v2321, %v2505
      %v2507 = vpop.f32.mrb[0].mxu0
      %v2508 = vpop.f32.mrb[0].mxu0
      %v2509 = vadd.f32 %v2324, %v2508
      %v2510 = vpop.f32.mrb[0].mxu0
      %2511 = vmatprep.mubr.bf16.mxu0 %v1207
      %2512 = vmatmul.mubr.bf16.gmra.mrb[0].mxu0 %v1206
      %v2513 = vpop.f32.mrb[0].mxu0
      %v2514 = vadd.f32 %v2329, %v2513
      %v2515 = vpop.f32.mrb[0].mxu0
      %v2516 = vpop.f32.mrb[0].mxu0
      %v2517 = vadd.f32 %v2332, %v2516
      %v2518 = vpop.f32.mrb[0].mxu0
      %2519 = vmatprep.mubr.bf16.mxu0 %v1214
      %2520 = vmatmul.mubr.bf16.gmra.mrb[0].mxu0 %v1213
      %v2521 = vpop.f32.mrb[0].mxu0
      %v2522 = vadd.f32 %v2337, %v2521
      %v2523 = vpop.f32.mrb[0].mxu0
      %v2524 = vpop.f32.mrb[0].mxu0
      %v2525 = vadd.f32 %v2340, %v2524
      %v2526 = vpop.f32.mrb[0].mxu0
      %2527 = vmatprep.mubr.bf16.mxu0 %v1221
      %2528 = vmatmul.mubr.bf16.gmra.mrb[0].mxu0 %v1220
      %v2529 = vpop.f32.mrb[0].mxu0
      %v2530 = vadd.f32 %v2345, %v2529
      %v2531 = vpop.f32.mrb[0].mxu0
      %v2532 = vpop.f32.mrb[0].mxu0
      %v2533 = vadd.f32 %v2348, %v2532
      %v2534 = vpop.f32.mrb[0].mxu0
      %2535 = vmatprep.mubr.bf16.mxu0 %v1228
      %2536 = vmatmul.mubr.bf16.gmra.mrb[0].mxu0 %v1227
      %v2537 = vpop.f32.mrb[0].mxu0
      %v2538 = vadd.f32 %v2353, %v2537
      %v2539 = vpop.f32.mrb[0].mxu0
      %v2540 = vpop.f32.mrb[0].mxu0
      %v2541 = vadd.f32 %v2356, %v2540
      %v2542 = vpop.f32.mrb[0].mxu0
      %2543 = vmatprep.mubr.bf16.mxu0 %v1235
      %2544 = vmatmul.mubr.bf16.gmra.mrb[0].mxu0 %v1234
      %v2545 = vpop.f32.mrb[0].mxu0
      %v2546 = vadd.f32 %v2361, %v2545
      %v2547 = vpop.f32.mrb[0].mxu0
      %v2548 = vpop.f32.mrb[0].mxu0
      %v2549 = vadd.f32 %v2364, %v2548
      %v2550 = vpop.f32.mrb[0].mxu0
      %2551 = vmatprep.mubr.bf16.mxu0 %v1242
      %2552 = vmatmul.mubr.bf16.gmra.mrb[0].mxu0 %v1241
      %v2553 = vpop.f32.mrb[0].mxu0
      %v2554 = vadd.f32 %v2369, %v2553
      %v2555 = vpop.f32.mrb[0].mxu0
      %v2556 = vpop.f32.mrb[0].mxu0
      %v2557 = vadd.f32 %v2372, %v2556
      %v2558 = vpop.f32.mrb[0].mxu0
      %2559 = vmatprep.mubr.bf16.mxu0 %v1249
      %2560 = vmatmul.mubr.bf16.gmra.mrb[0].mxu0 %v1248
      %v2561 = vpop.f32.mrb[0].mxu0
      %v2562 = vadd.f32 %v2377, %v2561
      %v2563 = vpop.f32.mrb[0].mxu0
      %v2564 = vpop.f32.mrb[0].mxu0
      %v2565 = vadd.f32 %v2380, %v2564
      %v2566 = vpop.f32.mrb[0].mxu0
      %2567 = vmatprep.mubr.bf16.mxu0 %v1256
      %2568 = vmatmul.mubr.bf16.gmra.mrb[0].mxu0 %v1255
      %v2569 = vpop.f32.mrb[0].mxu0
      %v2570 = vadd.f32 %v2385, %v2569
      %v2571 = vpop.f32.mrb[0].mxu0
      %v2572 = vpop.f32.mrb[0].mxu0
      %v2573 = vadd.f32 %v2388, %v2572
      %v2574 = vpop.f32.mrb[0].mxu0
      %2575 = vmatprep.mubr.bf16.mxu0 %v1263
      %2576 = vmatmul.mubr.bf16.gmra.mrb[0].mxu0 %v1262
      %v2577 = vpop.f32.mrb[0].mxu0
      %v2578 = vadd.f32 %v2393, %v2577
      %v2579 = vpop.f32.mrb[0].mxu0
      %v2580 = vpop.f32.mrb[0].mxu0
      %v2581 = vadd.f32 %v2396, %v2580
      %v2582 = vpop.f32.mrb[0].mxu0
      %2583 = vmatprep.mubr.bf16.mxu0 %v1270
      %2584 = vmatmul.mubr.bf16.gmra.mrb[0].mxu0 %v1269
      %v2585 = vpop.f32.mrb[0].mxu0
      %v2586 = vadd.f32 %v2401, %v2585
      %v2587 = vpop.f32.mrb[0].mxu0
      %v2588 = vpop.f32.mrb[0].mxu0
      %v2589 = vadd.f32 %v2404, %v2588
      %v2590 = vpop.f32.mrb[0].mxu0
      %2591 = vmatprep.mubr.bf16.mxu0 %v1277
      %2592 = vmatmul.mubr.bf16.gmra.mrb[0].mxu0 %v1276
      %v2593 = vpop.f32.mrb[0].mxu0
      %v2594 = vadd.f32 %v2409, %v2593
      %v2595 = vpop.f32.mrb[0].mxu0
      %v2596 = vpop.f32.mrb[0].mxu0
      %v2597 = vadd.f32 %v2412, %v2596
      %v2598 = vpop.f32.mrb[0].mxu0
      %2599 = vmatprep.mubr.bf16.mxu0 %v1284
      %2600 = vmatmul.mubr.bf16.gmra.mrb[0].mxu0 %v1283
      %v2601 = vpop.f32.mrb[0].mxu0
      %v2602 = vadd.f32 %v2417, %v2601
      %v2603 = vpop.f32.mrb[0].mxu0
      %v2604 = vpop.f32.mrb[0].mxu0
      %v2605 = vadd.f32 %v2420, %v2604
      %v2606 = vpop.f32.mrb[0].mxu0
      %2607 = vmatprep.mubr.bf16.mxu0 %v1291
      %2608 = vmatmul.mubr.bf16.gmra.mrb[0].mxu0 %v1290
      %v2609 = vpop.f32.mrb[0].mxu0
      %v2610 = vadd.f32 %v2425, %v2609
      %v2611 = vpop.f32.mrb[0].mxu0
      %v2612 = vpop.f32.mrb[0].mxu0
      %v2613 = vadd.f32 %v2428, %v2612
      %v2614 = vpop.f32.mrb[0].mxu0
      %2615 = vmatprep.mubr.bf16.mxu0 %v1298
      %2616 = vmatmul.mubr.bf16.gmra.mrb[0].mxu0 %v1297
      %v2617 = vpop.f32.mrb[0].mxu0
      %v2618 = vadd.f32 %v2433, %v2617
      %v2619 = vpop.f32.mrb[0].mxu0
      %v2620 = vpop.f32.mrb[0].mxu0
      %v2621 = vadd.f32 %v2436, %v2620
      %v2622 = vpop.f32.mrb[0].mxu0
      %2623 = vmatprep.mubr.bf16.mxu0 %v1307
      %2624 = vmatmul.mubr.bf16.gmra.mrb[0].mxu0 %v1306
      %v2625 = vpop.f32.mrb[0].mxu0
      %v2626 = vadd.f32 %v2441, %v2625
      %v2627 = vpop.f32.mrb[0].mxu0
      %v2628 = vpop.f32.mrb[0].mxu0
      %v2629 = vadd.f32 %v2444, %v2628
      %v2630 = vpop.f32.mrb[0].mxu0
      %2631 = vdwg.mxu0
      %2632 = vmatprep.subr.bf16.mxu0 0
      %2633 = vmatpush1.bf16.msra.mxu0 %v1812
      %2634 = vmatprep.subr.bf16.mxu0 0
      %2635 = vmatpush1.bf16.msra.mxu0 %v1813
      %2636 = vmatprep.subr.bf16.mxu0 0
      %2637 = vmatpush1.bf16.msra.mxu0 %v1814
      %2638 = vmatprep.subr.bf16.mxu0 0
      %2639 = vmatpush1.bf16.msra.mxu0 %v1815
      %2640 = vmatprep.subr.bf16.mxu0 0
      %2641 = vmatpush1.bf16.msra.mxu0 %v1816
      %2642 = vmatprep.subr.bf16.mxu0 0
      %2643 = vmatpush1.bf16.msra.mxu0 %v1817
      %2644 = vmatprep.subr.bf16.mxu0 0
      %2645 = vmatpush1.bf16.msra.mxu0 %v1818
      %2646 = vmatprep.subr.bf16.mxu0 0
      %2647 = vmatpush1.bf16.msra.mxu0 %v1819
      %2648 = vmatprep.subr.bf16.mxu0 0
      %2649 = vmatpush1.bf16.msra.mxu0 0
      %2650 = vmatprep.subr.bf16.mxu0 0
      %2651 = vmatpush1.bf16.msra.mxu0 0
      %2652 = vmatprep.subr.bf16.mxu0 0
      %2653 = vmatpush1.bf16.msra.mxu0 0
      %2654 = vmatprep.subr.bf16.mxu0 0
      %2655 = vmatpush1.bf16.msra.mxu0 0
      %2656 = vmatprep.subr.bf16.mxu0 0
      %2657 = vmatpush1.bf16.msra.mxu0 0
      %2658 = vmatprep.subr.bf16.mxu0 0
      %2659 = vmatpush1.bf16.msra.mxu0 0
      %2660 = vmatprep.subr.bf16.mxu0 0
      %2661 = vmatpush1.bf16.msra.mxu0 0
      %2662 = vmatprep.subr.bf16.mxu0 0
      %2663 = vmatpush1.bf16.msra.mxu0 0
      %2664 = vmatprep.mubr.bf16.mxu0 0
      %2665 = vmatmul.mubr.bf16.gmra.mrb[0].mxu0 %v1180
      %v2666 = vpop.f32.mrb[0].mxu0
      %v2667 = vadd.f32 %v2482, %v2666
      %v2668 = vpop.f32.mrb[0].mxu0
      %v2669 = vpop.f32.mrb[0].mxu0
      %v2670 = vadd.f32 %v2485, %v2669
      %v2671 = vpop.f32.mrb[0].mxu0
      %2672 = vmatprep.mubr.bf16.mxu0 0
      %2673 = vmatmul.mubr.bf16.gmra.mrb[0].mxu0 %v1187
      %v2674 = vpop.f32.mrb[0].mxu0
      %v2675 = vadd.f32 %v2490, %v2674
      %v2676 = vpop.f32.mrb[0].mxu0
      %v2677 = vpop.f32.mrb[0].mxu0
      %v2678 = vadd.f32 %v2493, %v2677
      %v2679 = vpop.f32.mrb[0].mxu0
      %2680 = vmatprep.mubr.bf16.mxu0 0
      %2681 = vmatmul.mubr.bf16.gmra.mrb[0].mxu0 %v1194
      %v2682 = vpop.f32.mrb[0].mxu0
      %v2683 = vadd.f32 %v2498, %v2682
      %v2684 = vpop.f32.mrb[0].mxu0
      %v2685 = vpop.f32.mrb[0].mxu0
      %v2686 = vadd.f32 %v2501, %v2685
      %v2687 = vpop.f32.mrb[0].mxu0
      %2688 = vmatprep.mubr.bf16.mxu0 0
      %2689 = vmatmul.mubr.bf16.gmra.mrb[0].mxu0 %v1201
      %v2690 = vpop.f32.mrb[0].mxu0
      %v2691 = vadd.f32 %v2506, %v2690
      %v2692 = vpop.f32.mrb[0].mxu0
      %v2693 = vpop.f32.mrb[0].mxu0
      %v2694 = vadd.f32 %v2509, %v2693
      %v2695 = vpop.f32.mrb[0].mxu0
      %2696 = vmatprep.mubr.bf16.mxu0 0
      %2697 = vmatmul.mubr.bf16.gmra.mrb[0].mxu0 %v1208
      %v2698 = vpop.f32.mrb[0].mxu0
      %v2699 = vadd.f32 %v2514, %v2698
      %v2700 = vpop.f32.mrb[0].mxu0
      %v2701 = vpop.f32.mrb[0].mxu0
      %v2702 = vadd.f32 %v2517, %v2701
      %v2703 = vpop.f32.mrb[0].mxu0
      %2704 = vmatprep.mubr.bf16.mxu0 0
      %2705 = vmatmul.mubr.bf16.gmra.mrb[0].mxu0 %v1215
      %v2706 = vpop.f32.mrb[0].mxu0
      %v2707 = vadd.f32 %v2522, %v2706
      %v2708 = vpop.f32.mrb[0].mxu0
      %v2709 = vpop.f32.mrb[0].mxu0
      %v2710 = vadd.f32 %v2525, %v2709
      %v2711 = vpop.f32.mrb[0].mxu0
      %2712 = vmatprep.mubr.bf16.mxu0 0
      %2713 = vmatmul.mubr.bf16.gmra.mrb[0].mxu0 %v1222
      %v2714 = vpop.f32.mrb[0].mxu0
      %v2715 = vadd.f32 %v2530, %v2714
      %v2716 = vpop.f32.mrb[0].mxu0
      %v2717 = vpop.f32.mrb[0].mxu0
      %v2718 = vadd.f32 %v2533, %v2717
      %v2719 = vpop.f32.mrb[0].mxu0
      %2720 = vmatprep.mubr.bf16.mxu0 0
      %2721 = vmatmul.mubr.bf16.gmra.mrb[0].mxu0 %v1229
      %v2722 = vpop.f32.mrb[0].mxu0
      %v2723 = vadd.f32 %v2538, %v2722
      %v2724 = vpop.f32.mrb[0].mxu0
      %v2725 = vpop.f32.mrb[0].mxu0
      %v2726 = vadd.f32 %v2541, %v2725
      %v2727 = vpop.f32.mrb[0].mxu0
      %2728 = vmatprep.mubr.bf16.mxu0 0
      %2729 = vmatmul.mubr.bf16.gmra.mrb[0].mxu0 %v1236
      %v2730 = vpop.f32.mrb[0].mxu0
      %v2731 = vadd.f32 %v2546, %v2730
      %v2732 = vpop.f32.mrb[0].mxu0
      %v2733 = vpop.f32.mrb[0].mxu0
      %v2734 = vadd.f32 %v2549, %v2733
      %v2735 = vpop.f32.mrb[0].mxu0
      %2736 = vmatprep.mubr.bf16.mxu0 0
      %2737 = vmatmul.mubr.bf16.gmra.mrb[0].mxu0 %v1243
      %v2738 = vpop.f32.mrb[0].mxu0
      %v2739 = vadd.f32 %v2554, %v2738
      %v2740 = vpop.f32.mrb[0].mxu0
      %v2741 = vpop.f32.mrb[0].mxu0
      %v2742 = vadd.f32 %v2557, %v2741
      %v2743 = vpop.f32.mrb[0].mxu0
      %2744 = vmatprep.mubr.bf16.mxu0 0
      %2745 = vmatmul.mubr.bf16.gmra.mrb[0].mxu0 %v1250
      %v2746 = vpop.f32.mrb[0].mxu0
      %v2747 = vadd.f32 %v2562, %v2746
      %v2748 = vpop.f32.mrb[0].mxu0
      %v2749 = vpop.f32.mrb[0].mxu0
      %v2750 = vadd.f32 %v2565, %v2749
      %v2751 = vpop.f32.mrb[0].mxu0
      %2752 = vmatprep.mubr.bf16.mxu0 0
      %2753 = vmatmul.mubr.bf16.gmra.mrb[0].mxu0 %v1257
      %v2754 = vpop.f32.mrb[0].mxu0
      %v2755 = vadd.f32 %v2570, %v2754
      %v2756 = vpop.f32.mrb[0].mxu0
      %v2757 = vpop.f32.mrb[0].mxu0
      %v2758 = vadd.f32 %v2573, %v2757
      %v2759 = vpop.f32.mrb[0].mxu0
      %2760 = vmatprep.mubr.bf16.mxu0 0
      %2761 = vmatmul.mubr.bf16.gmra.mrb[0].mxu0 %v1264
      %v2762 = vpop.f32.mrb[0].mxu0
      %v2763 = vadd.f32 %v2578, %v2762
      %v2764 = vpop.f32.mrb[0].mxu0
      %v2765 = vpop.f32.mrb[0].mxu0
      %v2766 = vadd.f32 %v2581, %v2765
      %v2767 = vpop.f32.mrb[0].mxu0
      %2768 = vmatprep.mubr.bf16.mxu0 0
      %2769 = vmatmul.mubr.bf16.gmra.mrb[0].mxu0 %v1271
      %v2770 = vpop.f32.mrb[0].mxu0
      %v2771 = vadd.f32 %v2586, %v2770
      %v2772 = vpop.f32.mrb[0].mxu0
      %v2773 = vpop.f32.mrb[0].mxu0
      %v2774 = vadd.f32 %v2589, %v2773
      %v2775 = vpop.f32.mrb[0].mxu0
      %2776 = vmatprep.mubr.bf16.mxu0 0
      %2777 = vmatmul.mubr.bf16.gmra.mrb[0].mxu0 %v1278
      %v2778 = vpop.f32.mrb[0].mxu0
      %v2779 = vadd.f32 %v2594, %v2778
      %v2780 = vpop.f32.mrb[0].mxu0
      %v2781 = vpop.f32.mrb[0].mxu0
      %v2782 = vadd.f32 %v2597, %v2781
      %v2783 = vpop.f32.mrb[0].mxu0
      %2784 = vmatprep.mubr.bf16.mxu0 0
      %2785 = vmatmul.mubr.bf16.gmra.mrb[0].mxu0 %v1285
      %v2786 = vpop.f32.mrb[0].mxu0
      %v2787 = vadd.f32 %v2602, %v2786
      %v2788 = vpop.f32.mrb[0].mxu0
      %v2789 = vpop.f32.mrb[0].mxu0
      %v2790 = vadd.f32 %v2605, %v2789
      %v2791 = vpop.f32.mrb[0].mxu0
      %2792 = vmatprep.mubr.bf16.mxu0 0
      %2793 = vmatmul.mubr.bf16.gmra.mrb[0].mxu0 %v1292
      %v2794 = vpop.f32.mrb[0].mxu0
      %v2795 = vadd.f32 %v2610, %v2794
      %v2796 = vpop.f32.mrb[0].mxu0
      %v2797 = vpop.f32.mrb[0].mxu0
      %v2798 = vadd.f32 %v2613, %v2797
      %v2799 = vpop.f32.mrb[0].mxu0
      %2800 = vmatprep.mubr.bf16.mxu0 0
      %2801 = vmatmul.mubr.bf16.gmra.mrb[0].mxu0 %v1299
      %v2802 = vpop.f32.mrb[0].mxu0
      %v2803 = vadd.f32 %v2618, %v2802
      %v2804 = vpop.f32.mrb[0].mxu0
      %v2805 = vpop.f32.mrb[0].mxu0
      %v2806 = vadd.f32 %v2621, %v2805
      %v2807 = vpop.f32.mrb[0].mxu0
      %2808 = vmatprep.mubr.bf16.mxu0 0
      %2809 = vmatmul.mubr.bf16.gmra.mrb[0].mxu0 %v1308
      %v2810 = vpop.f32.mrb[0].mxu0
      %v2811 = vadd.f32 %v2626, %v2810
      %v2812 = vpop.f32.mrb[0].mxu0
      %v2813 = vpop.f32.mrb[0].mxu0
      %v2814 = vadd.f32 %v2629, %v2813
      %v2815 = vpop.f32.mrb[0].mxu0
      %2816 = vdwg.mxu0
      %v2817 = vmax.f32 %v2667, 0.0
      %v2818 = vmax.f32 %v2670, 0.0
      %v2819 = vmax.f32 %v2675, 0.0
      %v2820 = vmax.f32 %v2678, 0.0
      %v2821 = vmax.f32 %v2683, 0.0
      %v2822 = vmax.f32 %v2686, 0.0
      %v2823 = vmax.f32 %v2691, 0.0
      %v2824 = vmax.f32 %v2694, 0.0
      %v2825 = vmax.f32 %v2699, 0.0
      %v2826 = vmax.f32 %v2702, 0.0
      %v2827 = vmax.f32 %v2707, 0.0
      %v2828 = vmax.f32 %v2710, 0.0
      %v2829 = vmax.f32 %v2715, 0.0
      %v2830 = vmax.f32 %v2718, 0.0
      %v2831 = vmax.f32 %v2723, 0.0
      %v2832 = vmax.f32 %v2726, 0.0
      %v2833 = vmax.f32 %v2731, 0.0
      %v2834 = vmax.f32 %v2734, 0.0
      %v2835 = vmax.f32 %v2739, 0.0
      %v2836 = vmax.f32 %v2742, 0.0
      %v2837 = vmax.f32 %v2747, 0.0
      %v2838 = vmax.f32 %v2750, 0.0
      %v2839 = vmax.f32 %v2755, 0.0
      %v2840 = vmax.f32 %v2758, 0.0
      %v2841 = vmax.f32 %v2763, 0.0
      %v2842 = vmax.f32 %v2766, 0.0
      %v2843 = vmax.f32 %v2771, 0.0
      %v2844 = vmax.f32 %v2774, 0.0
      %v2845 = vmax.f32 %v2779, 0.0
      %v2846 = vmax.f32 %v2782, 0.0
      %v2847 = vmax.f32 %v2787, 0.0
      %v2848 = vmax.f32 %v2790, 0.0
      %v2849 = vmax.f32 %v2795, 0.0
      %v2850 = vmax.f32 %v2798, 0.0
      %v2851 = vmax.f32 %v2803, 0.0
      %v2852 = vmax.f32 %v2806, 0.0
      %v2853 = vmax.f32 %v2811, 0.0
      %v2854 = vmax.f32 %v2814, 0.0
      %2856 = vset.pattern.permute.xlu0 0
      %2857 = vperm.xlu0 %2856, %v394
      %v2858 = vpop.permute.xlu0 %2857
      %2861 = vset.pattern.permute.xlu0 0
      %2862 = vperm.xlu0 %2861, %v395
      %v2863 = vpop.permute.xlu0 %2862
      %2866 = vset.pattern.permute.xlu0 0
      %2867 = vperm.xlu0 %2866, %v396
      %v2868 = vpop.permute.xlu0 %2867
      %2871 = vset.pattern.permute.xlu0 0
      %2872 = vperm.xlu0 %2871, %v397
      %v2873 = vpop.permute.xlu0 %2872
      %2876 = vset.pattern.permute.xlu0 0
      %2877 = vperm.xlu0 %2876, %v398
      %v2878 = vpop.permute.xlu0 %2877
      %2881 = vset.pattern.permute.xlu0 0
      %2882 = vperm.xlu0 %2881, %v399
      %v2883 = vpop.permute.xlu0 %2882
      %2886 = vset.pattern.permute.xlu0 0
      %2887 = vperm.xlu0 %2886, %v400
      %v2888 = vpop.permute.xlu0 %2887
      %2891 = vset.pattern.permute.xlu0 0
      %2892 = vperm.xlu0 %2891, %v401
      %v2893 = vpop.permute.xlu0 %2892
      %2896 = vset.pattern.permute.xlu0 0
      %2897 = vperm.xlu0 %2896, %v402
      %v2898 = vpop.permute.xlu0 %2897
      %2901 = vset.pattern.permute.xlu0 0
      %2902 = vperm.xlu0 %2901, %v403
      %v2903 = vpop.permute.xlu0 %2902
      %2906 = vset.pattern.permute.xlu0 0
      %2907 = vperm.xlu0 %2906, %v404
      %v2908 = vpop.permute.xlu0 %2907
      %2911 = vset.pattern.permute.xlu0 0
      %2912 = vperm.xlu0 %2911, %v405
      %v2913 = vpop.permute.xlu0 %2912
      %2916 = vset.pattern.permute.xlu0 0
      %2917 = vperm.xlu0 %2916, %v406
      %v2918 = vpop.permute.xlu0 %2917
      %2921 = vset.pattern.permute.xlu0 0
      %2922 = vperm.xlu0 %2921, %v407
      %v2923 = vpop.permute.xlu0 %2922
      %2926 = vset.pattern.permute.xlu0 0
      %2927 = vperm.xlu0 %2926, %v408
      %v2928 = vpop.permute.xlu0 %2927
      %2931 = vset.pattern.permute.xlu0 0
      %2932 = vperm.xlu0 %2931, %v409
      %v2933 = vpop.permute.xlu0 %2932
      %2936 = vset.pattern.permute.xlu0 0
      %2937 = vperm.xlu0 %2936, %v410
      %v2938 = vpop.permute.xlu0 %2937
      %2941 = vset.pattern.permute.xlu0 0
      %2942 = vperm.xlu0 %2941, %v411
      %v2943 = vpop.permute.xlu0 %2942
      %2946 = vset.pattern.permute.xlu0 0
      %2947 = vperm.xlu0 %2946, %v412
      %v2948 = vpop.permute.xlu0 %2947
      %2951 = vset.pattern.permute.xlu0 0
      %2952 = vperm.xlu0 %2951, %v413
      %v2953 = vpop.permute.xlu0 %2952
      %2956 = vset.pattern.permute.xlu0 0
      %2957 = vperm.xlu0 %2956, %v414
      %v2958 = vpop.permute.xlu0 %2957
      %2961 = vset.pattern.permute.xlu0 0
      %2962 = vperm.xlu0 %2961, %v415
      %v2963 = vpop.permute.xlu0 %2962
      %2966 = vset.pattern.permute.xlu0 0
      %2967 = vperm.xlu0 %2966, %v416
      %v2968 = vpop.permute.xlu0 %2967
      %2971 = vset.pattern.permute.xlu0 0
      %2972 = vperm.xlu0 %2971, %v417
      %v2973 = vpop.permute.xlu0 %2972
      %2976 = vset.pattern.permute.xlu0 0
      %2977 = vperm.xlu0 %2976, %v418
      %v2978 = vpop.permute.xlu0 %2977
      %2981 = vset.pattern.permute.xlu0 0
      %2982 = vperm.xlu0 %2981, %v419
      %v2983 = vpop.permute.xlu0 %2982
      %2986 = vset.pattern.permute.xlu0 0
      %2987 = vperm.xlu0 %2986, %v420
      %v2988 = vpop.permute.xlu0 %2987
      %2991 = vset.pattern.permute.xlu0 0
      %2992 = vperm.xlu0 %2991, %v421
      %v2993 = vpop.permute.xlu0 %2992
      %2996 = vset.pattern.permute.xlu0 0
      %2997 = vperm.xlu0 %2996, %v422
      %v2998 = vpop.permute.xlu0 %2997
      %3001 = vset.pattern.permute.xlu0 0
      %3002 = vperm.xlu0 %3001, %v423
      %v3003 = vpop.permute.xlu0 %3002
      %3006 = vset.pattern.permute.xlu0 0
      %3007 = vperm.xlu0 %3006, %v424
      %v3008 = vpop.permute.xlu0 %3007
      %3011 = vset.pattern.permute.xlu0 0
      %3012 = vperm.xlu0 %3011, %v425
      %v3013 = vpop.permute.xlu0 %3012
      %3016 = vset.pattern.permute.xlu0 0
      %3017 = vperm.xlu0 %3016, %v426
      %v3018 = vpop.permute.xlu0 %3017
      %3021 = vset.pattern.permute.xlu0 0
      %3022 = vperm.xlu0 %3021, %v427
      %v3023 = vpop.permute.xlu0 %3022
      %3026 = vset.pattern.permute.xlu0 0
      %3027 = vperm.xlu0 %3026, %v428
      %v3028 = vpop.permute.xlu0 %3027
      %3031 = vset.pattern.permute.xlu0 0
      %3032 = vperm.xlu0 %3031, %v429
      %v3033 = vpop.permute.xlu0 %3032
      %3036 = vset.pattern.permute.xlu0 0
      %3037 = vperm.xlu0 %3036, %v430
      %v3038 = vpop.permute.xlu0 %3037
      %3041 = vset.pattern.permute.xlu0 0
      %3042 = vperm.xlu0 %3041, %v431
      %v3043 = vpop.permute.xlu0 %3042
      %v3045 = vmul.f32 %v2817, %v2858
      %v3046 = vmul.f32 %v2818, %v2863
      %v3047 = vmul.f32 %v2819, %v2868
      %v3048 = vmul.f32 %v2820, %v2873
      %v3049 = vmul.f32 %v2821, %v2878
      %v3050 = vmul.f32 %v2822, %v2883
      %v3051 = vmul.f32 %v2823, %v2888
      %v3052 = vmul.f32 %v2824, %v2893
      %v3053 = vmul.f32 %v2825, %v2898
      %v3054 = vmul.f32 %v2826, %v2903
      %v3055 = vmul.f32 %v2827, %v2908
      %v3056 = vmul.f32 %v2828, %v2913
      %v3057 = vmul.f32 %v2829, %v2918
      %v3058 = vmul.f32 %v2830, %v2923
      %v3059 = vmul.f32 %v2831, %v2928
      %v3060 = vmul.f32 %v2832, %v2933
      %v3061 = vmul.f32 %v2833, %v2938
      %v3062 = vmul.f32 %v2834, %v2943
      %v3063 = vmul.f32 %v2835, %v2948
      %v3064 = vmul.f32 %v2836, %v2953
      %v3065 = vmul.f32 %v2837, %v2958
      %v3066 = vmul.f32 %v2838, %v2963
      %v3067 = vmul.f32 %v2839, %v2968
      %v3068 = vmul.f32 %v2840, %v2973
      %v3069 = vmul.f32 %v2841, %v2978
      %v3070 = vmul.f32 %v2842, %v2983
      %v3071 = vmul.f32 %v2843, %v2988
      %v3072 = vmul.f32 %v2844, %v2993
      %v3073 = vmul.f32 %v2845, %v2998
      %v3074 = vmul.f32 %v2846, %v3003
      %v3075 = vmul.f32 %v2847, %v3008
      %v3076 = vmul.f32 %v2848, %v3013
      %v3077 = vmul.f32 %v2849, %v3018
      %v3078 = vmul.f32 %v2850, %v3023
      %v3079 = vmul.f32 %v2851, %v3028
      %v3080 = vmul.f32 %v2852, %v3033
      %v3081 = vmul.f32 %v2853, %v3038
      %v3082 = vmul.f32 %v2854, %v3043
      %v3121 = vrot.slane %v3045, 5
      %v3122 = vrot.slane %v3046, 5
      %v3123 = vsel %vm944, %v3121, %v3122
      %v3124 = vrot.slane %v3047, 5
      %v3125 = vsel %vm944, %v3122, %v3124
      %v3126 = vrot.slane %v3048, 5
      %v3127 = vsel %vm944, %v3124, %v3126
      %v3128 = vrot.slane %v3049, 5
      %v3129 = vsel %vm944, %v3126, %v3128
      %v3130 = vrot.slane %v3050, 5
      %v3131 = vsel %vm944, %v3128, %v3130
      %v3132 = vrot.slane %v3051, 5
      %v3133 = vsel %vm944, %v3130, %v3132
      %v3134 = vrot.slane %v3052, 5
      %v3135 = vsel %vm944, %v3132, %v3134
      %v3136 = vrot.slane %v3053, 5
      %v3137 = vsel %vm944, %v3134, %v3136
      %v3138 = vrot.slane %v3054, 5
      %v3139 = vsel %vm944, %v3136, %v3138
      %v3140 = vrot.slane %v3055, 5
      %v3141 = vsel %vm944, %v3138, %v3140
      %v3142 = vrot.slane %v3056, 5
      %v3143 = vsel %vm944, %v3140, %v3142
      %v3144 = vrot.slane %v3057, 5
      %v3145 = vsel %vm944, %v3142, %v3144
      %v3146 = vrot.slane %v3058, 5
      %v3147 = vsel %vm944, %v3144, %v3146
      %v3148 = vrot.slane %v3059, 5
      %v3149 = vsel %vm944, %v3146, %v3148
      %v3150 = vrot.slane %v3060, 5
      %v3151 = vsel %vm944, %v3148, %v3150
      %v3152 = vrot.slane %v3061, 5
      %v3153 = vsel %vm944, %v3150, %v3152
      %v3154 = vrot.slane %v3062, 5
      %v3155 = vsel %vm944, %v3152, %v3154
      %v3156 = vrot.slane %v3063, 5
      %v3157 = vsel %vm944, %v3154, %v3156
      %v3158 = vrot.slane %v3064, 5
      %v3159 = vsel %vm944, %v3156, %v3158
      %v3160 = vrot.slane %v3065, 5
      %v3161 = vsel %vm944, %v3158, %v3160
      %v3162 = vrot.slane %v3066, 5
      %v3163 = vsel %vm944, %v3160, %v3162
      %v3164 = vrot.slane %v3067, 5
      %v3165 = vsel %vm944, %v3162, %v3164
      %v3166 = vrot.slane %v3068, 5
      %v3167 = vsel %vm944, %v3164, %v3166
      %v3168 = vrot.slane %v3069, 5
      %v3169 = vsel %vm944, %v3166, %v3168
      %v3170 = vrot.slane %v3070, 5
      %v3171 = vsel %vm944, %v3168, %v3170
      %v3172 = vrot.slane %v3071, 5
      %v3173 = vsel %vm944, %v3170, %v3172
      %v3174 = vrot.slane %v3072, 5
      %v3175 = vsel %vm944, %v3172, %v3174
      %v3176 = vrot.slane %v3073, 5
      %v3177 = vsel %vm944, %v3174, %v3176
      %v3178 = vrot.slane %v3074, 5
      %v3179 = vsel %vm944, %v3176, %v3178
      %v3180 = vrot.slane %v3075, 5
      %v3181 = vsel %vm944, %v3178, %v3180
      %v3182 = vrot.slane %v3076, 5
      %v3183 = vsel %vm944, %v3180, %v3182
      %v3184 = vrot.slane %v3077, 5
      %v3185 = vsel %vm944, %v3182, %v3184
      %v3186 = vrot.slane %v3078, 5
      %v3187 = vsel %vm944, %v3184, %v3186
      %v3188 = vrot.slane %v3079, 5
      %v3189 = vsel %vm944, %v3186, %v3188
      %v3190 = vrot.slane %v3080, 5
      %v3191 = vsel %vm944, %v3188, %v3190
      %v3192 = vrot.slane %v3081, 5
      %v3193 = vsel %vm944, %v3190, %v3192
      %v3194 = vrot.slane %v3082, 5
      %v3195 = vsel %vm944, %v3192, %v3194
      %v3233 = vsel %vm944, 0.0, %v3121
      %v3234 = vsel %vm707, %v3195, 0.0
      %v3237 = vrot.slane 0.0, 1
      %v3238 = vsel %vm470, %v3237, %v3237
      %v3239 = vrot.slane %v3233, 1
      %v3240 = vsel %vm470, %v3237, %v3239
      %v3241 = vrot.slane %v3123, 1
      %v3242 = vsel %vm470, %v3239, %v3241
      %v3243 = vrot.slane %v3125, 1
      %v3244 = vsel %vm470, %v3241, %v3243
      %v3245 = vrot.slane %v3127, 1
      %v3246 = vsel %vm470, %v3243, %v3245
      %v3247 = vrot.slane %v3129, 1
      %v3248 = vsel %vm470, %v3245, %v3247
      %v3249 = vrot.slane %v3131, 1
      %v3250 = vsel %vm470, %v3247, %v3249
      %v3251 = vrot.slane %v3133, 1
      %v3252 = vsel %vm470, %v3249, %v3251
      %v3253 = vrot.slane %v3135, 1
      %v3254 = vsel %vm470, %v3251, %v3253
      %v3255 = vrot.slane %v3137, 1
      %v3256 = vsel %vm470, %v3253, %v3255
      %v3257 = vrot.slane %v3139, 1
      %v3258 = vsel %vm470, %v3255, %v3257
      %v3259 = vrot.slane %v3141, 1
      %v3260 = vsel %vm470, %v3257, %v3259
      %v3261 = vrot.slane %v3143, 1
      %v3262 = vsel %vm470, %v3259, %v3261
      %v3263 = vrot.slane %v3145, 1
      %v3264 = vsel %vm470, %v3261, %v3263
      %v3265 = vrot.slane %v3147, 1
      %v3266 = vsel %vm470, %v3263, %v3265
      %v3267 = vrot.slane %v3149, 1
      %v3268 = vsel %vm470, %v3265, %v3267
      %v3269 = vrot.slane %v3151, 1
      %v3270 = vsel %vm470, %v3267, %v3269
      %v3271 = vrot.slane %v3153, 1
      %v3272 = vsel %vm470, %v3269, %v3271
      %v3273 = vrot.slane %v3155, 1
      %v3274 = vsel %vm470, %v3271, %v3273
      %v3275 = vrot.slane %v3157, 1
      %v3276 = vsel %vm470, %v3273, %v3275
      %v3277 = vrot.slane %v3159, 1
      %v3278 = vsel %vm470, %v3275, %v3277
      %v3279 = vrot.slane %v3161, 1
      %v3280 = vsel %vm470, %v3277, %v3279
      %v3281 = vrot.slane %v3163, 1
      %v3282 = vsel %vm470, %v3279, %v3281
      %v3283 = vrot.slane %v3165, 1
      %v3284 = vsel %vm470, %v3281, %v3283
      %v3285 = vrot.slane %v3167, 1
      %v3286 = vsel %vm470, %v3283, %v3285
      %v3287 = vrot.slane %v3169, 1
      %v3288 = vsel %vm470, %v3285, %v3287
      %v3289 = vrot.slane %v3171, 1
      %v3290 = vsel %vm470, %v3287, %v3289
      %v3291 = vrot.slane %v3173, 1
      %v3292 = vsel %vm470, %v3289, %v3291
      %v3293 = vrot.slane %v3175, 1
      %v3294 = vsel %vm470, %v3291, %v3293
      %v3295 = vrot.slane %v3177, 1
      %v3296 = vsel %vm470, %v3293, %v3295
      %v3297 = vrot.slane %v3179, 1
      %v3298 = vsel %vm470, %v3295, %v3297
      %v3299 = vrot.slane %v3181, 1
      %v3300 = vsel %vm470, %v3297, %v3299
      %v3301 = vrot.slane %v3183, 1
      %v3302 = vsel %vm470, %v3299, %v3301
      %v3303 = vrot.slane %v3185, 1
      %v3304 = vsel %vm470, %v3301, %v3303
      %v3305 = vrot.slane %v3187, 1
      %v3306 = vsel %vm470, %v3303, %v3305
      %v3307 = vrot.slane %v3189, 1
      %v3308 = vsel %vm470, %v3305, %v3307
      %v3309 = vrot.slane %v3191, 1
      %v3310 = vsel %vm470, %v3307, %v3309
      %v3349 = vrot.slane 0.0, 2
      %v3350 = vsel %vm584, %v3349, %v3349
      %v3351 = vrot.slane %v3233, 2
      %v3352 = vsel %vm584, %v3349, %v3351
      %v3353 = vrot.slane %v3123, 2
      %v3354 = vsel %vm584, %v3351, %v3353
      %v3355 = vrot.slane %v3125, 2
      %v3356 = vsel %vm584, %v3353, %v3355
      %v3357 = vrot.slane %v3127, 2
      %v3358 = vsel %vm584, %v3355, %v3357
      %v3359 = vrot.slane %v3129, 2
      %v3360 = vsel %vm584, %v3357, %v3359
      %v3361 = vrot.slane %v3131, 2
      %v3362 = vsel %vm584, %v3359, %v3361
      %v3363 = vrot.slane %v3133, 2
      %v3364 = vsel %vm584, %v3361, %v3363
      %v3365 = vrot.slane %v3135, 2
      %v3366 = vsel %vm584, %v3363, %v3365
      %v3367 = vrot.slane %v3137, 2
      %v3368 = vsel %vm584, %v3365, %v3367
      %v3369 = vrot.slane %v3139, 2
      %v3370 = vsel %vm584, %v3367, %v3369
      %v3371 = vrot.slane %v3141, 2
      %v3372 = vsel %vm584, %v3369, %v3371
      %v3373 = vrot.slane %v3143, 2
      %v3374 = vsel %vm584, %v3371, %v3373
      %v3375 = vrot.slane %v3145, 2
      %v3376 = vsel %vm584, %v3373, %v3375
      %v3377 = vrot.slane %v3147, 2
      %v3378 = vsel %vm584, %v3375, %v3377
      %v3379 = vrot.slane %v3149, 2
      %v3380 = vsel %vm584, %v3377, %v3379
      %v3381 = vrot.slane %v3151, 2
      %v3382 = vsel %vm584, %v3379, %v3381
      %v3383 = vrot.slane %v3153, 2
      %v3384 = vsel %vm584, %v3381, %v3383
      %v3385 = vrot.slane %v3155, 2
      %v3386 = vsel %vm584, %v3383, %v3385
      %v3387 = vrot.slane %v3157, 2
      %v3388 = vsel %vm584, %v3385, %v3387
      %v3389 = vrot.slane %v3159, 2
      %v3390 = vsel %vm584, %v3387, %v3389
      %v3391 = vrot.slane %v3161, 2
      %v3392 = vsel %vm584, %v3389, %v3391
      %v3393 = vrot.slane %v3163, 2
      %v3394 = vsel %vm584, %v3391, %v3393
      %v3395 = vrot.slane %v3165, 2
      %v3396 = vsel %vm584, %v3393, %v3395
      %v3397 = vrot.slane %v3167, 2
      %v3398 = vsel %vm584, %v3395, %v3397
      %v3399 = vrot.slane %v3169, 2
      %v3400 = vsel %vm584, %v3397, %v3399
      %v3401 = vrot.slane %v3171, 2
      %v3402 = vsel %vm584, %v3399, %v3401
      %v3403 = vrot.slane %v3173, 2
      %v3404 = vsel %vm584, %v3401, %v3403
      %v3405 = vrot.slane %v3175, 2
      %v3406 = vsel %vm584, %v3403, %v3405
      %v3407 = vrot.slane %v3177, 2
      %v3408 = vsel %vm584, %v3405, %v3407
      %v3409 = vrot.slane %v3179, 2
      %v3410 = vsel %vm584, %v3407, %v3409
      %v3411 = vrot.slane %v3181, 2
      %v3412 = vsel %vm584, %v3409, %v3411
      %v3413 = vrot.slane %v3183, 2
      %v3414 = vsel %vm584, %v3411, %v3413
      %v3415 = vrot.slane %v3185, 2
      %v3416 = vsel %vm584, %v3413, %v3415
      %v3417 = vrot.slane %v3187, 2
      %v3418 = vsel %vm584, %v3415, %v3417
      %v3419 = vrot.slane %v3189, 2
      %v3420 = vsel %vm584, %v3417, %v3419
      %v3421 = vrot.slane %v3191, 2
      %v3422 = vsel %vm584, %v3419, %v3421
      %v3462 = vrot.slane %v3193, 2
      %v3463 = vsel %vm584, %v3421, %v3462
      %v3464 = vrot.slane %v3234, 2
      %v3465 = vsel %vm584, %v3462, %v3464
      %v3469 = vrot.slane %v3233, 3
      %v3470 = vrot.slane %v3123, 3
      %v3471 = vsel %vm707, %v3469, %v3470
      %v3472 = vrot.slane %v3125, 3
      %v3473 = vsel %vm707, %v3470, %v3472
      %v3474 = vrot.slane %v3127, 3
      %v3475 = vsel %vm707, %v3472, %v3474
      %v3476 = vrot.slane %v3129, 3
      %v3477 = vsel %vm707, %v3474, %v3476
      %v3478 = vrot.slane %v3131, 3
      %v3479 = vsel %vm707, %v3476, %v3478
      %v3480 = vrot.slane %v3133, 3
      %v3481 = vsel %vm707, %v3478, %v3480
      %v3482 = vrot.slane %v3135, 3
      %v3483 = vsel %vm707, %v3480, %v3482
      %v3484 = vrot.slane %v3137, 3
      %v3485 = vsel %vm707, %v3482, %v3484
      %v3486 = vrot.slane %v3139, 3
      %v3487 = vsel %vm707, %v3484, %v3486
      %v3488 = vrot.slane %v3141, 3
      %v3489 = vsel %vm707, %v3486, %v3488
      %v3490 = vrot.slane %v3143, 3
      %v3491 = vsel %vm707, %v3488, %v3490
      %v3492 = vrot.slane %v3145, 3
      %v3493 = vsel %vm707, %v3490, %v3492
      %v3494 = vrot.slane %v3147, 3
      %v3495 = vsel %vm707, %v3492, %v3494
      %v3496 = vrot.slane %v3149, 3
      %v3497 = vsel %vm707, %v3494, %v3496
      %v3498 = vrot.slane %v3151, 3
      %v3499 = vsel %vm707, %v3496, %v3498
      %v3500 = vrot.slane %v3153, 3
      %v3501 = vsel %vm707, %v3498, %v3500
      %v3502 = vrot.slane %v3155, 3
      %v3503 = vsel %vm707, %v3500, %v3502
      %v3504 = vrot.slane %v3157, 3
      %v3505 = vsel %vm707, %v3502, %v3504
      %v3506 = vrot.slane %v3159, 3
      %v3507 = vsel %vm707, %v3504, %v3506
      %v3508 = vrot.slane %v3161, 3
      %v3509 = vsel %vm707, %v3506, %v3508
      %v3510 = vrot.slane %v3163, 3
      %v3511 = vsel %vm707, %v3508, %v3510
      %v3512 = vrot.slane %v3165, 3
      %v3513 = vsel %vm707, %v3510, %v3512
      %v3514 = vrot.slane %v3167, 3
      %v3515 = vsel %vm707, %v3512, %v3514
      %v3516 = vrot.slane %v3169, 3
      %v3517 = vsel %vm707, %v3514, %v3516
      %v3518 = vrot.slane %v3171, 3
      %v3519 = vsel %vm707, %v3516, %v3518
      %v3520 = vrot.slane %v3173, 3
      %v3521 = vsel %vm707, %v3518, %v3520
      %v3522 = vrot.slane %v3175, 3
      %v3523 = vsel %vm707, %v3520, %v3522
      %v3524 = vrot.slane %v3177, 3
      %v3525 = vsel %vm707, %v3522, %v3524
      %v3526 = vrot.slane %v3179, 3
      %v3527 = vsel %vm707, %v3524, %v3526
      %v3528 = vrot.slane %v3181, 3
      %v3529 = vsel %vm707, %v3526, %v3528
      %v3530 = vrot.slane %v3183, 3
      %v3531 = vsel %vm707, %v3528, %v3530
      %v3532 = vrot.slane %v3185, 3
      %v3533 = vsel %vm707, %v3530, %v3532
      %v3534 = vrot.slane %v3187, 3
      %v3535 = vsel %vm707, %v3532, %v3534
      %v3536 = vrot.slane %v3189, 3
      %v3537 = vsel %vm707, %v3534, %v3536
      %v3538 = vrot.slane %v3191, 3
      %v3539 = vsel %vm707, %v3536, %v3538
      %v3540 = vrot.slane %v3193, 3
      %v3541 = vsel %vm707, %v3538, %v3540
      %v3542 = vrot.slane %v3234, 3
      %v3543 = vsel %vm707, %v3540, %v3542
      %v3582 = vrot.slane %v3233, 4
      %v3583 = vrot.slane %v3123, 4
      %v3584 = vsel %vm821, %v3582, %v3583
      %v3585 = vrot.slane %v3125, 4
      %v3586 = vsel %vm821, %v3583, %v3585
      %v3587 = vrot.slane %v3127, 4
      %v3588 = vsel %vm821, %v3585, %v3587
      %v3589 = vrot.slane %v3129, 4
      %v3590 = vsel %vm821, %v3587, %v3589
      %v3591 = vrot.slane %v3131, 4
      %v3592 = vsel %vm821, %v3589, %v3591
      %v3593 = vrot.slane %v3133, 4
      %v3594 = vsel %vm821, %v3591, %v3593
      %v3595 = vrot.slane %v3135, 4
      %v3596 = vsel %vm821, %v3593, %v3595
      %v3597 = vrot.slane %v3137, 4
      %v3598 = vsel %vm821, %v3595, %v3597
      %v3599 = vrot.slane %v3139, 4
      %v3600 = vsel %vm821, %v3597, %v3599
      %v3601 = vrot.slane %v3141, 4
      %v3602 = vsel %vm821, %v3599, %v3601
      %v3603 = vrot.slane %v3143, 4
      %v3604 = vsel %vm821, %v3601, %v3603
      %v3605 = vrot.slane %v3145, 4
      %v3606 = vsel %vm821, %v3603, %v3605
      %v3607 = vrot.slane %v3147, 4
      %v3608 = vsel %vm821, %v3605, %v3607
      %v3609 = vrot.slane %v3149, 4
      %v3610 = vsel %vm821, %v3607, %v3609
      %v3611 = vrot.slane %v3151, 4
      %v3612 = vsel %vm821, %v3609, %v3611
      %v3613 = vrot.slane %v3153, 4
      %v3614 = vsel %vm821, %v3611, %v3613
      %v3615 = vrot.slane %v3155, 4
      %v3616 = vsel %vm821, %v3613, %v3615
      %v3617 = vrot.slane %v3157, 4
      %v3618 = vsel %vm821, %v3615, %v3617
      %v3619 = vrot.slane %v3159, 4
      %v3620 = vsel %vm821, %v3617, %v3619
      %v3621 = vrot.slane %v3161, 4
      %v3622 = vsel %vm821, %v3619, %v3621
      %v3623 = vrot.slane %v3163, 4
      %v3624 = vsel %vm821, %v3621, %v3623
      %v3625 = vrot.slane %v3165, 4
      %v3626 = vsel %vm821, %v3623, %v3625
      %v3627 = vrot.slane %v3167, 4
      %v3628 = vsel %vm821, %v3625, %v3627
      %v3629 = vrot.slane %v3169, 4
      %v3630 = vsel %vm821, %v3627, %v3629
      %v3631 = vrot.slane %v3171, 4
      %v3632 = vsel %vm821, %v3629, %v3631
      %v3633 = vrot.slane %v3173, 4
      %v3634 = vsel %vm821, %v3631, %v3633
      %v3635 = vrot.slane %v3175, 4
      %v3636 = vsel %vm821, %v3633, %v3635
      %v3637 = vrot.slane %v3177, 4
      %v3638 = vsel %vm821, %v3635, %v3637
      %v3639 = vrot.slane %v3179, 4
      %v3640 = vsel %vm821, %v3637, %v3639
      %v3641 = vrot.slane %v3181, 4
      %v3642 = vsel %vm821, %v3639, %v3641
      %v3643 = vrot.slane %v3183, 4
      %v3644 = vsel %vm821, %v3641, %v3643
      %v3645 = vrot.slane %v3185, 4
      %v3646 = vsel %vm821, %v3643, %v3645
      %v3647 = vrot.slane %v3187, 4
      %v3648 = vsel %vm821, %v3645, %v3647
      %v3649 = vrot.slane %v3189, 4
      %v3650 = vsel %vm821, %v3647, %v3649
      %v3651 = vrot.slane %v3191, 4
      %v3652 = vsel %vm821, %v3649, %v3651
      %v3653 = vrot.slane %v3193, 4
      %v3654 = vsel %vm821, %v3651, %v3653
      %v3655 = vrot.slane %v3234, 4
      %v3656 = vsel %vm821, %v3653, %v3655
      %v3695 = vrot.slane 0.0, 4
      %v3696 = vsel %vm821, %v3655, %v3695
      %v3697 = vsel %vm821, %v3695, %v3695
      %v3701 = vrot.slane %v3125, 5
      %v3702 = vrot.slane %v3127, 5
      %v3703 = vsel %vm944, %v3701, %v3702
      %v3704 = vrot.slane %v3129, 5
      %v3705 = vsel %vm944, %v3702, %v3704
      %v3706 = vrot.slane %v3131, 5
      %v3707 = vsel %vm944, %v3704, %v3706
      %v3708 = vrot.slane %v3133, 5
      %v3709 = vsel %vm944, %v3706, %v3708
      %v3710 = vrot.slane %v3135, 5
      %v3711 = vsel %vm944, %v3708, %v3710
      %v3712 = vrot.slane %v3137, 5
      %v3713 = vsel %vm944, %v3710, %v3712
      %v3714 = vrot.slane %v3139, 5
      %v3715 = vsel %vm944, %v3712, %v3714
      %v3716 = vrot.slane %v3141, 5
      %v3717 = vsel %vm944, %v3714, %v3716
      %v3718 = vrot.slane %v3143, 5
      %v3719 = vsel %vm944, %v3716, %v3718
      %v3720 = vrot.slane %v3145, 5
      %v3721 = vsel %vm944, %v3718, %v3720
      %v3722 = vrot.slane %v3147, 5
      %v3723 = vsel %vm944, %v3720, %v3722
      %v3724 = vrot.slane %v3149, 5
      %v3725 = vsel %vm944, %v3722, %v3724
      %v3726 = vrot.slane %v3151, 5
      %v3727 = vsel %vm944, %v3724, %v3726
      %v3728 = vrot.slane %v3153, 5
      %v3729 = vsel %vm944, %v3726, %v3728
      %v3730 = vrot.slane %v3155, 5
      %v3731 = vsel %vm944, %v3728, %v3730
      %v3732 = vrot.slane %v3157, 5
      %v3733 = vsel %vm944, %v3730, %v3732
      %v3734 = vrot.slane %v3159, 5
      %v3735 = vsel %vm944, %v3732, %v3734
      %v3736 = vrot.slane %v3161, 5
      %v3737 = vsel %vm944, %v3734, %v3736
      %v3738 = vrot.slane %v3163, 5
      %v3739 = vsel %vm944, %v3736, %v3738
      %v3740 = vrot.slane %v3165, 5
      %v3741 = vsel %vm944, %v3738, %v3740
      %v3742 = vrot.slane %v3167, 5
      %v3743 = vsel %vm944, %v3740, %v3742
      %v3744 = vrot.slane %v3169, 5
      %v3745 = vsel %vm944, %v3742, %v3744
      %v3746 = vrot.slane %v3171, 5
      %v3747 = vsel %vm944, %v3744, %v3746
      %v3748 = vrot.slane %v3173, 5
      %v3749 = vsel %vm944, %v3746, %v3748
      %v3750 = vrot.slane %v3175, 5
      %v3751 = vsel %vm944, %v3748, %v3750
      %v3752 = vrot.slane %v3177, 5
      %v3753 = vsel %vm944, %v3750, %v3752
      %v3754 = vrot.slane %v3179, 5
      %v3755 = vsel %vm944, %v3752, %v3754
      %v3756 = vrot.slane %v3181, 5
      %v3757 = vsel %vm944, %v3754, %v3756
      %v3758 = vrot.slane %v3183, 5
      %v3759 = vsel %vm944, %v3756, %v3758
      %v3760 = vrot.slane %v3185, 5
      %v3761 = vsel %vm944, %v3758, %v3760
      %v3762 = vrot.slane %v3187, 5
      %v3763 = vsel %vm944, %v3760, %v3762
      %v3764 = vrot.slane %v3189, 5
      %v3765 = vsel %vm944, %v3762, %v3764
      %v3766 = vrot.slane %v3191, 5
      %v3767 = vsel %vm944, %v3764, %v3766
      %v3768 = vrot.slane %v3193, 5
      %v3769 = vsel %vm944, %v3766, %v3768
      %v3770 = vrot.slane %v3234, 5
      %v3771 = vsel %vm944, %v3768, %v3770
      %v3772 = vrot.slane 0.0, 5
      %v3773 = vsel %vm944, %v3770, %v3772
      %v3774 = vsel %vm944, %v3772, %v3772
      %v3813 = vrot.slane %v3125, 6
      %v3814 = vrot.slane %v3127, 6
      %v3815 = vsel %vm1058, %v3813, %v3814
      %v3816 = vrot.slane %v3129, 6
      %v3817 = vsel %vm1058, %v3814, %v3816
      %v3818 = vrot.slane %v3131, 6
      %v3819 = vsel %vm1058, %v3816, %v3818
      %v3820 = vrot.slane %v3133, 6
      %v3821 = vsel %vm1058, %v3818, %v3820
      %v3822 = vrot.slane %v3135, 6
      %v3823 = vsel %vm1058, %v3820, %v3822
      %v3824 = vrot.slane %v3137, 6
      %v3825 = vsel %vm1058, %v3822, %v3824
      %v3826 = vrot.slane %v3139, 6
      %v3827 = vsel %vm1058, %v3824, %v3826
      %v3828 = vrot.slane %v3141, 6
      %v3829 = vsel %vm1058, %v3826, %v3828
      %v3830 = vrot.slane %v3143, 6
      %v3831 = vsel %vm1058, %v3828, %v3830
      %v3832 = vrot.slane %v3145, 6
      %v3833 = vsel %vm1058, %v3830, %v3832
      %v3834 = vrot.slane %v3147, 6
      %v3835 = vsel %vm1058, %v3832, %v3834
      %v3836 = vrot.slane %v3149, 6
      %v3837 = vsel %vm1058, %v3834, %v3836
      %v3838 = vrot.slane %v3151, 6
      %v3839 = vsel %vm1058, %v3836, %v3838
      %v3840 = vrot.slane %v3153, 6
      %v3841 = vsel %vm1058, %v3838, %v3840
      %v3842 = vrot.slane %v3155, 6
      %v3843 = vsel %vm1058, %v3840, %v3842
      %v3844 = vrot.slane %v3157, 6
      %v3845 = vsel %vm1058, %v3842, %v3844
      %v3846 = vrot.slane %v3159, 6
      %v3847 = vsel %vm1058, %v3844, %v3846
      %v3848 = vrot.slane %v3161, 6
      %v3849 = vsel %vm1058, %v3846, %v3848
      %v3850 = vrot.slane %v3163, 6
      %v3851 = vsel %vm1058, %v3848, %v3850
      %v3852 = vrot.slane %v3165, 6
      %v3853 = vsel %vm1058, %v3850, %v3852
      %v3854 = vrot.slane %v3167, 6
      %v3855 = vsel %vm1058, %v3852, %v3854
      %v3856 = vrot.slane %v3169, 6
      %v3857 = vsel %vm1058, %v3854, %v3856
      %v3858 = vrot.slane %v3171, 6
      %v3859 = vsel %vm1058, %v3856, %v3858
      %v3860 = vrot.slane %v3173, 6
      %v3861 = vsel %vm1058, %v3858, %v3860
      %v3862 = vrot.slane %v3175, 6
      %v3863 = vsel %vm1058, %v3860, %v3862
      %v3864 = vrot.slane %v3177, 6
      %v3865 = vsel %vm1058, %v3862, %v3864
      %v3866 = vrot.slane %v3179, 6
      %v3867 = vsel %vm1058, %v3864, %v3866
      %v3868 = vrot.slane %v3181, 6
      %v3869 = vsel %vm1058, %v3866, %v3868
      %v3870 = vrot.slane %v3183, 6
      %v3871 = vsel %vm1058, %v3868, %v3870
      %v3872 = vrot.slane %v3185, 6
      %v3873 = vsel %vm1058, %v3870, %v3872
      %v3874 = vrot.slane %v3187, 6
      %v3875 = vsel %vm1058, %v3872, %v3874
      %v3876 = vrot.slane %v3189, 6
      %v3877 = vsel %vm1058, %v3874, %v3876
      %v3878 = vrot.slane %v3191, 6
      %v3879 = vsel %vm1058, %v3876, %v3878
      %v3880 = vrot.slane %v3193, 6
      %v3881 = vsel %vm1058, %v3878, %v3880
      %v3882 = vrot.slane %v3234, 6
      %v3883 = vsel %vm1058, %v3880, %v3882
      %v3884 = vrot.slane 0.0, 6
      %v3885 = vsel %vm1058, %v3882, %v3884
      %v3886 = vsel %vm1058, %v3884, %v3884
      %v3925 = vpack.c.bf16 0.0, 0.0
      %v3926 = vpack.c.bf16 %v3240, %v3238
      %v3927 = vpack.c.bf16 %v3352, %v3350
      %v3928 = vpack.c.bf16 %v3356, %v3354
      %v3929 = vpack.c.bf16 %v3473, %v3471
      %v3930 = vpack.c.bf16 %v3586, %v3584
      %v3931 = vpack.c.bf16 %v3590, %v3588
      %v3932 = vpack.c.bf16 %v3705, %v3703
      %v3933 = vpack.c.bf16 %v3817, %v3815
      %v3934 = vpack.c.bf16 %v3123, %v3233
      %v3935 = vpack.c.bf16 %v3244, %v3242
      %v3936 = vpack.c.bf16 %v3360, %v3358
      %v3937 = vpack.c.bf16 %v3477, %v3475
      %v3938 = vpack.c.bf16 %v3594, %v3592
      %v3939 = vpack.c.bf16 %v3709, %v3707
      %v3940 = vpack.c.bf16 %v3821, %v3819
      %v3941 = vpack.c.bf16 %v3127, %v3125
      %v3942 = vpack.c.bf16 %v3248, %v3246
      %v3943 = vpack.c.bf16 %v3364, %v3362
      %v3944 = vpack.c.bf16 %v3481, %v3479
      %v3945 = vpack.c.bf16 %v3598, %v3596
      %v3946 = vpack.c.bf16 %v3713, %v3711
      %v3947 = vpack.c.bf16 %v3825, %v3823
      %v3948 = vpack.c.bf16 %v3131, %v3129
      %v3949 = vpack.c.bf16 %v3252, %v3250
      %v3950 = vpack.c.bf16 %v3368, %v3366
      %v3951 = vpack.c.bf16 %v3485, %v3483
      %v3952 = vpack.c.bf16 %v3602, %v3600
      %v3953 = vpack.c.bf16 %v3717, %v3715
      %v3954 = vpack.c.bf16 %v3829, %v3827
      %v3955 = vpack.c.bf16 %v3135, %v3133
      %v3956 = vpack.c.bf16 %v3256, %v3254
      %v3957 = vpack.c.bf16 %v3372, %v3370
      %v3958 = vpack.c.bf16 %v3489, %v3487
      %v3959 = vpack.c.bf16 %v3606, %v3604
      %v3960 = vpack.c.bf16 %v3721, %v3719
      %v3961 = vpack.c.bf16 %v3833, %v3831
      %v3962 = vpack.c.bf16 %v3139, %v3137
      %v3963 = vpack.c.bf16 %v3260, %v3258
      %v3964 = vpack.c.bf16 %v3376, %v3374
      %v3965 = vpack.c.bf16 %v3493, %v3491
      %v3966 = vpack.c.bf16 %v3610, %v3608
      %v3967 = vpack.c.bf16 %v3725, %v3723
      %v3968 = vpack.c.bf16 %v3837, %v3835
      %v3969 = vpack.c.bf16 %v3143, %v3141
      %v3970 = vpack.c.bf16 %v3264, %v3262
      %v3971 = vpack.c.bf16 %v3380, %v3378
      %v3972 = vpack.c.bf16 %v3497, %v3495
      %v3973 = vpack.c.bf16 %v3614, %v3612
      %v3974 = vpack.c.bf16 %v3729, %v3727
      %v3975 = vpack.c.bf16 %v3841, %v3839
      %v3976 = vpack.c.bf16 %v3147, %v3145
      %v3977 = vpack.c.bf16 %v3268, %v3266
      %v3978 = vpack.c.bf16 %v3384, %v3382
      %v3979 = vpack.c.bf16 %v3501, %v3499
      %v3980 = vpack.c.bf16 %v3618, %v3616
      %v3981 = vpack.c.bf16 %v3733, %v3731
      %v3982 = vpack.c.bf16 %v3845, %v3843
      %v3983 = vpack.c.bf16 %v3151, %v3149
      %v3984 = vpack.c.bf16 %v3272, %v3270
      %v3985 = vpack.c.bf16 %v3388, %v3386
      %v3986 = vpack.c.bf16 %v3505, %v3503
      %v3987 = vpack.c.bf16 %v3622, %v3620
      %v3988 = vpack.c.bf16 %v3737, %v3735
      %v3989 = vpack.c.bf16 %v3849, %v3847
      %v3990 = vpack.c.bf16 %v3155, %v3153
      %v3991 = vpack.c.bf16 %v3276, %v3274
      %v3992 = vpack.c.bf16 %v3392, %v3390
      %v3993 = vpack.c.bf16 %v3509, %v3507
      %v3994 = vpack.c.bf16 %v3626, %v3624
      %v3995 = vpack.c.bf16 %v3741, %v3739
      %v3996 = vpack.c.bf16 %v3853, %v3851
      %v3997 = vpack.c.bf16 %v3159, %v3157
      %v3998 = vpack.c.bf16 %v3280, %v3278
      %v3999 = vpack.c.bf16 %v3396, %v3394
      %v4000 = vpack.c.bf16 %v3513, %v3511
      %v4001 = vpack.c.bf16 %v3630, %v3628
      %v4002 = vpack.c.bf16 %v3745, %v3743
      %v4003 = vpack.c.bf16 %v3857, %v3855
      %v4004 = vpack.c.bf16 %v3163, %v3161
      %v4005 = vpack.c.bf16 %v3284, %v3282
      %v4006 = vpack.c.bf16 %v3400, %v3398
      %v4007 = vpack.c.bf16 %v3517, %v3515
      %v4008 = vpack.c.bf16 %v3634, %v3632
      %v4009 = vpack.c.bf16 %v3749, %v3747
      %v4010 = vpack.c.bf16 %v3861, %v3859
      %v4011 = vpack.c.bf16 %v3167, %v3165
      %v4012 = vpack.c.bf16 %v3288, %v3286
      %v4013 = vpack.c.bf16 %v3404, %v3402
      %v4014 = vpack.c.bf16 %v3521, %v3519
      %v4015 = vpack.c.bf16 %v3638, %v3636
      %v4016 = vpack.c.bf16 %v3753, %v3751
      %v4017 = vpack.c.bf16 %v3865, %v3863
      %v4018 = vpack.c.bf16 %v3171, %v3169
      %v4019 = vpack.c.bf16 %v3292, %v3290
      %v4020 = vpack.c.bf16 %v3408, %v3406
      %v4021 = vpack.c.bf16 %v3525, %v3523
      %v4022 = vpack.c.bf16 %v3642, %v3640
      %v4023 = vpack.c.bf16 %v3757, %v3755
      %v4024 = vpack.c.bf16 %v3869, %v3867
      %v4025 = vpack.c.bf16 %v3175, %v3173
      %v4026 = vpack.c.bf16 %v3296, %v3294
      %v4027 = vpack.c.bf16 %v3412, %v3410
      %v4028 = vpack.c.bf16 %v3529, %v3527
      %v4029 = vpack.c.bf16 %v3646, %v3644
      %v4030 = vpack.c.bf16 %v3761, %v3759
      %v4031 = vpack.c.bf16 %v3873, %v3871
      %v4032 = vpack.c.bf16 %v3179, %v3177
      %v4033 = vpack.c.bf16 %v3300, %v3298
      %v4034 = vpack.c.bf16 %v3416, %v3414
      %v4035 = vpack.c.bf16 %v3533, %v3531
      %v4036 = vpack.c.bf16 %v3650, %v3648
      %v4037 = vpack.c.bf16 %v3765, %v3763
      %v4038 = vpack.c.bf16 %v3877, %v3875
      %v4039 = vpack.c.bf16 %v3183, %v3181
      %v4040 = vpack.c.bf16 %v3304, %v3302
      %v4041 = vpack.c.bf16 %v3420, %v3418
      %v4042 = vpack.c.bf16 %v3537, %v3535
      %v4043 = vpack.c.bf16 %v3654, %v3652
      %v4044 = vpack.c.bf16 %v3769, %v3767
      %v4045 = vpack.c.bf16 %v3881, %v3879
      %v4046 = vpack.c.bf16 %v3187, %v3185
      %v4047 = vpack.c.bf16 %v3308, %v3306
      %v4048 = vpack.c.bf16 %v3463, %v3422
      %v4049 = vpack.c.bf16 %v3541, %v3539
      %v4050 = vpack.c.bf16 %v3696, %v3656
      %v4051 = vpack.c.bf16 %v3773, %v3771
      %v4052 = vpack.c.bf16 %v3885, %v3883
      %v4053 = vpack.c.bf16 %v3191, %v3189
      %v4054 = vpack.c.bf16 %v3309, %v3310
      %v4055 = vpack.c.bf16 %v3421, %v3422
      %v4056 = vpack.c.bf16 %v3464, %v3465
      %v4057 = vpack.c.bf16 %v3542, %v3543
      %v4058 = vpack.c.bf16 %v3655, %v3656
      %v4059 = vpack.c.bf16 %v3695, %v3697
      %v4060 = vpack.c.bf16 %v3772, %v3774
      %v4061 = vpack.c.bf16 %v3884, %v3886
      %v4062 = vld [vmem:[%s4] sm:$0xf]
      %v4063 = vld [vmem:[%s4 + $0x4] sm:$0xf]
      %v4064 = vld [vmem:[%s4 + $0x8] sm:$0xf]
      %v4065 = vld [vmem:[%s4 + $0xc] sm:$0xf]
      %v4066 = vld [vmem:[%s4 + $0x10] sm:$0xf]
      %v4067 = vld [vmem:[%s4 + $0x14] sm:$0xf]
      %v4068 = vld [vmem:[%s4 + $0x18] sm:$0xf]
      %v4069 = vld [vmem:[%s4 + $0x1c] sm:$0xf]
      %v4070 = vld [vmem:[%s4 + $0x20] sm:$0xf]
      %v4071 = vld [vmem:[%s4 + $0x24] sm:$0xf]
      %v4072 = vld [vmem:[%s4 + $0x28] sm:$0xf]
      %v4073 = vld [vmem:[%s4 + $0x2c] sm:$0xf]
      %v4074 = vld [vmem:[%s4 + $0x30] sm:$0xf]
      %v4075 = vld [vmem:[%s4 + $0x34] sm:$0xf]
      %v4076 = vld [vmem:[%s4 + $0x38] sm:$0xf]
      %v4077 = vld [vmem:[%s4 + $0x3c] sm:$0xf]
      %v4078 = vld [vmem:[%s4 + $0x40] sm:$0xf]
      %v4079 = vld [vmem:[%s4 + $0x44] sm:$0xf]
      %v4080 = vld [vmem:[%s4 + $0x48] sm:$0xf]
      %v4081 = vld [vmem:[%s4 + $0x4c] sm:$0xf]
      %v4082 = vld [vmem:[%s4 + $0x50] sm:$0xf]
      %v4083 = vld [vmem:[%s4 + $0x54] sm:$0xf]
      %v4084 = vld [vmem:[%s4 + $0x58] sm:$0xf]
      %v4085 = vld [vmem:[%s4 + $0x5c] sm:$0xf]
      %v4086 = vld [vmem:[%s4 + $0x60] sm:$0xf]
      %v4087 = vld [vmem:[%s4 + $0x64] sm:$0xf]
      %v4088 = vld [vmem:[%s4 + $0x68] sm:$0xf]
      %v4089 = vld [vmem:[%s4 + $0x6c] sm:$0xf]
      %v4090 = vld [vmem:[%s4 + $0x70] sm:$0xf]
      %v4091 = vld [vmem:[%s4 + $0x74] sm:$0xf]
      %v4092 = vld [vmem:[%s4 + $0x78] sm:$0xf]
      %v4093 = vld [vmem:[%s4 + $0x7c] sm:$0xf]
      %v4094 = vld [vmem:[%s4 + $0x80] sm:$0xf]
      %v4095 = vld [vmem:[%s4 + $0x84] sm:$0xf]
      %v4096 = vld [vmem:[%s4 + $0x88] sm:$0xf]
      %v4097 = vld [vmem:[%s4 + $0x8c] sm:$0xf]
      %v4098 = vld [vmem:[%s4 + $0x90] sm:$0xf]
      %v4099 = vld [vmem:[%s4 + $0x94] sm:$0xf]
      %v4100 = vld [vmem:[%s4 + $0x98] sm:$0xf]
      %v4101 = vld [vmem:[%s4 + $0x9c] sm:$0xf]
      %v4102 = vld [vmem:[%s4 + $0xa0] sm:$0xf]
      %v4103 = vld [vmem:[%s4 + $0xa4] sm:$0xf]
      %v4104 = vld [vmem:[%s4 + $0xa8] sm:$0xf]
      %v4105 = vld [vmem:[%s4 + $0xac] sm:$0xf]
      %v4106 = vld [vmem:[%s4 + $0xb0] sm:$0xf]
      %v4107 = vld [vmem:[%s4 + $0xb4] sm:$0xf]
      %v4108 = vld [vmem:[%s4 + $0xb8] sm:$0xf]
      %v4109 = vld [vmem:[%s4 + $0xbc] sm:$0xf]
      %v4110 = vld [vmem:[%s4 + $0xc0] sm:$0xf]
      %v4111 = vld [vmem:[%s4 + $0xc4] sm:$0xf]
      %v4112 = vld [vmem:[%s4 + $0xc8] sm:$0xf]
      %v4113 = vld [vmem:[%s4 + $0xcc] sm:$0xf]
      %v4114 = vld [vmem:[%s4 + $0xd0] sm:$0xf]
      %v4115 = vld [vmem:[%s4 + $0xd4] sm:$0xf]
      %v4116 = vld [vmem:[%s4 + $0xd8] sm:$0xf]
      %v4117 = vld [vmem:[%s4 + $0xdc] sm:$0xf]
      %v4118 = vld [vmem:[%s4 + $0xe0] sm:$0xf]
      %v4119 = vld [vmem:[%s4 + $0xe4] sm:$0xf]
      %v4120 = vld [vmem:[%s4 + $0xe8] sm:$0xf]
      %v4121 = vld [vmem:[%s4 + $0xec] sm:$0xf]
      %v4122 = vld [vmem:[%s4 + $0xf0] sm:$0xf]
      %v4123 = vld [vmem:[%s4 + $0xf4] sm:$0xf]
      %v4124 = vld [vmem:[%s4 + $0xf8] sm:$0xf]
      %v4125 = vld [vmem:[%s4 + $0xfc] sm:$0xf]
      %v4126 = vld [vmem:[%s4 + $0x100] sm:$0xf]
      %v4127 = vld [vmem:[%s4 + $0x104] sm:$0xf]
      %v4128 = vld [vmem:[%s4 + $0x108] sm:$0xf]
      %v4129 = vld [vmem:[%s4 + $0x10c] sm:$0xf]
      %v4130 = vld [vmem:[%s4 + $0x110] sm:$0xf]
      %v4131 = vld [vmem:[%s4 + $0x114] sm:$0xf]
      %v4132 = vld [vmem:[%s4 + $0x118] sm:$0xf]
      %v4133 = vld [vmem:[%s4 + $0x11c] sm:$0xf]
      %v4134 = vld [vmem:[%s4 + $0x120] sm:$0xf]
      %v4135 = vld [vmem:[%s4 + $0x124] sm:$0xf]
      %v4136 = vld [vmem:[%s4 + $0x128] sm:$0xf]
      %v4137 = vld [vmem:[%s4 + $0x12c] sm:$0xf]
      %v4138 = vld [vmem:[%s4 + $0x130] sm:$0xf]
      %v4139 = vld [vmem:[%s4 + $0x134] sm:$0xf]
      %v4140 = vld [vmem:[%s4 + $0x138] sm:$0xf]
      %v4141 = vld [vmem:[%s4 + $0x13c] sm:$0xf]
      %v4142 = vld [vmem:[%s4 + $0x140] sm:$0xf]
      %v4143 = vld [vmem:[%s4 + $0x144] sm:$0xf]
      %v4144 = vld [vmem:[%s4 + $0x148] sm:$0xf]
      %v4145 = vld [vmem:[%s4 + $0x14c] sm:$0xf]
      %v4146 = vld [vmem:[%s4 + $0x150] sm:$0xf]
      %v4147 = vld [vmem:[%s4 + $0x154] sm:$0xf]
      %v4148 = vld [vmem:[%s4 + $0x158] sm:$0xf]
      %v4149 = vld [vmem:[%s4 + $0x15c] sm:$0xf]
      %v4150 = vld [vmem:[%s4 + $0x160] sm:$0xf]
      %v4151 = vld [vmem:[%s4 + $0x164] sm:$0xf]
      %v4152 = vld [vmem:[%s4 + $0x168] sm:$0xf]
      %v4153 = vld [vmem:[%s4 + $0x16c] sm:$0xf]
      %v4154 = vld [vmem:[%s4 + $0x170] sm:$0xf]
      %v4155 = vld [vmem:[%s4 + $0x174] sm:$0xf]
      %v4156 = vld [vmem:[%s4 + $0x178] sm:$0xf]
      %v4157 = vld [vmem:[%s4 + $0x17c] sm:$0xf]
      %v4158 = vld [vmem:[%s4 + $0x180] sm:$0xf]
      %v4159 = vld [vmem:[%s4 + $0x184] sm:$0xf]
      %v4160 = vld [vmem:[%s4 + $0x188] sm:$0xf]
      %v4161 = vld [vmem:[%s4 + $0x18c] sm:$0xf]
      %v4162 = vld [vmem:[%s4 + $0x190] sm:$0xf]
      %v4163 = vld [vmem:[%s4 + $0x194] sm:$0xf]
      %v4164 = vld [vmem:[%s4 + $0x198] sm:$0xf]
      %v4165 = vld [vmem:[%s4 + $0x19c] sm:$0xf]
      %v4166 = vld [vmem:[%s4 + $0x1a0] sm:$0xf]
      %v4167 = vld [vmem:[%s4 + $0x1a4] sm:$0xf]
      %v4168 = vld [vmem:[%s4 + $0x1a8] sm:$0xf]
      %v4169 = vld [vmem:[%s4 + $0x1ac] sm:$0xf]
      %v4170 = vld [vmem:[%s4 + $0x1b0] sm:$0xf]
      %v4171 = vld [vmem:[%s4 + $0x1b4] sm:$0xf]
      %v4172 = vld [vmem:[%s4 + $0x1b8] sm:$0xf]
      %v4173 = vld [vmem:[%s4 + $0x1bc] sm:$0xf]
      %v4174 = vld [vmem:[%s4 + $0x1c0] sm:$0xf]
      %v4175 = vld [vmem:[%s4 + $0x1c4] sm:$0xf]
      %v4176 = vld [vmem:[%s4 + $0x1c8] sm:$0xf]
      %v4177 = vld [vmem:[%s4 + $0x1cc] sm:$0xf]
      %v4178 = vld [vmem:[%s4 + $0x1d0] sm:$0xf]
      %v4179 = vld [vmem:[%s4 + $0x1d4] sm:$0xf]
      %v4180 = vld [vmem:[%s4 + $0x1d8] sm:$0xf]
      %v4181 = vld [vmem:[%s4 + $0x1dc] sm:$0xf]
      %v4182 = vld [vmem:[%s4 + $0x1e0] sm:$0xf]
      %v4183 = vld [vmem:[%s4 + $0x1e4] sm:$0xf]
      %v4184 = vld [vmem:[%s4 + $0x1e8] sm:$0xf]
      %v4185 = vld [vmem:[%s4 + $0x1ec] sm:$0xf]
      %v4186 = vld [vmem:[%s4 + $0x1f0] sm:$0xf]
      %v4187 = vld [vmem:[%s4 + $0x1f4] sm:$0xf]
      %v4188 = vld [vmem:[%s4 + $0x1f8] sm:$0xf]
      %v4189 = vld [vmem:[%s4 + $0x1fc] sm:$0xf]
      %v4190 = vld [vmem:[%s4 + $0x200] sm:$0xf]
      %v4191 = vld [vmem:[%s4 + $0x204] sm:$0xf]
      %v4192 = vld [vmem:[%s4 + $0x208] sm:$0xf]
      %v4193 = vld [vmem:[%s4 + $0x20c] sm:$0xf]
      %v4194 = vld [vmem:[%s4 + $0x210] sm:$0xf]
      %v4195 = vld [vmem:[%s4 + $0x214] sm:$0xf]
      %v4196 = vld [vmem:[%s4 + $0x218] sm:$0xf]
      %v4197 = vld [vmem:[%s4 + $0x21c] sm:$0xf]
      %v4198 = vld [vmem:[%s4 + $0x220] sm:$0xf]
      %v4199 = vld [vmem:[%s4 + $0x224] sm:$0xf]
      %v4200 = vld [vmem:[%s4 + $0x228] sm:$0xf]
      %v4201 = vld [vmem:[%s4 + $0x22c] sm:$0xf]
      %v4202 = vld [vmem:[%s4 + $0x230] sm:$0xf]
      %v4203 = vld [vmem:[%s4 + $0x234] sm:$0xf]
      %v4204 = vld [vmem:[%s4 + $0x238] sm:$0xf]
      %v4205 = vld [vmem:[%s4 + $0x23c] sm:$0xf]
      %v4206 = vld [vmem:[%s5] sm:$0x1]
      %v4208 = vlaneseq
      %v4209 = vshrl.u32 %v4208, 7
      %v4210 = vsub.s32 0, %v4209
      %v4211 = vrot.slane %v4206, %v4210
      %v4357 = vunpack.c.l.b16 %v4062
      %v4358 = vunpack.c.l.b16 %v4063
      %v4359 = vunpack.c.l.b16 %v4064
      %v4360 = vunpack.c.l.b16 %v4065
      %v4361 = vunpack.c.l.b16 %v4066
      %v4362 = vunpack.c.l.b16 %v4067
      %v4363 = vunpack.c.l.b16 %v4068
      %v4364 = vunpack.c.l.b16 %v4069
      %v4365 = vunpack.c.l.b16 %v4070
      %v4366 = vunpack.c.l.b16 %v4071
      %v4367 = vunpack.c.l.b16 %v4072
      %v4368 = vunpack.c.l.b16 %v4073
      %v4369 = vunpack.c.l.b16 %v4074
      %v4370 = vunpack.c.l.b16 %v4075
      %v4371 = vunpack.c.l.b16 %v4076
      %v4372 = vunpack.c.l.b16 %v4077
      %v4373 = vunpack.c.l.b16 %v4078
      %v4374 = vunpack.c.l.b16 %v4079
      %v4375 = vunpack.c.l.b16 %v4080
      %v4376 = vunpack.c.l.b16 %v4081
      %v4377 = vunpack.c.l.b16 %v4082
      %v4378 = vunpack.c.l.b16 %v4083
      %v4379 = vunpack.c.l.b16 %v4084
      %v4380 = vunpack.c.l.b16 %v4085
      %v4381 = vunpack.c.l.b16 %v4086
      %v4382 = vunpack.c.l.b16 %v4087
      %v4383 = vunpack.c.l.b16 %v4088
      %v4384 = vunpack.c.l.b16 %v4089
      %v4385 = vunpack.c.l.b16 %v4090
      %v4386 = vunpack.c.l.b16 %v4091
      %v4387 = vunpack.c.l.b16 %v4092
      %v4388 = vunpack.c.l.b16 %v4093
      %v4389 = vunpack.c.l.b16 %v4094
      %v4390 = vunpack.c.l.b16 %v4095
      %v4391 = vunpack.c.l.b16 %v4096
      %v4392 = vunpack.c.l.b16 %v4097
      %v4393 = vunpack.c.l.b16 %v4098
      %v4394 = vunpack.c.l.b16 %v4099
      %v4395 = vunpack.c.l.b16 %v4100
      %v4396 = vunpack.c.l.b16 %v4101
      %v4397 = vunpack.c.l.b16 %v4102
      %v4398 = vunpack.c.l.b16 %v4103
      %v4399 = vunpack.c.l.b16 %v4104
      %v4400 = vunpack.c.l.b16 %v4105
      %v4401 = vunpack.c.l.b16 %v4106
      %v4402 = vunpack.c.l.b16 %v4107
      %v4403 = vunpack.c.l.b16 %v4108
      %v4404 = vunpack.c.l.b16 %v4109
      %v4405 = vunpack.c.l.b16 %v4110
      %v4406 = vunpack.c.l.b16 %v4111
      %v4407 = vunpack.c.l.b16 %v4112
      %v4408 = vunpack.c.l.b16 %v4113
      %v4409 = vunpack.c.l.b16 %v4114
      %v4410 = vunpack.c.l.b16 %v4115
      %v4411 = vunpack.c.l.b16 %v4116
      %v4412 = vunpack.c.l.b16 %v4117
      %v4413 = vunpack.c.l.b16 %v4118
      %v4414 = vunpack.c.l.b16 %v4119
      %v4415 = vunpack.c.l.b16 %v4120
      %v4416 = vunpack.c.l.b16 %v4121
      %v4417 = vunpack.c.l.b16 %v4122
      %v4418 = vunpack.c.l.b16 %v4123
      %v4419 = vunpack.c.l.b16 %v4124
      %v4420 = vunpack.c.l.b16 %v4125
      %v4421 = vunpack.c.l.b16 %v4126
      %v4422 = vunpack.c.l.b16 %v4127
      %v4423 = vunpack.c.l.b16 %v4128
      %v4424 = vunpack.c.l.b16 %v4129
      %v4425 = vunpack.c.l.b16 %v4130
      %v4426 = vunpack.c.l.b16 %v4131
      %v4427 = vunpack.c.l.b16 %v4132
      %v4428 = vunpack.c.l.b16 %v4133
      %v4429 = vunpack.c.l.b16 %v4134
      %v4430 = vunpack.c.l.b16 %v4135
      %v4431 = vunpack.c.l.b16 %v4136
      %v4432 = vunpack.c.l.b16 %v4137
      %v4433 = vunpack.c.l.b16 %v4138
      %v4434 = vunpack.c.l.b16 %v4139
      %v4435 = vunpack.c.l.b16 %v4140
      %v4436 = vunpack.c.l.b16 %v4141
      %v4437 = vunpack.c.l.b16 %v4142
      %v4438 = vunpack.c.l.b16 %v4143
      %v4439 = vunpack.c.l.b16 %v4144
      %v4440 = vunpack.c.l.b16 %v4145
      %v4441 = vunpack.c.l.b16 %v4146
      %v4442 = vunpack.c.l.b16 %v4147
      %v4443 = vunpack.c.l.b16 %v4148
      %v4444 = vunpack.c.l.b16 %v4149
      %v4445 = vunpack.c.l.b16 %v4150
      %v4446 = vunpack.c.l.b16 %v4151
      %v4447 = vunpack.c.l.b16 %v4152
      %v4448 = vunpack.c.l.b16 %v4153
      %v4449 = vunpack.c.l.b16 %v4154
      %v4450 = vunpack.c.l.b16 %v4155
      %v4451 = vunpack.c.l.b16 %v4156
      %v4452 = vunpack.c.l.b16 %v4157
      %v4453 = vunpack.c.l.b16 %v4158
      %v4454 = vunpack.c.l.b16 %v4159
      %v4455 = vunpack.c.l.b16 %v4160
      %v4456 = vunpack.c.l.b16 %v4161
      %v4457 = vunpack.c.l.b16 %v4162
      %v4458 = vunpack.c.l.b16 %v4163
      %v4459 = vunpack.c.l.b16 %v4164
      %v4460 = vunpack.c.l.b16 %v4165
      %v4461 = vunpack.c.l.b16 %v4166
      %v4462 = vunpack.c.l.b16 %v4167
      %v4463 = vunpack.c.l.b16 %v4168
      %v4464 = vunpack.c.l.b16 %v4169
      %v4465 = vunpack.c.l.b16 %v4170
      %v4466 = vunpack.c.l.b16 %v4171
      %v4467 = vunpack.c.l.b16 %v4172
      %v4468 = vunpack.c.l.b16 %v4173
      %v4469 = vunpack.c.l.b16 %v4174
      %v4470 = vunpack.c.l.b16 %v4175
      %v4471 = vunpack.c.l.b16 %v4176
      %v4472 = vunpack.c.l.b16 %v4177
      %v4473 = vunpack.c.l.b16 %v4178
      %v4474 = vunpack.c.l.b16 %v4179
      %v4475 = vunpack.c.l.b16 %v4180
      %v4476 = vunpack.c.l.b16 %v4181
      %v4477 = vunpack.c.l.b16 %v4182
      %v4478 = vunpack.c.l.b16 %v4183
      %v4479 = vunpack.c.l.b16 %v4184
      %v4480 = vunpack.c.l.b16 %v4185
      %v4481 = vunpack.c.l.b16 %v4186
      %v4482 = vunpack.c.l.b16 %v4187
      %v4483 = vunpack.c.l.b16 %v4188
      %v4484 = vunpack.c.l.b16 %v4189
      %v4485 = vunpack.c.l.b16 %v4190
      %v4486 = vunpack.c.l.b16 %v4191
      %v4487 = vunpack.c.l.b16 %v4192
      %v4488 = vunpack.c.l.b16 %v4193
      %v4489 = vunpack.c.l.b16 %v4194
      %v4490 = vunpack.c.l.b16 %v4195
      %v4491 = vunpack.c.l.b16 %v4196
      %v4492 = vunpack.c.l.b16 %v4197
      %v4493 = vunpack.c.l.b16 %v4198
      %v4494 = vunpack.c.l.b16 %v4199
      %v4495 = vunpack.c.l.b16 %v4200
      %v4496 = vunpack.c.l.b16 %v4201
      %v4497 = vunpack.c.l.b16 %v4202
      %v4498 = vunpack.c.l.b16 %v4203
      %v4499 = vunpack.c.l.b16 %v4204
      %v4500 = vunpack.c.l.b16 %v4205
      %v4501 = vpack.c.b16 %v4358, %v4357
      %v4502 = vpack.c.b16 %v4360, %v4359
      %v4503 = vpack.c.b16 %v4362, %v4361
      %v4504 = vpack.c.b16 %v4364, %v4363
      %v4505 = vpack.c.b16 %v4366, %v4365
      %v4506 = vpack.c.b16 %v4368, %v4367
      %v4507 = vpack.c.b16 %v4370, %v4369
      %v4508 = vpack.c.b16 %v4372, %v4371
      %v4509 = vpack.c.b16 %v4374, %v4373
      %v4510 = vpack.c.b16 %v4376, %v4375
      %v4511 = vpack.c.b16 %v4378, %v4377
      %v4512 = vpack.c.b16 %v4380, %v4379
      %v4513 = vpack.c.b16 %v4382, %v4381
      %v4514 = vpack.c.b16 %v4384, %v4383
      %v4515 = vpack.c.b16 %v4386, %v4385
      %v4516 = vpack.c.b16 %v4388, %v4387
      %v4517 = vpack.c.b16 %v4390, %v4389
      %v4518 = vpack.c.b16 %v4392, %v4391
      %v4519 = vpack.c.b16 %v4394, %v4393
      %v4520 = vpack.c.b16 %v4396, %v4395
      %v4521 = vpack.c.b16 %v4398, %v4397
      %v4522 = vpack.c.b16 %v4400, %v4399
      %v4523 = vpack.c.b16 %v4402, %v4401
      %v4524 = vpack.c.b16 %v4404, %v4403
      %v4525 = vpack.c.b16 %v4406, %v4405
      %v4526 = vpack.c.b16 %v4408, %v4407
      %v4527 = vpack.c.b16 %v4410, %v4409
      %v4528 = vpack.c.b16 %v4412, %v4411
      %v4529 = vpack.c.b16 %v4414, %v4413
      %v4530 = vpack.c.b16 %v4416, %v4415
      %v4531 = vpack.c.b16 %v4418, %v4417
      %v4532 = vpack.c.b16 %v4420, %v4419
      %v4533 = vpack.c.b16 %v4422, %v4421
      %v4534 = vpack.c.b16 %v4424, %v4423
      %v4535 = vpack.c.b16 %v4426, %v4425
      %v4536 = vpack.c.b16 %v4428, %v4427
      %v4537 = vpack.c.b16 %v4430, %v4429
      %v4538 = vpack.c.b16 %v4432, %v4431
      %v4539 = vpack.c.b16 %v4434, %v4433
      %v4540 = vpack.c.b16 %v4436, %v4435
      %v4541 = vpack.c.b16 %v4438, %v4437
      %v4542 = vpack.c.b16 %v4440, %v4439
      %v4543 = vpack.c.b16 %v4442, %v4441
      %v4544 = vpack.c.b16 %v4444, %v4443
      %v4545 = vpack.c.b16 %v4446, %v4445
      %v4546 = vpack.c.b16 %v4448, %v4447
      %v4547 = vpack.c.b16 %v4450, %v4449
      %v4548 = vpack.c.b16 %v4452, %v4451
      %v4549 = vpack.c.b16 %v4454, %v4453
      %v4550 = vpack.c.b16 %v4456, %v4455
      %v4551 = vpack.c.b16 %v4458, %v4457
      %v4552 = vpack.c.b16 %v4460, %v4459
      %v4553 = vpack.c.b16 %v4462, %v4461
      %v4554 = vpack.c.b16 %v4464, %v4463
      %v4555 = vpack.c.b16 %v4466, %v4465
      %v4556 = vpack.c.b16 %v4468, %v4467
      %v4557 = vpack.c.b16 %v4470, %v4469
      %v4558 = vpack.c.b16 %v4472, %v4471
      %v4559 = vpack.c.b16 %v4474, %v4473
      %v4560 = vpack.c.b16 %v4476, %v4475
      %v4561 = vpack.c.b16 %v4478, %v4477
      %v4562 = vpack.c.b16 %v4480, %v4479
      %v4563 = vpack.c.b16 %v4482, %v4481
      %v4564 = vpack.c.b16 %v4484, %v4483
      %v4565 = vpack.c.b16 %v4486, %v4485
      %v4566 = vpack.c.b16 %v4488, %v4487
      %v4567 = vpack.c.b16 %v4490, %v4489
      %v4568 = vpack.c.b16 %v4492, %v4491
      %v4569 = vpack.c.b16 %v4494, %v4493
      %v4570 = vpack.c.b16 %v4496, %v4495
      %v4571 = vpack.c.b16 %v4498, %v4497
      %v4572 = vpack.c.b16 %v4500, %v4499
      %4645 = vmatprep.subr.bf16.mxu0 0
      %4646 = vmatpush1.bf16.msra.mxu0 %v4501
      %4647 = vmatprep.subr.bf16.mxu0 0
      %4648 = vmatpush1.bf16.msra.mxu0 %v4502
      %4649 = vmatprep.subr.bf16.mxu0 0
      %4650 = vmatpush1.bf16.msra.mxu0 %v4503
      %4651 = vmatprep.subr.bf16.mxu0 0
      %4652 = vmatpush1.bf16.msra.mxu0 %v4504
      %4653 = vmatprep.subr.bf16.mxu0 0
      %4654 = vmatpush1.bf16.msra.mxu0 %v4505
      %4655 = vmatprep.subr.bf16.mxu0 0
      %4656 = vmatpush1.bf16.msra.mxu0 %v4506
      %4657 = vmatprep.subr.bf16.mxu0 0
      %4658 = vmatpush1.bf16.msra.mxu0 %v4507
      %4659 = vmatprep.subr.bf16.mxu0 0
      %4660 = vmatpush1.bf16.msra.mxu0 %v4508
      %4661 = vmatprep.subr.bf16.mxu0 0
      %4662 = vmatpush1.bf16.msra.mxu0 %v4509
      %4663 = vmatprep.subr.bf16.mxu0 0
      %4664 = vmatpush1.bf16.msra.mxu0 %v4510
      %4665 = vmatprep.subr.bf16.mxu0 0
      %4666 = vmatpush1.bf16.msra.mxu0 %v4511
      %4667 = vmatprep.subr.bf16.mxu0 0
      %4668 = vmatpush1.bf16.msra.mxu0 %v4512
      %4669 = vmatprep.subr.bf16.mxu0 0
      %4670 = vmatpush1.bf16.msra.mxu0 %v4513
      %4671 = vmatprep.subr.bf16.mxu0 0
      %4672 = vmatpush1.bf16.msra.mxu0 %v4514
      %4673 = vmatprep.subr.bf16.mxu0 0
      %4674 = vmatpush1.bf16.msra.mxu0 %v4515
      %4675 = vmatprep.subr.bf16.mxu0 0
      %4676 = vmatpush1.bf16.msra.mxu0 %v4516
      %4677 = vmatprep.mubr.bf16.mxu0 %v3926
      %4678 = vmatmul.mubr.bf16.gmra.mrb[0].mxu0 %v3925
      %v4679 = vpop.f32.mrb[0].mxu0
      %v4680 = vadd.f32 %v4211, %v4679
      %v4681 = vpop.f32.mrb[0].mxu0
      %v4682 = vpop.f32.mrb[0].mxu0
      %v4683 = vadd.f32 %v4211, %v4682
      %v4684 = vpop.f32.mrb[0].mxu0
      %4685 = vmatprep.mubr.bf16.mxu0 %v3935
      %4686 = vmatmul.mubr.bf16.gmra.mrb[0].mxu0 %v3934
      %v4687 = vpop.f32.mrb[0].mxu0
      %v4688 = vadd.f32 %v4211, %v4687
      %v4689 = vpop.f32.mrb[0].mxu0
      %v4690 = vpop.f32.mrb[0].mxu0
      %v4691 = vadd.f32 %v4211, %v4690
      %v4692 = vpop.f32.mrb[0].mxu0
      %4693 = vmatprep.mubr.bf16.mxu0 %v3942
      %4694 = vmatmul.mubr.bf16.gmra.mrb[0].mxu0 %v3941
      %v4695 = vpop.f32.mrb[0].mxu0
      %v4696 = vadd.f32 %v4211, %v4695
      %v4697 = vpop.f32.mrb[0].mxu0
      %v4698 = vpop.f32.mrb[0].mxu0
      %v4699 = vadd.f32 %v4211, %v4698
      %v4700 = vpop.f32.mrb[0].mxu0
      %4701 = vmatprep.mubr.bf16.mxu0 %v3949
      %4702 = vmatmul.mubr.bf16.gmra.mrb[0].mxu0 %v3948
      %v4703 = vpop.f32.mrb[0].mxu0
      %v4704 = vadd.f32 %v4211, %v4703
      %v4705 = vpop.f32.mrb[0].mxu0
      %v4706 = vpop.f32.mrb[0].mxu0
      %v4707 = vadd.f32 %v4211, %v4706
      %v4708 = vpop.f32.mrb[0].mxu0
      %4709 = vmatprep.mubr.bf16.mxu0 %v3956
      %4710 = vmatmul.mubr.bf16.gmra.mrb[0].mxu0 %v3955
      %v4711 = vpop.f32.mrb[0].mxu0
      %v4712 = vadd.f32 %v4211, %v4711
      %v4713 = vpop.f32.mrb[0].mxu0
      %v4714 = vpop.f32.mrb[0].mxu0
      %v4715 = vadd.f32 %v4211, %v4714
      %v4716 = vpop.f32.mrb[0].mxu0
      %4717 = vmatprep.mubr.bf16.mxu0 %v3963
      %4718 = vmatmul.mubr.bf16.gmra.mrb[0].mxu0 %v3962
      %v4719 = vpop.f32.mrb[0].mxu0
      %v4720 = vadd.f32 %v4211, %v4719
      %v4721 = vpop.f32.mrb[0].mxu0
      %v4722 = vpop.f32.mrb[0].mxu0
      %v4723 = vadd.f32 %v4211, %v4722
      %v4724 = vpop.f32.mrb[0].mxu0
      %4725 = vmatprep.mubr.bf16.mxu0 %v3970
      %4726 = vmatmul.mubr.bf16.gmra.mrb[0].mxu0 %v3969
      %v4727 = vpop.f32.mrb[0].mxu0
      %v4728 = vadd.f32 %v4211, %v4727
      %v4729 = vpop.f32.mrb[0].mxu0
      %v4730 = vpop.f32.mrb[0].mxu0
      %v4731 = vadd.f32 %v4211, %v4730
      %v4732 = vpop.f32.mrb[0].mxu0
      %4733 = vmatprep.mubr.bf16.mxu0 %v3977
      %4734 = vmatmul.mubr.bf16.gmra.mrb[0].mxu0 %v3976
      %v4735 = vpop.f32.mrb[0].mxu0
      %v4736 = vadd.f32 %v4211, %v4735
      %v4737 = vpop.f32.mrb[0].mxu0
      %v4738 = vpop.f32.mrb[0].mxu0
      %v4739 = vadd.f32 %v4211, %v4738
      %v4740 = vpop.f32.mrb[0].mxu0
      %4741 = vmatprep.mubr.bf16.mxu0 %v3984
      %4742 = vmatmul.mubr.bf16.gmra.mrb[0].mxu0 %v3983
      %v4743 = vpop.f32.mrb[0].mxu0
      %v4744 = vadd.f32 %v4211, %v4743
      %v4745 = vpop.f32.mrb[0].mxu0
      %v4746 = vpop.f32.mrb[0].mxu0
      %v4747 = vadd.f32 %v4211, %v4746
      %v4748 = vpop.f32.mrb[0].mxu0
      %4749 = vmatprep.mubr.bf16.mxu0 %v3991
      %4750 = vmatmul.mubr.bf16.gmra.mrb[0].mxu0 %v3990
      %v4751 = vpop.f32.mrb[0].mxu0
      %v4752 = vadd.f32 %v4211, %v4751
      %v4753 = vpop.f32.mrb[0].mxu0
      %v4754 = vpop.f32.mrb[0].mxu0
      %v4755 = vadd.f32 %v4211, %v4754
      %v4756 = vpop.f32.mrb[0].mxu0
      %4757 = vmatprep.mubr.bf16.mxu0 %v3998
      %4758 = vmatmul.mubr.bf16.gmra.mrb[0].mxu0 %v3997
      %v4759 = vpop.f32.mrb[0].mxu0
      %v4760 = vadd.f32 %v4211, %v4759
      %v4761 = vpop.f32.mrb[0].mxu0
      %v4762 = vpop.f32.mrb[0].mxu0
      %v4763 = vadd.f32 %v4211, %v4762
      %v4764 = vpop.f32.mrb[0].mxu0
      %4765 = vmatprep.mubr.bf16.mxu0 %v4005
      %4766 = vmatmul.mubr.bf16.gmra.mrb[0].mxu0 %v4004
      %v4767 = vpop.f32.mrb[0].mxu0
      %v4768 = vadd.f32 %v4211, %v4767
      %v4769 = vpop.f32.mrb[0].mxu0
      %v4770 = vpop.f32.mrb[0].mxu0
      %v4771 = vadd.f32 %v4211, %v4770
      %v4772 = vpop.f32.mrb[0].mxu0
      %4773 = vmatprep.mubr.bf16.mxu0 %v4012
      %4774 = vmatmul.mubr.bf16.gmra.mrb[0].mxu0 %v4011
      %v4775 = vpop.f32.mrb[0].mxu0
      %v4776 = vadd.f32 %v4211, %v4775
      %v4777 = vpop.f32.mrb[0].mxu0
      %v4778 = vpop.f32.mrb[0].mxu0
      %v4779 = vadd.f32 %v4211, %v4778
      %v4780 = vpop.f32.mrb[0].mxu0
      %4781 = vmatprep.mubr.bf16.mxu0 %v4019
      %4782 = vmatmul.mubr.bf16.gmra.mrb[0].mxu0 %v4018
      %v4783 = vpop.f32.mrb[0].mxu0
      %v4784 = vadd.f32 %v4211, %v4783
      %v4785 = vpop.f32.mrb[0].mxu0
      %v4786 = vpop.f32.mrb[0].mxu0
      %v4787 = vadd.f32 %v4211, %v4786
      %v4788 = vpop.f32.mrb[0].mxu0
      %4789 = vmatprep.mubr.bf16.mxu0 %v4026
      %4790 = vmatmul.mubr.bf16.gmra.mrb[0].mxu0 %v4025
      %v4791 = vpop.f32.mrb[0].mxu0
      %v4792 = vadd.f32 %v4211, %v4791
      %v4793 = vpop.f32.mrb[0].mxu0
      %v4794 = vpop.f32.mrb[0].mxu0
      %v4795 = vadd.f32 %v4211, %v4794
      %v4796 = vpop.f32.mrb[0].mxu0
      %4797 = vmatprep.mubr.bf16.mxu0 %v4033
      %4798 = vmatmul.mubr.bf16.gmra.mrb[0].mxu0 %v4032
      %v4799 = vpop.f32.mrb[0].mxu0
      %v4800 = vadd.f32 %v4211, %v4799
      %v4801 = vpop.f32.mrb[0].mxu0
      %v4802 = vpop.f32.mrb[0].mxu0
      %v4803 = vadd.f32 %v4211, %v4802
      %v4804 = vpop.f32.mrb[0].mxu0
      %4805 = vmatprep.mubr.bf16.mxu0 %v4040
      %4806 = vmatmul.mubr.bf16.gmra.mrb[0].mxu0 %v4039
      %v4807 = vpop.f32.mrb[0].mxu0
      %v4808 = vadd.f32 %v4211, %v4807
      %v4809 = vpop.f32.mrb[0].mxu0
      %v4810 = vpop.f32.mrb[0].mxu0
      %v4811 = vadd.f32 %v4211, %v4810
      %v4812 = vpop.f32.mrb[0].mxu0
      %4813 = vmatprep.mubr.bf16.mxu0 %v4047
      %4814 = vmatmul.mubr.bf16.gmra.mrb[0].mxu0 %v4046
      %v4815 = vpop.f32.mrb[0].mxu0
      %v4816 = vadd.f32 %v4211, %v4815
      %v4817 = vpop.f32.mrb[0].mxu0
      %v4818 = vpop.f32.mrb[0].mxu0
      %v4819 = vadd.f32 %v4211, %v4818
      %v4820 = vpop.f32.mrb[0].mxu0
      %4821 = vmatprep.mubr.bf16.mxu0 %v4054
      %4822 = vmatmul.mubr.bf16.gmra.mrb[0].mxu0 %v4053
      %v4823 = vpop.f32.mrb[0].mxu0
      %v4824 = vadd.f32 %v4211, %v4823
      %v4825 = vpop.f32.mrb[0].mxu0
      %v4826 = vpop.f32.mrb[0].mxu0
      %v4827 = vadd.f32 %v4211, %v4826
      %v4828 = vpop.f32.mrb[0].mxu0
      %4829 = vdwg.mxu0
      %4830 = vmatprep.subr.bf16.mxu0 0
      %4831 = vmatpush1.bf16.msra.mxu0 %v4517
      %4832 = vmatprep.subr.bf16.mxu0 0
      %4833 = vmatpush1.bf16.msra.mxu0 %v4518
      %4834 = vmatprep.subr.bf16.mxu0 0
      %4835 = vmatpush1.bf16.msra.mxu0 %v4519
      %4836 = vmatprep.subr.bf16.mxu0 0
      %4837 = vmatpush1.bf16.msra.mxu0 %v4520
      %4838 = vmatprep.subr.bf16.mxu0 0
      %4839 = vmatpush1.bf16.msra.mxu0 %v4521
      %4840 = vmatprep.subr.bf16.mxu0 0
      %4841 = vmatpush1.bf16.msra.mxu0 %v4522
      %4842 = vmatprep.subr.bf16.mxu0 0
      %4843 = vmatpush1.bf16.msra.mxu0 %v4523
      %4844 = vmatprep.subr.bf16.mxu0 0
      %4845 = vmatpush1.bf16.msra.mxu0 %v4524
      %4846 = vmatprep.subr.bf16.mxu0 0
      %4847 = vmatpush1.bf16.msra.mxu0 %v4525
      %4848 = vmatprep.subr.bf16.mxu0 0
      %4849 = vmatpush1.bf16.msra.mxu0 %v4526
      %4850 = vmatprep.subr.bf16.mxu0 0
      %4851 = vmatpush1.bf16.msra.mxu0 %v4527
      %4852 = vmatprep.subr.bf16.mxu0 0
      %4853 = vmatpush1.bf16.msra.mxu0 %v4528
      %4854 = vmatprep.subr.bf16.mxu0 0
      %4855 = vmatpush1.bf16.msra.mxu0 %v4529
      %4856 = vmatprep.subr.bf16.mxu0 0
      %4857 = vmatpush1.bf16.msra.mxu0 %v4530
      %4858 = vmatprep.subr.bf16.mxu0 0
      %4859 = vmatpush1.bf16.msra.mxu0 %v4531
      %4860 = vmatprep.subr.bf16.mxu0 0
      %4861 = vmatpush1.bf16.msra.mxu0 %v4532
      %4862 = vmatprep.mubr.bf16.mxu0 %v3928
      %4863 = vmatmul.mubr.bf16.gmra.mrb[0].mxu0 %v3927
      %v4864 = vpop.f32.mrb[0].mxu0
      %v4865 = vadd.f32 %v4680, %v4864
      %v4866 = vpop.f32.mrb[0].mxu0
      %v4867 = vpop.f32.mrb[0].mxu0
      %v4868 = vadd.f32 %v4683, %v4867
      %v4869 = vpop.f32.mrb[0].mxu0
      %4870 = vmatprep.mubr.bf16.mxu0 %v3936
      %4871 = vmatmul.mubr.bf16.gmra.mrb[0].mxu0 %v3928
      %v4872 = vpop.f32.mrb[0].mxu0
      %v4873 = vadd.f32 %v4688, %v4872
      %v4874 = vpop.f32.mrb[0].mxu0
      %v4875 = vpop.f32.mrb[0].mxu0
      %v4876 = vadd.f32 %v4691, %v4875
      %v4877 = vpop.f32.mrb[0].mxu0
      %4878 = vmatprep.mubr.bf16.mxu0 %v3943
      %4879 = vmatmul.mubr.bf16.gmra.mrb[0].mxu0 %v3936
      %v4880 = vpop.f32.mrb[0].mxu0
      %v4881 = vadd.f32 %v4696, %v4880
      %v4882 = vpop.f32.mrb[0].mxu0
      %v4883 = vpop.f32.mrb[0].mxu0
      %v4884 = vadd.f32 %v4699, %v4883
      %v4885 = vpop.f32.mrb[0].mxu0
      %4886 = vmatprep.mubr.bf16.mxu0 %v3950
      %4887 = vmatmul.mubr.bf16.gmra.mrb[0].mxu0 %v3943
      %v4888 = vpop.f32.mrb[0].mxu0
      %v4889 = vadd.f32 %v4704, %v4888
      %v4890 = vpop.f32.mrb[0].mxu0
      %v4891 = vpop.f32.mrb[0].mxu0
      %v4892 = vadd.f32 %v4707, %v4891
      %v4893 = vpop.f32.mrb[0].mxu0
      %4894 = vmatprep.mubr.bf16.mxu0 %v3957
      %4895 = vmatmul.mubr.bf16.gmra.mrb[0].mxu0 %v3950
      %v4896 = vpop.f32.mrb[0].mxu0
      %v4897 = vadd.f32 %v4712, %v4896
      %v4898 = vpop.f32.mrb[0].mxu0
      %v4899 = vpop.f32.mrb[0].mxu0
      %v4900 = vadd.f32 %v4715, %v4899
      %v4901 = vpop.f32.mrb[0].mxu0
      %4902 = vmatprep.mubr.bf16.mxu0 %v3964
      %4903 = vmatmul.mubr.bf16.gmra.mrb[0].mxu0 %v3957
      %v4904 = vpop.f32.mrb[0].mxu0
      %v4905 = vadd.f32 %v4720, %v4904
      %v4906 = vpop.f32.mrb[0].mxu0
      %v4907 = vpop.f32.mrb[0].mxu0
      %v4908 = vadd.f32 %v4723, %v4907
      %v4909 = vpop.f32.mrb[0].mxu0
      %4910 = vmatprep.mubr.bf16.mxu0 %v3971
      %4911 = vmatmul.mubr.bf16.gmra.mrb[0].mxu0 %v3964
      %v4912 = vpop.f32.mrb[0].mxu0
      %v4913 = vadd.f32 %v4728, %v4912
      %v4914 = vpop.f32.mrb[0].mxu0
      %v4915 = vpop.f32.mrb[0].mxu0
      %v4916 = vadd.f32 %v4731, %v4915
      %v4917 = vpop.f32.mrb[0].mxu0
      %4918 = vmatprep.mubr.bf16.mxu0 %v3978
      %4919 = vmatmul.mubr.bf16.gmra.mrb[0].mxu0 %v3971
      %v4920 = vpop.f32.mrb[0].mxu0
      %v4921 = vadd.f32 %v4736, %v4920
      %v4922 = vpop.f32.mrb[0].mxu0
      %v4923 = vpop.f32.mrb[0].mxu0
      %v4924 = vadd.f32 %v4739, %v4923
      %v4925 = vpop.f32.mrb[0].mxu0
      %4926 = vmatprep.mubr.bf16.mxu0 %v3985
      %4927 = vmatmul.mubr.bf16.gmra.mrb[0].mxu0 %v3978
      %v4928 = vpop.f32.mrb[0].mxu0
      %v4929 = vadd.f32 %v4744, %v4928
      %v4930 = vpop.f32.mrb[0].mxu0
      %v4931 = vpop.f32.mrb[0].mxu0
      %v4932 = vadd.f32 %v4747, %v4931
      %v4933 = vpop.f32.mrb[0].mxu0
      %4934 = vmatprep.mubr.bf16.mxu0 %v3992
      %4935 = vmatmul.mubr.bf16.gmra.mrb[0].mxu0 %v3985
      %v4936 = vpop.f32.mrb[0].mxu0
      %v4937 = vadd.f32 %v4752, %v4936
      %v4938 = vpop.f32.mrb[0].mxu0
      %v4939 = vpop.f32.mrb[0].mxu0
      %v4940 = vadd.f32 %v4755, %v4939
      %v4941 = vpop.f32.mrb[0].mxu0
      %4942 = vmatprep.mubr.bf16.mxu0 %v3999
      %4943 = vmatmul.mubr.bf16.gmra.mrb[0].mxu0 %v3992
      %v4944 = vpop.f32.mrb[0].mxu0
      %v4945 = vadd.f32 %v4760, %v4944
      %v4946 = vpop.f32.mrb[0].mxu0
      %v4947 = vpop.f32.mrb[0].mxu0
      %v4948 = vadd.f32 %v4763, %v4947
      %v4949 = vpop.f32.mrb[0].mxu0
      %4950 = vmatprep.mubr.bf16.mxu0 %v4006
      %4951 = vmatmul.mubr.bf16.gmra.mrb[0].mxu0 %v3999
      %v4952 = vpop.f32.mrb[0].mxu0
      %v4953 = vadd.f32 %v4768, %v4952
      %v4954 = vpop.f32.mrb[0].mxu0
      %v4955 = vpop.f32.mrb[0].mxu0
      %v4956 = vadd.f32 %v4771, %v4955
      %v4957 = vpop.f32.mrb[0].mxu0
      %4958 = vmatprep.mubr.bf16.mxu0 %v4013
      %4959 = vmatmul.mubr.bf16.gmra.mrb[0].mxu0 %v4006
      %v4960 = vpop.f32.mrb[0].mxu0
      %v4961 = vadd.f32 %v4776, %v4960
      %v4962 = vpop.f32.mrb[0].mxu0
      %v4963 = vpop.f32.mrb[0].mxu0
      %v4964 = vadd.f32 %v4779, %v4963
      %v4965 = vpop.f32.mrb[0].mxu0
      %4966 = vmatprep.mubr.bf16.mxu0 %v4020
      %4967 = vmatmul.mubr.bf16.gmra.mrb[0].mxu0 %v4013
      %v4968 = vpop.f32.mrb[0].mxu0
      %v4969 = vadd.f32 %v4784, %v4968
      %v4970 = vpop.f32.mrb[0].mxu0
      %v4971 = vpop.f32.mrb[0].mxu0
      %v4972 = vadd.f32 %v4787, %v4971
      %v4973 = vpop.f32.mrb[0].mxu0
      %4974 = vmatprep.mubr.bf16.mxu0 %v4027
      %4975 = vmatmul.mubr.bf16.gmra.mrb[0].mxu0 %v4020
      %v4976 = vpop.f32.mrb[0].mxu0
      %v4977 = vadd.f32 %v4792, %v4976
      %v4978 = vpop.f32.mrb[0].mxu0
      %v4979 = vpop.f32.mrb[0].mxu0
      %v4980 = vadd.f32 %v4795, %v4979
      %v4981 = vpop.f32.mrb[0].mxu0
      %4982 = vmatprep.mubr.bf16.mxu0 %v4034
      %4983 = vmatmul.mubr.bf16.gmra.mrb[0].mxu0 %v4027
      %v4984 = vpop.f32.mrb[0].mxu0
      %v4985 = vadd.f32 %v4800, %v4984
      %v4986 = vpop.f32.mrb[0].mxu0
      %v4987 = vpop.f32.mrb[0].mxu0
      %v4988 = vadd.f32 %v4803, %v4987
      %v4989 = vpop.f32.mrb[0].mxu0
      %4990 = vmatprep.mubr.bf16.mxu0 %v4041
      %4991 = vmatmul.mubr.bf16.gmra.mrb[0].mxu0 %v4034
      %v4992 = vpop.f32.mrb[0].mxu0
      %v4993 = vadd.f32 %v4808, %v4992
      %v4994 = vpop.f32.mrb[0].mxu0
      %v4995 = vpop.f32.mrb[0].mxu0
      %v4996 = vadd.f32 %v4811, %v4995
      %v4997 = vpop.f32.mrb[0].mxu0
      %4998 = vmatprep.mubr.bf16.mxu0 %v4048
      %4999 = vmatmul.mubr.bf16.gmra.mrb[0].mxu0 %v4041
      %v5000 = vpop.f32.mrb[0].mxu0
      %v5001 = vadd.f32 %v4816, %v5000
      %v5002 = vpop.f32.mrb[0].mxu0
      %v5003 = vpop.f32.mrb[0].mxu0
      %v5004 = vadd.f32 %v4819, %v5003
      %v5005 = vpop.f32.mrb[0].mxu0
      %5006 = vmatprep.mubr.bf16.mxu0 %v4056
      %5007 = vmatmul.mubr.bf16.gmra.mrb[0].mxu0 %v4055
      %v5008 = vpop.f32.mrb[0].mxu0
      %v5009 = vadd.f32 %v4824, %v5008
      %v5010 = vpop.f32.mrb[0].mxu0
      %v5011 = vpop.f32.mrb[0].mxu0
      %v5012 = vadd.f32 %v4827, %v5011
      %v5013 = vpop.f32.mrb[0].mxu0
      %5014 = vdwg.mxu0
      %5015 = vmatprep.subr.bf16.mxu0 0
      %5016 = vmatpush1.bf16.msra.mxu0 %v4533
      %5017 = vmatprep.subr.bf16.mxu0 0
      %5018 = vmatpush1.bf16.msra.mxu0 %v4534
      %5019 = vmatprep.subr.bf16.mxu0 0
      %5020 = vmatpush1.bf16.msra.mxu0 %v4535
      %5021 = vmatprep.subr.bf16.mxu0 0
      %5022 = vmatpush1.bf16.msra.mxu0 %v4536
      %5023 = vmatprep.subr.bf16.mxu0 0
      %5024 = vmatpush1.bf16.msra.mxu0 %v4537
      %5025 = vmatprep.subr.bf16.mxu0 0
      %5026 = vmatpush1.bf16.msra.mxu0 %v4538
      %5027 = vmatprep.subr.bf16.mxu0 0
      %5028 = vmatpush1.bf16.msra.mxu0 %v4539
      %5029 = vmatprep.subr.bf16.mxu0 0
      %5030 = vmatpush1.bf16.msra.mxu0 %v4540
      %5031 = vmatprep.subr.bf16.mxu0 0
      %5032 = vmatpush1.bf16.msra.mxu0 %v4541
      %5033 = vmatprep.subr.bf16.mxu0 0
      %5034 = vmatpush1.bf16.msra.mxu0 %v4542
      %5035 = vmatprep.subr.bf16.mxu0 0
      %5036 = vmatpush1.bf16.msra.mxu0 %v4543
      %5037 = vmatprep.subr.bf16.mxu0 0
      %5038 = vmatpush1.bf16.msra.mxu0 %v4544
      %5039 = vmatprep.subr.bf16.mxu0 0
      %5040 = vmatpush1.bf16.msra.mxu0 %v4545
      %5041 = vmatprep.subr.bf16.mxu0 0
      %5042 = vmatpush1.bf16.msra.mxu0 %v4546
      %5043 = vmatprep.subr.bf16.mxu0 0
      %5044 = vmatpush1.bf16.msra.mxu0 %v4547
      %5045 = vmatprep.subr.bf16.mxu0 0
      %5046 = vmatpush1.bf16.msra.mxu0 %v4548
      %5047 = vmatprep.mubr.bf16.mxu0 %v3930
      %5048 = vmatmul.mubr.bf16.gmra.mrb[0].mxu0 %v3929
      %v5049 = vpop.f32.mrb[0].mxu0
      %v5050 = vadd.f32 %v4865, %v5049
      %v5051 = vpop.f32.mrb[0].mxu0
      %v5052 = vpop.f32.mrb[0].mxu0
      %v5053 = vadd.f32 %v4868, %v5052
      %v5054 = vpop.f32.mrb[0].mxu0
      %5055 = vmatprep.mubr.bf16.mxu0 %v3931
      %5056 = vmatmul.mubr.bf16.gmra.mrb[0].mxu0 %v3937
      %v5057 = vpop.f32.mrb[0].mxu0
      %v5058 = vadd.f32 %v4873, %v5057
      %v5059 = vpop.f32.mrb[0].mxu0
      %v5060 = vpop.f32.mrb[0].mxu0
      %v5061 = vadd.f32 %v4876, %v5060
      %v5062 = vpop.f32.mrb[0].mxu0
      %5063 = vmatprep.mubr.bf16.mxu0 %v3938
      %5064 = vmatmul.mubr.bf16.gmra.mrb[0].mxu0 %v3944
      %v5065 = vpop.f32.mrb[0].mxu0
      %v5066 = vadd.f32 %v4881, %v5065
      %v5067 = vpop.f32.mrb[0].mxu0
      %v5068 = vpop.f32.mrb[0].mxu0
      %v5069 = vadd.f32 %v4884, %v5068
      %v5070 = vpop.f32.mrb[0].mxu0
      %5071 = vmatprep.mubr.bf16.mxu0 %v3945
      %5072 = vmatmul.mubr.bf16.gmra.mrb[0].mxu0 %v3951
      %v5073 = vpop.f32.mrb[0].mxu0
      %v5074 = vadd.f32 %v4889, %v5073
      %v5075 = vpop.f32.mrb[0].mxu0
      %v5076 = vpop.f32.mrb[0].mxu0
      %v5077 = vadd.f32 %v4892, %v5076
      %v5078 = vpop.f32.mrb[0].mxu0
      %5079 = vmatprep.mubr.bf16.mxu0 %v3952
      %5080 = vmatmul.mubr.bf16.gmra.mrb[0].mxu0 %v3958
      %v5081 = vpop.f32.mrb[0].mxu0
      %v5082 = vadd.f32 %v4897, %v5081
      %v5083 = vpop.f32.mrb[0].mxu0
      %v5084 = vpop.f32.mrb[0].mxu0
      %v5085 = vadd.f32 %v4900, %v5084
      %v5086 = vpop.f32.mrb[0].mxu0
      %5087 = vmatprep.mubr.bf16.mxu0 %v3959
      %5088 = vmatmul.mubr.bf16.gmra.mrb[0].mxu0 %v3965
      %v5089 = vpop.f32.mrb[0].mxu0
      %v5090 = vadd.f32 %v4905, %v5089
      %v5091 = vpop.f32.mrb[0].mxu0
      %v5092 = vpop.f32.mrb[0].mxu0
      %v5093 = vadd.f32 %v4908, %v5092
      %v5094 = vpop.f32.mrb[0].mxu0
      %5095 = vmatprep.mubr.bf16.mxu0 %v3966
      %5096 = vmatmul.mubr.bf16.gmra.mrb[0].mxu0 %v3972
      %v5097 = vpop.f32.mrb[0].mxu0
      %v5098 = vadd.f32 %v4913, %v5097
      %v5099 = vpop.f32.mrb[0].mxu0
      %v5100 = vpop.f32.mrb[0].mxu0
      %v5101 = vadd.f32 %v4916, %v5100
      %v5102 = vpop.f32.mrb[0].mxu0
      %5103 = vmatprep.mubr.bf16.mxu0 %v3973
      %5104 = vmatmul.mubr.bf16.gmra.mrb[0].mxu0 %v3979
      %v5105 = vpop.f32.mrb[0].mxu0
      %v5106 = vadd.f32 %v4921, %v5105
      %v5107 = vpop.f32.mrb[0].mxu0
      %v5108 = vpop.f32.mrb[0].mxu0
      %v5109 = vadd.f32 %v4924, %v5108
      %v5110 = vpop.f32.mrb[0].mxu0
      %5111 = vmatprep.mubr.bf16.mxu0 %v3980
      %5112 = vmatmul.mubr.bf16.gmra.mrb[0].mxu0 %v3986
      %v5113 = vpop.f32.mrb[0].mxu0
      %v5114 = vadd.f32 %v4929, %v5113
      %v5115 = vpop.f32.mrb[0].mxu0
      %v5116 = vpop.f32.mrb[0].mxu0
      %v5117 = vadd.f32 %v4932, %v5116
      %v5118 = vpop.f32.mrb[0].mxu0
      %5119 = vmatprep.mubr.bf16.mxu0 %v3987
      %5120 = vmatmul.mubr.bf16.gmra.mrb[0].mxu0 %v3993
      %v5121 = vpop.f32.mrb[0].mxu0
      %v5122 = vadd.f32 %v4937, %v5121
      %v5123 = vpop.f32.mrb[0].mxu0
      %v5124 = vpop.f32.mrb[0].mxu0
      %v5125 = vadd.f32 %v4940, %v5124
      %v5126 = vpop.f32.mrb[0].mxu0
      %5127 = vmatprep.mubr.bf16.mxu0 %v3994
      %5128 = vmatmul.mubr.bf16.gmra.mrb[0].mxu0 %v4000
      %v5129 = vpop.f32.mrb[0].mxu0
      %v5130 = vadd.f32 %v4945, %v5129
      %v5131 = vpop.f32.mrb[0].mxu0
      %v5132 = vpop.f32.mrb[0].mxu0
      %v5133 = vadd.f32 %v4948, %v5132
      %v5134 = vpop.f32.mrb[0].mxu0
      %5135 = vmatprep.mubr.bf16.mxu0 %v4001
      %5136 = vmatmul.mubr.bf16.gmra.mrb[0].mxu0 %v4007
      %v5137 = vpop.f32.mrb[0].mxu0
      %v5138 = vadd.f32 %v4953, %v5137
      %v5139 = vpop.f32.mrb[0].mxu0
      %v5140 = vpop.f32.mrb[0].mxu0
      %v5141 = vadd.f32 %v4956, %v5140
      %v5142 = vpop.f32.mrb[0].mxu0
      %5143 = vmatprep.mubr.bf16.mxu0 %v4008
      %5144 = vmatmul.mubr.bf16.gmra.mrb[0].mxu0 %v4014
      %v5145 = vpop.f32.mrb[0].mxu0
      %v5146 = vadd.f32 %v4961, %v5145
      %v5147 = vpop.f32.mrb[0].mxu0
      %v5148 = vpop.f32.mrb[0].mxu0
      %v5149 = vadd.f32 %v4964, %v5148
      %v5150 = vpop.f32.mrb[0].mxu0
      %5151 = vmatprep.mubr.bf16.mxu0 %v4015
      %5152 = vmatmul.mubr.bf16.gmra.mrb[0].mxu0 %v4021
      %v5153 = vpop.f32.mrb[0].mxu0
      %v5154 = vadd.f32 %v4969, %v5153
      %v5155 = vpop.f32.mrb[0].mxu0
      %v5156 = vpop.f32.mrb[0].mxu0
      %v5157 = vadd.f32 %v4972, %v5156
      %v5158 = vpop.f32.mrb[0].mxu0
      %5159 = vmatprep.mubr.bf16.mxu0 %v4022
      %5160 = vmatmul.mubr.bf16.gmra.mrb[0].mxu0 %v4028
      %v5161 = vpop.f32.mrb[0].mxu0
      %v5162 = vadd.f32 %v4977, %v5161
      %v5163 = vpop.f32.mrb[0].mxu0
      %v5164 = vpop.f32.mrb[0].mxu0
      %v5165 = vadd.f32 %v4980, %v5164
      %v5166 = vpop.f32.mrb[0].mxu0
      %5167 = vmatprep.mubr.bf16.mxu0 %v4029
      %5168 = vmatmul.mubr.bf16.gmra.mrb[0].mxu0 %v4035
      %v5169 = vpop.f32.mrb[0].mxu0
      %v5170 = vadd.f32 %v4985, %v5169
      %v5171 = vpop.f32.mrb[0].mxu0
      %v5172 = vpop.f32.mrb[0].mxu0
      %v5173 = vadd.f32 %v4988, %v5172
      %v5174 = vpop.f32.mrb[0].mxu0
      %5175 = vmatprep.mubr.bf16.mxu0 %v4036
      %5176 = vmatmul.mubr.bf16.gmra.mrb[0].mxu0 %v4042
      %v5177 = vpop.f32.mrb[0].mxu0
      %v5178 = vadd.f32 %v4993, %v5177
      %v5179 = vpop.f32.mrb[0].mxu0
      %v5180 = vpop.f32.mrb[0].mxu0
      %v5181 = vadd.f32 %v4996, %v5180
      %v5182 = vpop.f32.mrb[0].mxu0
      %5183 = vmatprep.mubr.bf16.mxu0 %v4043
      %5184 = vmatmul.mubr.bf16.gmra.mrb[0].mxu0 %v4049
      %v5185 = vpop.f32.mrb[0].mxu0
      %v5186 = vadd.f32 %v5001, %v5185
      %v5187 = vpop.f32.mrb[0].mxu0
      %v5188 = vpop.f32.mrb[0].mxu0
      %v5189 = vadd.f32 %v5004, %v5188
      %v5190 = vpop.f32.mrb[0].mxu0
      %5191 = vmatprep.mubr.bf16.mxu0 %v4058
      %5192 = vmatmul.mubr.bf16.gmra.mrb[0].mxu0 %v4057
      %v5193 = vpop.f32.mrb[0].mxu0
      %v5194 = vadd.f32 %v5009, %v5193
      %v5195 = vpop.f32.mrb[0].mxu0
      %v5196 = vpop.f32.mrb[0].mxu0
      %v5197 = vadd.f32 %v5012, %v5196
      %v5198 = vpop.f32.mrb[0].mxu0
      %5199 = vdwg.mxu0
      %5200 = vmatprep.subr.bf16.mxu0 0
      %5201 = vmatpush1.bf16.msra.mxu0 %v4549
      %5202 = vmatprep.subr.bf16.mxu0 0
      %5203 = vmatpush1.bf16.msra.mxu0 %v4550
      %5204 = vmatprep.subr.bf16.mxu0 0
      %5205 = vmatpush1.bf16.msra.mxu0 %v4551
      %5206 = vmatprep.subr.bf16.mxu0 0
      %5207 = vmatpush1.bf16.msra.mxu0 %v4552
      %5208 = vmatprep.subr.bf16.mxu0 0
      %5209 = vmatpush1.bf16.msra.mxu0 %v4553
      %5210 = vmatprep.subr.bf16.mxu0 0
      %5211 = vmatpush1.bf16.msra.mxu0 %v4554
      %5212 = vmatprep.subr.bf16.mxu0 0
      %5213 = vmatpush1.bf16.msra.mxu0 %v4555
      %5214 = vmatprep.subr.bf16.mxu0 0
      %5215 = vmatpush1.bf16.msra.mxu0 %v4556
      %5216 = vmatprep.subr.bf16.mxu0 0
      %5217 = vmatpush1.bf16.msra.mxu0 %v4557
      %5218 = vmatprep.subr.bf16.mxu0 0
      %5219 = vmatpush1.bf16.msra.mxu0 %v4558
      %5220 = vmatprep.subr.bf16.mxu0 0
      %5221 = vmatpush1.bf16.msra.mxu0 %v4559
      %5222 = vmatprep.subr.bf16.mxu0 0
      %5223 = vmatpush1.bf16.msra.mxu0 %v4560
      %5224 = vmatprep.subr.bf16.mxu0 0
      %5225 = vmatpush1.bf16.msra.mxu0 %v4561
      %5226 = vmatprep.subr.bf16.mxu0 0
      %5227 = vmatpush1.bf16.msra.mxu0 %v4562
      %5228 = vmatprep.subr.bf16.mxu0 0
      %5229 = vmatpush1.bf16.msra.mxu0 %v4563
      %5230 = vmatprep.subr.bf16.mxu0 0
      %5231 = vmatpush1.bf16.msra.mxu0 %v4564
      %5232 = vmatprep.mubr.bf16.mxu0 %v3932
      %5233 = vmatmul.mubr.bf16.gmra.mrb[0].mxu0 %v3931
      %v5234 = vpop.f32.mrb[0].mxu0
      %v5235 = vadd.f32 %v5050, %v5234
      %v5236 = vpop.f32.mrb[0].mxu0
      %v5237 = vpop.f32.mrb[0].mxu0
      %v5238 = vadd.f32 %v5053, %v5237
      %v5239 = vpop.f32.mrb[0].mxu0
      %5240 = vmatprep.mubr.bf16.mxu0 %v3939
      %5241 = vmatmul.mubr.bf16.gmra.mrb[0].mxu0 %v3938
      %v5242 = vpop.f32.mrb[0].mxu0
      %v5243 = vadd.f32 %v5058, %v5242
      %v5244 = vpop.f32.mrb[0].mxu0
      %v5245 = vpop.f32.mrb[0].mxu0
      %v5246 = vadd.f32 %v5061, %v5245
      %v5247 = vpop.f32.mrb[0].mxu0
      %5248 = vmatprep.mubr.bf16.mxu0 %v3946
      %5249 = vmatmul.mubr.bf16.gmra.mrb[0].mxu0 %v3945
      %v5250 = vpop.f32.mrb[0].mxu0
      %v5251 = vadd.f32 %v5066, %v5250
      %v5252 = vpop.f32.mrb[0].mxu0
      %v5253 = vpop.f32.mrb[0].mxu0
      %v5254 = vadd.f32 %v5069, %v5253
      %v5255 = vpop.f32.mrb[0].mxu0
      %5256 = vmatprep.mubr.bf16.mxu0 %v3953
      %5257 = vmatmul.mubr.bf16.gmra.mrb[0].mxu0 %v3952
      %v5258 = vpop.f32.mrb[0].mxu0
      %v5259 = vadd.f32 %v5074, %v5258
      %v5260 = vpop.f32.mrb[0].mxu0
      %v5261 = vpop.f32.mrb[0].mxu0
      %v5262 = vadd.f32 %v5077, %v5261
      %v5263 = vpop.f32.mrb[0].mxu0
      %5264 = vmatprep.mubr.bf16.mxu0 %v3960
      %5265 = vmatmul.mubr.bf16.gmra.mrb[0].mxu0 %v3959
      %v5266 = vpop.f32.mrb[0].mxu0
      %v5267 = vadd.f32 %v5082, %v5266
      %v5268 = vpop.f32.mrb[0].mxu0
      %v5269 = vpop.f32.mrb[0].mxu0
      %v5270 = vadd.f32 %v5085, %v5269
      %v5271 = vpop.f32.mrb[0].mxu0
      %5272 = vmatprep.mubr.bf16.mxu0 %v3967
      %5273 = vmatmul.mubr.bf16.gmra.mrb[0].mxu0 %v3966
      %v5274 = vpop.f32.mrb[0].mxu0
      %v5275 = vadd.f32 %v5090, %v5274
      %v5276 = vpop.f32.mrb[0].mxu0
      %v5277 = vpop.f32.mrb[0].mxu0
      %v5278 = vadd.f32 %v5093, %v5277
      %v5279 = vpop.f32.mrb[0].mxu0
      %5280 = vmatprep.mubr.bf16.mxu0 %v3974
      %5281 = vmatmul.mubr.bf16.gmra.mrb[0].mxu0 %v3973
      %v5282 = vpop.f32.mrb[0].mxu0
      %v5283 = vadd.f32 %v5098, %v5282
      %v5284 = vpop.f32.mrb[0].mxu0
      %v5285 = vpop.f32.mrb[0].mxu0
      %v5286 = vadd.f32 %v5101, %v5285
      %v5287 = vpop.f32.mrb[0].mxu0
      %5288 = vmatprep.mubr.bf16.mxu0 %v3981
      %5289 = vmatmul.mubr.bf16.gmra.mrb[0].mxu0 %v3980
      %v5290 = vpop.f32.mrb[0].mxu0
      %v5291 = vadd.f32 %v5106, %v5290
      %v5292 = vpop.f32.mrb[0].mxu0
      %v5293 = vpop.f32.mrb[0].mxu0
      %v5294 = vadd.f32 %v5109, %v5293
      %v5295 = vpop.f32.mrb[0].mxu0
      %5296 = vmatprep.mubr.bf16.mxu0 %v3988
      %5297 = vmatmul.mubr.bf16.gmra.mrb[0].mxu0 %v3987
      %v5298 = vpop.f32.mrb[0].mxu0
      %v5299 = vadd.f32 %v5114, %v5298
      %v5300 = vpop.f32.mrb[0].mxu0
      %v5301 = vpop.f32.mrb[0].mxu0
      %v5302 = vadd.f32 %v5117, %v5301
      %v5303 = vpop.f32.mrb[0].mxu0
      %5304 = vmatprep.mubr.bf16.mxu0 %v3995
      %5305 = vmatmul.mubr.bf16.gmra.mrb[0].mxu0 %v3994
      %v5306 = vpop.f32.mrb[0].mxu0
      %v5307 = vadd.f32 %v5122, %v5306
      %v5308 = vpop.f32.mrb[0].mxu0
      %v5309 = vpop.f32.mrb[0].mxu0
      %v5310 = vadd.f32 %v5125, %v5309
      %v5311 = vpop.f32.mrb[0].mxu0
      %5312 = vmatprep.mubr.bf16.mxu0 %v4002
      %5313 = vmatmul.mubr.bf16.gmra.mrb[0].mxu0 %v4001
      %v5314 = vpop.f32.mrb[0].mxu0
      %v5315 = vadd.f32 %v5130, %v5314
      %v5316 = vpop.f32.mrb[0].mxu0
      %v5317 = vpop.f32.mrb[0].mxu0
      %v5318 = vadd.f32 %v5133, %v5317
      %v5319 = vpop.f32.mrb[0].mxu0
      %5320 = vmatprep.mubr.bf16.mxu0 %v4009
      %5321 = vmatmul.mubr.bf16.gmra.mrb[0].mxu0 %v4008
      %v5322 = vpop.f32.mrb[0].mxu0
      %v5323 = vadd.f32 %v5138, %v5322
      %v5324 = vpop.f32.mrb[0].mxu0
      %v5325 = vpop.f32.mrb[0].mxu0
      %v5326 = vadd.f32 %v5141, %v5325
      %v5327 = vpop.f32.mrb[0].mxu0
      %5328 = vmatprep.mubr.bf16.mxu0 %v4016
      %5329 = vmatmul.mubr.bf16.gmra.mrb[0].mxu0 %v4015
      %v5330 = vpop.f32.mrb[0].mxu0
      %v5331 = vadd.f32 %v5146, %v5330
      %v5332 = vpop.f32.mrb[0].mxu0
      %v5333 = vpop.f32.mrb[0].mxu0
      %v5334 = vadd.f32 %v5149, %v5333
      %v5335 = vpop.f32.mrb[0].mxu0
      %5336 = vmatprep.mubr.bf16.mxu0 %v4023
      %5337 = vmatmul.mubr.bf16.gmra.mrb[0].mxu0 %v4022
      %v5338 = vpop.f32.mrb[0].mxu0
      %v5339 = vadd.f32 %v5154, %v5338
      %v5340 = vpop.f32.mrb[0].mxu0
      %v5341 = vpop.f32.mrb[0].mxu0
      %v5342 = vadd.f32 %v5157, %v5341
      %v5343 = vpop.f32.mrb[0].mxu0
      %5344 = vmatprep.mubr.bf16.mxu0 %v4030
      %5345 = vmatmul.mubr.bf16.gmra.mrb[0].mxu0 %v4029
      %v5346 = vpop.f32.mrb[0].mxu0
      %v5347 = vadd.f32 %v5162, %v5346
      %v5348 = vpop.f32.mrb[0].mxu0
      %v5349 = vpop.f32.mrb[0].mxu0
      %v5350 = vadd.f32 %v5165, %v5349
      %v5351 = vpop.f32.mrb[0].mxu0
      %5352 = vmatprep.mubr.bf16.mxu0 %v4037
      %5353 = vmatmul.mubr.bf16.gmra.mrb[0].mxu0 %v4036
      %v5354 = vpop.f32.mrb[0].mxu0
      %v5355 = vadd.f32 %v5170, %v5354
      %v5356 = vpop.f32.mrb[0].mxu0
      %v5357 = vpop.f32.mrb[0].mxu0
      %v5358 = vadd.f32 %v5173, %v5357
      %v5359 = vpop.f32.mrb[0].mxu0
      %5360 = vmatprep.mubr.bf16.mxu0 %v4044
      %5361 = vmatmul.mubr.bf16.gmra.mrb[0].mxu0 %v4043
      %v5362 = vpop.f32.mrb[0].mxu0
      %v5363 = vadd.f32 %v5178, %v5362
      %v5364 = vpop.f32.mrb[0].mxu0
      %v5365 = vpop.f32.mrb[0].mxu0
      %v5366 = vadd.f32 %v5181, %v5365
      %v5367 = vpop.f32.mrb[0].mxu0
      %5368 = vmatprep.mubr.bf16.mxu0 %v4051
      %5369 = vmatmul.mubr.bf16.gmra.mrb[0].mxu0 %v4050
      %v5370 = vpop.f32.mrb[0].mxu0
      %v5371 = vadd.f32 %v5186, %v5370
      %v5372 = vpop.f32.mrb[0].mxu0
      %v5373 = vpop.f32.mrb[0].mxu0
      %v5374 = vadd.f32 %v5189, %v5373
      %v5375 = vpop.f32.mrb[0].mxu0
      %5376 = vmatprep.mubr.bf16.mxu0 %v4060
      %5377 = vmatmul.mubr.bf16.gmra.mrb[0].mxu0 %v4059
      %v5378 = vpop.f32.mrb[0].mxu0
      %v5379 = vadd.f32 %v5194, %v5378
      %v5380 = vpop.f32.mrb[0].mxu0
      %v5381 = vpop.f32.mrb[0].mxu0
      %v5382 = vadd.f32 %v5197, %v5381
      %v5383 = vpop.f32.mrb[0].mxu0
      %5384 = vdwg.mxu0
      %5385 = vmatprep.subr.bf16.mxu0 0
      %5386 = vmatpush1.bf16.msra.mxu0 %v4565
      %5387 = vmatprep.subr.bf16.mxu0 0
      %5388 = vmatpush1.bf16.msra.mxu0 %v4566
      %5389 = vmatprep.subr.bf16.mxu0 0
      %5390 = vmatpush1.bf16.msra.mxu0 %v4567
      %5391 = vmatprep.subr.bf16.mxu0 0
      %5392 = vmatpush1.bf16.msra.mxu0 %v4568
      %5393 = vmatprep.subr.bf16.mxu0 0
      %5394 = vmatpush1.bf16.msra.mxu0 %v4569
      %5395 = vmatprep.subr.bf16.mxu0 0
      %5396 = vmatpush1.bf16.msra.mxu0 %v4570
      %5397 = vmatprep.subr.bf16.mxu0 0
      %5398 = vmatpush1.bf16.msra.mxu0 %v4571
      %5399 = vmatprep.subr.bf16.mxu0 0
      %5400 = vmatpush1.bf16.msra.mxu0 %v4572
      %5401 = vmatprep.subr.bf16.mxu0 0
      %5402 = vmatpush1.bf16.msra.mxu0 0
      %5403 = vmatprep.subr.bf16.mxu0 0
      %5404 = vmatpush1.bf16.msra.mxu0 0
      %5405 = vmatprep.subr.bf16.mxu0 0
      %5406 = vmatpush1.bf16.msra.mxu0 0
      %5407 = vmatprep.subr.bf16.mxu0 0
      %5408 = vmatpush1.bf16.msra.mxu0 0
      %5409 = vmatprep.subr.bf16.mxu0 0
      %5410 = vmatpush1.bf16.msra.mxu0 0
      %5411 = vmatprep.subr.bf16.mxu0 0
      %5412 = vmatpush1.bf16.msra.mxu0 0
      %5413 = vmatprep.subr.bf16.mxu0 0
      %5414 = vmatpush1.bf16.msra.mxu0 0
      %5415 = vmatprep.subr.bf16.mxu0 0
      %5416 = vmatpush1.bf16.msra.mxu0 0
      %5417 = vmatprep.mubr.bf16.mxu0 0
      %5418 = vmatmul.mubr.bf16.gmra.mrb[0].mxu0 %v3933
      %v5419 = vpop.f32.mrb[0].mxu0
      %v5420 = vadd.f32 %v5235, %v5419
      %v5421 = vpop.f32.mrb[0].mxu0
      %v5422 = vpop.f32.mrb[0].mxu0
      %v5423 = vadd.f32 %v5238, %v5422
      %v5424 = vpop.f32.mrb[0].mxu0
      %5425 = vmatprep.mubr.bf16.mxu0 0
      %5426 = vmatmul.mubr.bf16.gmra.mrb[0].mxu0 %v3940
      %v5427 = vpop.f32.mrb[0].mxu0
      %v5428 = vadd.f32 %v5243, %v5427
      %v5429 = vpop.f32.mrb[0].mxu0
      %v5430 = vpop.f32.mrb[0].mxu0
      %v5431 = vadd.f32 %v5246, %v5430
      %v5432 = vpop.f32.mrb[0].mxu0
      %5433 = vmatprep.mubr.bf16.mxu0 0
      %5434 = vmatmul.mubr.bf16.gmra.mrb[0].mxu0 %v3947
      %v5435 = vpop.f32.mrb[0].mxu0
      %v5436 = vadd.f32 %v5251, %v5435
      %v5437 = vpop.f32.mrb[0].mxu0
      %v5438 = vpop.f32.mrb[0].mxu0
      %v5439 = vadd.f32 %v5254, %v5438
      %v5440 = vpop.f32.mrb[0].mxu0
      %5441 = vmatprep.mubr.bf16.mxu0 0
      %5442 = vmatmul.mubr.bf16.gmra.mrb[0].mxu0 %v3954
      %v5443 = vpop.f32.mrb[0].mxu0
      %v5444 = vadd.f32 %v5259, %v5443
      %v5445 = vpop.f32.mrb[0].mxu0
      %v5446 = vpop.f32.mrb[0].mxu0
      %v5447 = vadd.f32 %v5262, %v5446
      %v5448 = vpop.f32.mrb[0].mxu0
      %5449 = vmatprep.mubr.bf16.mxu0 0
      %5450 = vmatmul.mubr.bf16.gmra.mrb[0].mxu0 %v3961
      %v5451 = vpop.f32.mrb[0].mxu0
      %v5452 = vadd.f32 %v5267, %v5451
      %v5453 = vpop.f32.mrb[0].mxu0
      %v5454 = vpop.f32.mrb[0].mxu0
      %v5455 = vadd.f32 %v5270, %v5454
      %v5456 = vpop.f32.mrb[0].mxu0
      %5457 = vmatprep.mubr.bf16.mxu0 0
      %5458 = vmatmul.mubr.bf16.gmra.mrb[0].mxu0 %v3968
      %v5459 = vpop.f32.mrb[0].mxu0
      %v5460 = vadd.f32 %v5275, %v5459
      %v5461 = vpop.f32.mrb[0].mxu0
      %v5462 = vpop.f32.mrb[0].mxu0
      %v5463 = vadd.f32 %v5278, %v5462
      %v5464 = vpop.f32.mrb[0].mxu0
      %5465 = vmatprep.mubr.bf16.mxu0 0
      %5466 = vmatmul.mubr.bf16.gmra.mrb[0].mxu0 %v3975
      %v5467 = vpop.f32.mrb[0].mxu0
      %v5468 = vadd.f32 %v5283, %v5467
      %v5469 = vpop.f32.mrb[0].mxu0
      %v5470 = vpop.f32.mrb[0].mxu0
      %v5471 = vadd.f32 %v5286, %v5470
      %v5472 = vpop.f32.mrb[0].mxu0
      %5473 = vmatprep.mubr.bf16.mxu0 0
      %5474 = vmatmul.mubr.bf16.gmra.mrb[0].mxu0 %v3982
      %v5475 = vpop.f32.mrb[0].mxu0
      %v5476 = vadd.f32 %v5291, %v5475
      %v5477 = vpop.f32.mrb[0].mxu0
      %v5478 = vpop.f32.mrb[0].mxu0
      %v5479 = vadd.f32 %v5294, %v5478
      %v5480 = vpop.f32.mrb[0].mxu0
      %5481 = vmatprep.mubr.bf16.mxu0 0
      %5482 = vmatmul.mubr.bf16.gmra.mrb[0].mxu0 %v3989
      %v5483 = vpop.f32.mrb[0].mxu0
      %v5484 = vadd.f32 %v5299, %v5483
      %v5485 = vpop.f32.mrb[0].mxu0
      %v5486 = vpop.f32.mrb[0].mxu0
      %v5487 = vadd.f32 %v5302, %v5486
      %v5488 = vpop.f32.mrb[0].mxu0
      %5489 = vmatprep.mubr.bf16.mxu0 0
      %5490 = vmatmul.mubr.bf16.gmra.mrb[0].mxu0 %v3996
      %v5491 = vpop.f32.mrb[0].mxu0
      %v5492 = vadd.f32 %v5307, %v5491
      %v5493 = vpop.f32.mrb[0].mxu0
      %v5494 = vpop.f32.mrb[0].mxu0
      %v5495 = vadd.f32 %v5310, %v5494
      %v5496 = vpop.f32.mrb[0].mxu0
      %5497 = vmatprep.mubr.bf16.mxu0 0
      %5498 = vmatmul.mubr.bf16.gmra.mrb[0].mxu0 %v4003
      %v5499 = vpop.f32.mrb[0].mxu0
      %v5500 = vadd.f32 %v5315, %v5499
      %v5501 = vpop.f32.mrb[0].mxu0
      %v5502 = vpop.f32.mrb[0].mxu0
      %v5503 = vadd.f32 %v5318, %v5502
      %v5504 = vpop.f32.mrb[0].mxu0
      %5505 = vmatprep.mubr.bf16.mxu0 0
      %5506 = vmatmul.mubr.bf16.gmra.mrb[0].mxu0 %v4010
      %v5507 = vpop.f32.mrb[0].mxu0
      %v5508 = vadd.f32 %v5323, %v5507
      %v5509 = vpop.f32.mrb[0].mxu0
      %v5510 = vpop.f32.mrb[0].mxu0
      %v5511 = vadd.f32 %v5326, %v5510
      %v5512 = vpop.f32.mrb[0].mxu0
      %5513 = vmatprep.mubr.bf16.mxu0 0
      %5514 = vmatmul.mubr.bf16.gmra.mrb[0].mxu0 %v4017
      %v5515 = vpop.f32.mrb[0].mxu0
      %v5516 = vadd.f32 %v5331, %v5515
      %v5517 = vpop.f32.mrb[0].mxu0
      %v5518 = vpop.f32.mrb[0].mxu0
      %v5519 = vadd.f32 %v5334, %v5518
      %v5520 = vpop.f32.mrb[0].mxu0
      %5521 = vmatprep.mubr.bf16.mxu0 0
      %5522 = vmatmul.mubr.bf16.gmra.mrb[0].mxu0 %v4024
      %v5523 = vpop.f32.mrb[0].mxu0
      %v5524 = vadd.f32 %v5339, %v5523
      %v5525 = vpop.f32.mrb[0].mxu0
      %v5526 = vpop.f32.mrb[0].mxu0
      %v5527 = vadd.f32 %v5342, %v5526
      %v5528 = vpop.f32.mrb[0].mxu0
      %5529 = vmatprep.mubr.bf16.mxu0 0
      %5530 = vmatmul.mubr.bf16.gmra.mrb[0].mxu0 %v4031
      %v5531 = vpop.f32.mrb[0].mxu0
      %v5532 = vadd.f32 %v5347, %v5531
      %v5533 = vpop.f32.mrb[0].mxu0
      %v5534 = vpop.f32.mrb[0].mxu0
      %v5535 = vadd.f32 %v5350, %v5534
      %v5536 = vpop.f32.mrb[0].mxu0
      %5537 = vmatprep.mubr.bf16.mxu0 0
      %5538 = vmatmul.mubr.bf16.gmra.mrb[0].mxu0 %v4038
      %v5539 = vpop.f32.mrb[0].mxu0
      %v5540 = vadd.f32 %v5355, %v5539
      %v5541 = vpop.f32.mrb[0].mxu0
      %v5542 = vpop.f32.mrb[0].mxu0
      %v5543 = vadd.f32 %v5358, %v5542
      %v5544 = vpop.f32.mrb[0].mxu0
      %5545 = vmatprep.mubr.bf16.mxu0 0
      %5546 = vmatmul.mubr.bf16.gmra.mrb[0].mxu0 %v4045
      %v5547 = vpop.f32.mrb[0].mxu0
      %v5548 = vadd.f32 %v5363, %v5547
      %v5549 = vpop.f32.mrb[0].mxu0
      %v5550 = vpop.f32.mrb[0].mxu0
      %v5551 = vadd.f32 %v5366, %v5550
      %v5552 = vpop.f32.mrb[0].mxu0
      %5553 = vmatprep.mubr.bf16.mxu0 0
      %5554 = vmatmul.mubr.bf16.gmra.mrb[0].mxu0 %v4052
      %v5555 = vpop.f32.mrb[0].mxu0
      %v5556 = vadd.f32 %v5371, %v5555
      %v5557 = vpop.f32.mrb[0].mxu0
      %v5558 = vpop.f32.mrb[0].mxu0
      %v5559 = vadd.f32 %v5374, %v5558
      %v5560 = vpop.f32.mrb[0].mxu0
      %5561 = vmatprep.mubr.bf16.mxu0 0
      %5562 = vmatmul.mubr.bf16.gmra.mrb[0].mxu0 %v4061
      %v5563 = vpop.f32.mrb[0].mxu0
      %v5564 = vadd.f32 %v5379, %v5563
      %v5565 = vpop.f32.mrb[0].mxu0
      %v5566 = vpop.f32.mrb[0].mxu0
      %v5567 = vadd.f32 %v5382, %v5566
      %v5568 = vpop.f32.mrb[0].mxu0
      %5569 = vdwg.mxu0
      %v5570 = vpack.c.bf16 %v391, %v390
      %v5571 = vld [vmem:[%s6] sm:$0xf]
      %v5572 = vld [vmem:[%s6 + $0x4] sm:$0xf]
      %v5573 = vld [vmem:[%s6 + $0x8] sm:$0xf]
      %v5574 = vld [vmem:[%s6 + $0xc] sm:$0xf]
      %v5575 = vld [vmem:[%s6 + $0x10] sm:$0xf]
      %v5576 = vld [vmem:[%s6 + $0x14] sm:$0xf]
      %v5577 = vld [vmem:[%s6 + $0x18] sm:$0xf]
      %v5578 = vld [vmem:[%s6 + $0x1c] sm:$0xf]
      %v5579 = vld [vmem:[%s6 + $0x20] sm:$0xf]
      %v5580 = vld [vmem:[%s6 + $0x24] sm:$0xf]
      %v5581 = vld [vmem:[%s6 + $0x28] sm:$0xf]
      %v5582 = vld [vmem:[%s6 + $0x2c] sm:$0xf]
      %v5583 = vld [vmem:[%s6 + $0x30] sm:$0xf]
      %v5584 = vld [vmem:[%s6 + $0x34] sm:$0xf]
      %v5585 = vld [vmem:[%s6 + $0x38] sm:$0xf]
      %v5586 = vld [vmem:[%s6 + $0x3c] sm:$0xf]
      %v5587 = vld [vmem:[%s7] sm:$0x1]
      %v5589 = vlaneseq
      %v5590 = vshrl.u32 %v5589, 7
      %v5591 = vsub.s32 0, %v5590
      %v5592 = vrot.slane %v5587, %v5591
      %vm5594 = vsmask.f32 6400
      %v5596 = vshrl.u32 %v1181, 16
      %v5598 = vrot.slane %v5596, 1
      %v5599 = vshll.u32 %v1181, 16
      %v5601 = vrot.slane %v5599, 2
      %v5602 = vor.u32 %v5598, %v5601
      %v5604 = vshrl.u32 %v1188, 16
      %v5606 = vrot.slane %v5604, 1
      %v5607 = vshll.u32 %v1188, 16
      %v5609 = vrot.slane %v5607, 2
      %v5610 = vor.u32 %v5606, %v5609
      %v5611 = vsel %vm5594, %v5602, %v5610
      %v5613 = vshrl.u32 %v1195, 16
      %v5615 = vrot.slane %v5613, 1
      %v5616 = vshll.u32 %v1195, 16
      %v5618 = vrot.slane %v5616, 2
      %v5619 = vor.u32 %v5615, %v5618
      %v5620 = vsel %vm5594, %v5610, %v5619
      %v5622 = vshrl.u32 %v1202, 16
      %v5624 = vrot.slane %v5622, 1
      %v5625 = vshll.u32 %v1202, 16
      %v5627 = vrot.slane %v5625, 2
      %v5628 = vor.u32 %v5624, %v5627
      %v5629 = vsel %vm5594, %v5619, %v5628
      %v5631 = vshrl.u32 %v1209, 16
      %v5633 = vrot.slane %v5631, 1
      %v5634 = vshll.u32 %v1209, 16
      %v5636 = vrot.slane %v5634, 2
      %v5637 = vor.u32 %v5633, %v5636
      %v5638 = vsel %vm5594, %v5628, %v5637
      %v5640 = vshrl.u32 %v1216, 16
      %v5642 = vrot.slane %v5640, 1
      %v5643 = vshll.u32 %v1216, 16
      %v5645 = vrot.slane %v5643, 2
      %v5646 = vor.u32 %v5642, %v5645
      %v5647 = vsel %vm5594, %v5637, %v5646
      %v5649 = vshrl.u32 %v1223, 16
      %v5651 = vrot.slane %v5649, 1
      %v5652 = vshll.u32 %v1223, 16
      %v5654 = vrot.slane %v5652, 2
      %v5655 = vor.u32 %v5651, %v5654
      %v5656 = vsel %vm5594, %v5646, %v5655
      %v5658 = vshrl.u32 %v1230, 16
      %v5660 = vrot.slane %v5658, 1
      %v5661 = vshll.u32 %v1230, 16
      %v5663 = vrot.slane %v5661, 2
      %v5664 = vor.u32 %v5660, %v5663
      %v5665 = vsel %vm5594, %v5655, %v5664
      %v5667 = vshrl.u32 %v1237, 16
      %v5669 = vrot.slane %v5667, 1
      %v5670 = vshll.u32 %v1237, 16
      %v5672 = vrot.slane %v5670, 2
      %v5673 = vor.u32 %v5669, %v5672
      %v5674 = vsel %vm5594, %v5664, %v5673
      %v5676 = vshrl.u32 %v1244, 16
      %v5678 = vrot.slane %v5676, 1
      %v5679 = vshll.u32 %v1244, 16
      %v5681 = vrot.slane %v5679, 2
      %v5682 = vor.u32 %v5678, %v5681
      %v5683 = vsel %vm5594, %v5673, %v5682
      %v5685 = vshrl.u32 %v1251, 16
      %v5687 = vrot.slane %v5685, 1
      %v5688 = vshll.u32 %v1251, 16
      %v5690 = vrot.slane %v5688, 2
      %v5691 = vor.u32 %v5687, %v5690
      %v5692 = vsel %vm5594, %v5682, %v5691
      %v5694 = vshrl.u32 %v1258, 16
      %v5696 = vrot.slane %v5694, 1
      %v5697 = vshll.u32 %v1258, 16
      %v5699 = vrot.slane %v5697, 2
      %v5700 = vor.u32 %v5696, %v5699
      %v5701 = vsel %vm5594, %v5691, %v5700
      %v5703 = vshrl.u32 %v1265, 16
      %v5705 = vrot.slane %v5703, 1
      %v5706 = vshll.u32 %v1265, 16
      %v5708 = vrot.slane %v5706, 2
      %v5709 = vor.u32 %v5705, %v5708
      %v5710 = vsel %vm5594, %v5700, %v5709
      %v5712 = vshrl.u32 %v1272, 16
      %v5714 = vrot.slane %v5712, 1
      %v5715 = vshll.u32 %v1272, 16
      %v5717 = vrot.slane %v5715, 2
      %v5718 = vor.u32 %v5714, %v5717
      %v5719 = vsel %vm5594, %v5709, %v5718
      %v5721 = vshrl.u32 %v1279, 16
      %v5723 = vrot.slane %v5721, 1
      %v5724 = vshll.u32 %v1279, 16
      %v5726 = vrot.slane %v5724, 2
      %v5727 = vor.u32 %v5723, %v5726
      %v5728 = vsel %vm5594, %v5718, %v5727
      %v5730 = vshrl.u32 %v1286, 16
      %v5732 = vrot.slane %v5730, 1
      %v5733 = vshll.u32 %v1286, 16
      %v5735 = vrot.slane %v5733, 2
      %v5736 = vor.u32 %v5732, %v5735
      %v5737 = vsel %vm5594, %v5727, %v5736
      %v5739 = vshrl.u32 %v1293, 16
      %v5741 = vrot.slane %v5739, 1
      %v5742 = vshll.u32 %v1293, 16
      %v5744 = vrot.slane %v5742, 2
      %v5745 = vor.u32 %v5741, %v5744
      %v5746 = vsel %vm5594, %v5736, %v5745
      %v5748 = vshrl.u32 %v1300, 16
      %v5750 = vrot.slane %v5748, 1
      %v5751 = vshll.u32 %v1300, 16
      %v5753 = vrot.slane %v5751, 2
      %v5754 = vor.u32 %v5750, %v5753
      %v5755 = vsel %vm5594, %v5745, %v5754
      %v5757 = vshrl.u32 %v5570, 16
      %v5759 = vrot.slane %v5757, 1
      %v5760 = vshll.u32 %v5570, 16
      %v5762 = vrot.slane %v5760, 2
      %v5763 = vor.u32 %v5759, %v5762
      %v5764 = vsel %vm5594, %v5754, %v5763
      %v5800 = vunpack.c.l.b16 %v5571
      %v5801 = vunpack.c.l.b16 %v5572
      %v5802 = vunpack.c.l.b16 %v5573
      %v5803 = vunpack.c.l.b16 %v5574
      %v5804 = vunpack.c.l.b16 %v5575
      %v5805 = vunpack.c.l.b16 %v5576
      %v5806 = vunpack.c.l.b16 %v5577
      %v5807 = vunpack.c.l.b16 %v5578
      %v5808 = vunpack.c.l.b16 %v5579
      %v5809 = vunpack.c.l.b16 %v5580
      %v5810 = vunpack.c.l.b16 %v5581
      %v5811 = vunpack.c.l.b16 %v5582
      %v5812 = vunpack.c.l.b16 %v5583
      %v5813 = vunpack.c.l.b16 %v5584
      %v5814 = vunpack.c.l.b16 %v5585
      %v5815 = vunpack.c.l.b16 %v5586
      %v5816 = vpack.c.b16 %v5801, %v5800
      %v5817 = vpack.c.b16 %v5803, %v5802
      %v5818 = vpack.c.b16 %v5805, %v5804
      %v5819 = vpack.c.b16 %v5807, %v5806
      %v5820 = vpack.c.b16 %v5809, %v5808
      %v5821 = vpack.c.b16 %v5811, %v5810
      %v5822 = vpack.c.b16 %v5813, %v5812
      %v5823 = vpack.c.b16 %v5815, %v5814
      %5832 = vmatprep.subr.bf16.mxu0 0
      %5833 = vmatpush1.bf16.msra.mxu0 %v5816
      %5834 = vmatprep.subr.bf16.mxu0 0
      %5835 = vmatpush1.bf16.msra.mxu0 %v5817
      %5836 = vmatprep.subr.bf16.mxu0 0
      %5837 = vmatpush1.bf16.msra.mxu0 %v5818
      %5838 = vmatprep.subr.bf16.mxu0 0
      %5839 = vmatpush1.bf16.msra.mxu0 %v5819
      %5840 = vmatprep.subr.bf16.mxu0 0
      %5841 = vmatpush1.bf16.msra.mxu0 %v5820
      %5842 = vmatprep.subr.bf16.mxu0 0
      %5843 = vmatpush1.bf16.msra.mxu0 %v5821
      %5844 = vmatprep.subr.bf16.mxu0 0
      %5845 = vmatpush1.bf16.msra.mxu0 %v5822
      %5846 = vmatprep.subr.bf16.mxu0 0
      %5847 = vmatpush1.bf16.msra.mxu0 %v5823
      %5848 = vmatprep.subr.bf16.mxu0 0
      %5849 = vmatpush1.bf16.msra.mxu0 0
      %5850 = vmatprep.subr.bf16.mxu0 0
      %5851 = vmatpush1.bf16.msra.mxu0 0
      %5852 = vmatprep.subr.bf16.mxu0 0
      %5853 = vmatpush1.bf16.msra.mxu0 0
      %5854 = vmatprep.subr.bf16.mxu0 0
      %5855 = vmatpush1.bf16.msra.mxu0 0
      %5856 = vmatprep.subr.bf16.mxu0 0
      %5857 = vmatpush1.bf16.msra.mxu0 0
      %5858 = vmatprep.subr.bf16.mxu0 0
      %5859 = vmatpush1.bf16.msra.mxu0 0
      %5860 = vmatprep.subr.bf16.mxu0 0
      %5861 = vmatpush1.bf16.msra.mxu0 0
      %5862 = vmatprep.subr.bf16.mxu0 0
      %5863 = vmatpush1.bf16.msra.mxu0 0
      %5864 = vmatprep.mubr.bf16.mxu0 0
      %5865 = vmatmul.mubr.bf16.gmra.mrb[0].mxu0 %v5611
      %v5866 = vpop.f32.mrb[0].mxu0
      %v5867 = vadd.f32 %v5592, %v5866
      %v5868 = vpop.f32.mrb[0].mxu0
      %v5869 = vpop.f32.mrb[0].mxu0
      %v5870 = vadd.f32 %v5592, %v5869
      %v5871 = vpop.f32.mrb[0].mxu0
      %5872 = vmatprep.mubr.bf16.mxu0 0
      %5873 = vmatmul.mubr.bf16.gmra.mrb[0].mxu0 %v5620
      %v5874 = vpop.f32.mrb[0].mxu0
      %v5875 = vadd.f32 %v5592, %v5874
      %v5876 = vpop.f32.mrb[0].mxu0
      %v5877 = vpop.f32.mrb[0].mxu0
      %v5878 = vadd.f32 %v5592, %v5877
      %v5879 = vpop.f32.mrb[0].mxu0
      %5880 = vmatprep.mubr.bf16.mxu0 0
      %5881 = vmatmul.mubr.bf16.gmra.mrb[0].mxu0 %v5629
      %v5882 = vpop.f32.mrb[0].mxu0
      %v5883 = vadd.f32 %v5592, %v5882
      %v5884 = vpop.f32.mrb[0].mxu0
      %v5885 = vpop.f32.mrb[0].mxu0
      %v5886 = vadd.f32 %v5592, %v5885
      %v5887 = vpop.f32.mrb[0].mxu0
      %5888 = vmatprep.mubr.bf16.mxu0 0
      %5889 = vmatmul.mubr.bf16.gmra.mrb[0].mxu0 %v5638
      %v5890 = vpop.f32.mrb[0].mxu0
      %v5891 = vadd.f32 %v5592, %v5890
      %v5892 = vpop.f32.mrb[0].mxu0
      %v5893 = vpop.f32.mrb[0].mxu0
      %v5894 = vadd.f32 %v5592, %v5893
      %v5895 = vpop.f32.mrb[0].mxu0
      %5896 = vmatprep.mubr.bf16.mxu0 0
      %5897 = vmatmul.mubr.bf16.gmra.mrb[0].mxu0 %v5647
      %v5898 = vpop.f32.mrb[0].mxu0
      %v5899 = vadd.f32 %v5592, %v5898
      %v5900 = vpop.f32.mrb[0].mxu0
      %v5901 = vpop.f32.mrb[0].mxu0
      %v5902 = vadd.f32 %v5592, %v5901
      %v5903 = vpop.f32.mrb[0].mxu0
      %5904 = vmatprep.mubr.bf16.mxu0 0
      %5905 = vmatmul.mubr.bf16.gmra.mrb[0].mxu0 %v5656
      %v5906 = vpop.f32.mrb[0].mxu0
      %v5907 = vadd.f32 %v5592, %v5906
      %v5908 = vpop.f32.mrb[0].mxu0
      %v5909 = vpop.f32.mrb[0].mxu0
      %v5910 = vadd.f32 %v5592, %v5909
      %v5911 = vpop.f32.mrb[0].mxu0
      %5912 = vmatprep.mubr.bf16.mxu0 0
      %5913 = vmatmul.mubr.bf16.gmra.mrb[0].mxu0 %v5665
      %v5914 = vpop.f32.mrb[0].mxu0
      %v5915 = vadd.f32 %v5592, %v5914
      %v5916 = vpop.f32.mrb[0].mxu0
      %v5917 = vpop.f32.mrb[0].mxu0
      %v5918 = vadd.f32 %v5592, %v5917
      %v5919 = vpop.f32.mrb[0].mxu0
      %5920 = vmatprep.mubr.bf16.mxu0 0
      %5921 = vmatmul.mubr.bf16.gmra.mrb[0].mxu0 %v5674
      %v5922 = vpop.f32.mrb[0].mxu0
      %v5923 = vadd.f32 %v5592, %v5922
      %v5924 = vpop.f32.mrb[0].mxu0
      %v5925 = vpop.f32.mrb[0].mxu0
      %v5926 = vadd.f32 %v5592, %v5925
      %v5927 = vpop.f32.mrb[0].mxu0
      %5928 = vmatprep.mubr.bf16.mxu0 0
      %5929 = vmatmul.mubr.bf16.gmra.mrb[0].mxu0 %v5683
      %v5930 = vpop.f32.mrb[0].mxu0
      %v5931 = vadd.f32 %v5592, %v5930
      %v5932 = vpop.f32.mrb[0].mxu0
      %v5933 = vpop.f32.mrb[0].mxu0
      %v5934 = vadd.f32 %v5592, %v5933
      %v5935 = vpop.f32.mrb[0].mxu0
      %5936 = vmatprep.mubr.bf16.mxu0 0
      %5937 = vmatmul.mubr.bf16.gmra.mrb[0].mxu0 %v5692
      %v5938 = vpop.f32.mrb[0].mxu0
      %v5939 = vadd.f32 %v5592, %v5938
      %v5940 = vpop.f32.mrb[0].mxu0
      %v5941 = vpop.f32.mrb[0].mxu0
      %v5942 = vadd.f32 %v5592, %v5941
      %v5943 = vpop.f32.mrb[0].mxu0
      %5944 = vmatprep.mubr.bf16.mxu0 0
      %5945 = vmatmul.mubr.bf16.gmra.mrb[0].mxu0 %v5701
      %v5946 = vpop.f32.mrb[0].mxu0
      %v5947 = vadd.f32 %v5592, %v5946
      %v5948 = vpop.f32.mrb[0].mxu0
      %v5949 = vpop.f32.mrb[0].mxu0
      %v5950 = vadd.f32 %v5592, %v5949
      %v5951 = vpop.f32.mrb[0].mxu0
      %5952 = vmatprep.mubr.bf16.mxu0 0
      %5953 = vmatmul.mubr.bf16.gmra.mrb[0].mxu0 %v5710
      %v5954 = vpop.f32.mrb[0].mxu0
      %v5955 = vadd.f32 %v5592, %v5954
      %v5956 = vpop.f32.mrb[0].mxu0
      %v5957 = vpop.f32.mrb[0].mxu0
      %v5958 = vadd.f32 %v5592, %v5957
      %v5959 = vpop.f32.mrb[0].mxu0
      %5960 = vmatprep.mubr.bf16.mxu0 0
      %5961 = vmatmul.mubr.bf16.gmra.mrb[0].mxu0 %v5719
      %v5962 = vpop.f32.mrb[0].mxu0
      %v5963 = vadd.f32 %v5592, %v5962
      %v5964 = vpop.f32.mrb[0].mxu0
      %v5965 = vpop.f32.mrb[0].mxu0
      %v5966 = vadd.f32 %v5592, %v5965
      %v5967 = vpop.f32.mrb[0].mxu0
      %5968 = vmatprep.mubr.bf16.mxu0 0
      %5969 = vmatmul.mubr.bf16.gmra.mrb[0].mxu0 %v5728
      %v5970 = vpop.f32.mrb[0].mxu0
      %v5971 = vadd.f32 %v5592, %v5970
      %v5972 = vpop.f32.mrb[0].mxu0
      %v5973 = vpop.f32.mrb[0].mxu0
      %v5974 = vadd.f32 %v5592, %v5973
      %v5975 = vpop.f32.mrb[0].mxu0
      %5976 = vmatprep.mubr.bf16.mxu0 0
      %5977 = vmatmul.mubr.bf16.gmra.mrb[0].mxu0 %v5737
      %v5978 = vpop.f32.mrb[0].mxu0
      %v5979 = vadd.f32 %v5592, %v5978
      %v5980 = vpop.f32.mrb[0].mxu0
      %v5981 = vpop.f32.mrb[0].mxu0
      %v5982 = vadd.f32 %v5592, %v5981
      %v5983 = vpop.f32.mrb[0].mxu0
      %5984 = vmatprep.mubr.bf16.mxu0 0
      %5985 = vmatmul.mubr.bf16.gmra.mrb[0].mxu0 %v5746
      %v5986 = vpop.f32.mrb[0].mxu0
      %v5987 = vadd.f32 %v5592, %v5986
      %v5988 = vpop.f32.mrb[0].mxu0
      %v5989 = vpop.f32.mrb[0].mxu0
      %v5990 = vadd.f32 %v5592, %v5989
      %v5991 = vpop.f32.mrb[0].mxu0
      %5992 = vmatprep.mubr.bf16.mxu0 0
      %5993 = vmatmul.mubr.bf16.gmra.mrb[0].mxu0 %v5755
      %v5994 = vpop.f32.mrb[0].mxu0
      %v5995 = vadd.f32 %v5592, %v5994
      %v5996 = vpop.f32.mrb[0].mxu0
      %v5997 = vpop.f32.mrb[0].mxu0
      %v5998 = vadd.f32 %v5592, %v5997
      %v5999 = vpop.f32.mrb[0].mxu0
      %6000 = vmatprep.mubr.bf16.mxu0 0
      %6001 = vmatmul.mubr.bf16.gmra.mrb[0].mxu0 %v5764
      %v6002 = vpop.f32.mrb[0].mxu0
      %v6003 = vadd.f32 %v5592, %v6002
      %v6004 = vpop.f32.mrb[0].mxu0
      %v6005 = vpop.f32.mrb[0].mxu0
      %v6006 = vadd.f32 %v5592, %v6005
      %v6007 = vpop.f32.mrb[0].mxu0
      %6008 = vmatprep.mubr.bf16.mxu0 0
      %6009 = vmatmul.mubr.bf16.gmra.mrb[0].mxu0 %v5763
      %v6010 = vpop.f32.mrb[0].mxu0
      %v6011 = vadd.f32 %v5592, %v6010
      %v6012 = vpop.f32.mrb[0].mxu0
      %v6013 = vpop.f32.mrb[0].mxu0
      %v6014 = vadd.f32 %v5592, %v6013
      %v6015 = vpop.f32.mrb[0].mxu0
      %6016 = vdwg.mxu0
      %v6017 = vadd.f32 %v5420, %v5867
      %v6018 = vadd.f32 %v5423, %v5870
      %v6019 = vadd.f32 %v5428, %v5875
      %v6020 = vadd.f32 %v5431, %v5878
      %v6021 = vadd.f32 %v5436, %v5883
      %v6022 = vadd.f32 %v5439, %v5886
      %v6023 = vadd.f32 %v5444, %v5891
      %v6024 = vadd.f32 %v5447, %v5894
      %v6025 = vadd.f32 %v5452, %v5899
      %v6026 = vadd.f32 %v5455, %v5902
      %v6027 = vadd.f32 %v5460, %v5907
      %v6028 = vadd.f32 %v5463, %v5910
      %v6029 = vadd.f32 %v5468, %v5915
      %v6030 = vadd.f32 %v5471, %v5918
      %v6031 = vadd.f32 %v5476, %v5923
      %v6032 = vadd.f32 %v5479, %v5926
      %v6033 = vadd.f32 %v5484, %v5931
      %v6034 = vadd.f32 %v5487, %v5934
      %v6035 = vadd.f32 %v5492, %v5939
      %v6036 = vadd.f32 %v5495, %v5942
      %v6037 = vadd.f32 %v5500, %v5947
      %v6038 = vadd.f32 %v5503, %v5950
      %v6039 = vadd.f32 %v5508, %v5955
      %v6040 = vadd.f32 %v5511, %v5958
      %v6041 = vadd.f32 %v5516, %v5963
      %v6042 = vadd.f32 %v5519, %v5966
      %v6043 = vadd.f32 %v5524, %v5971
      %v6044 = vadd.f32 %v5527, %v5974
      %v6045 = vadd.f32 %v5532, %v5979
      %v6046 = vadd.f32 %v5535, %v5982
      %v6047 = vadd.f32 %v5540, %v5987
      %v6048 = vadd.f32 %v5543, %v5990
      %v6049 = vadd.f32 %v5548, %v5995
      %v6050 = vadd.f32 %v5551, %v5998
      %v6051 = vadd.f32 %v5556, %v6003
      %v6052 = vadd.f32 %v5559, %v6006
      %v6053 = vadd.f32 %v5564, %v6011
      %v6054 = vadd.f32 %v5567, %v6014
      %v6055 = vmax.f32 %v6017, 0.0
      %v6056 = vmax.f32 %v6018, 0.0
      %v6057 = vmax.f32 %v6019, 0.0
      %v6058 = vmax.f32 %v6020, 0.0
      %v6059 = vmax.f32 %v6021, 0.0
      %v6060 = vmax.f32 %v6022, 0.0
      %v6061 = vmax.f32 %v6023, 0.0
      %v6062 = vmax.f32 %v6024, 0.0
      %v6063 = vmax.f32 %v6025, 0.0
      %v6064 = vmax.f32 %v6026, 0.0
      %v6065 = vmax.f32 %v6027, 0.0
      %v6066 = vmax.f32 %v6028, 0.0
      %v6067 = vmax.f32 %v6029, 0.0
      %v6068 = vmax.f32 %v6030, 0.0
      %v6069 = vmax.f32 %v6031, 0.0
      %v6070 = vmax.f32 %v6032, 0.0
      %v6071 = vmax.f32 %v6033, 0.0
      %v6072 = vmax.f32 %v6034, 0.0
      %v6073 = vmax.f32 %v6035, 0.0
      %v6074 = vmax.f32 %v6036, 0.0
      %v6075 = vmax.f32 %v6037, 0.0
      %v6076 = vmax.f32 %v6038, 0.0
      %v6077 = vmax.f32 %v6039, 0.0
      %v6078 = vmax.f32 %v6040, 0.0
      %v6079 = vmax.f32 %v6041, 0.0
      %v6080 = vmax.f32 %v6042, 0.0
      %v6081 = vmax.f32 %v6043, 0.0
      %v6082 = vmax.f32 %v6044, 0.0
      %v6083 = vmax.f32 %v6045, 0.0
      %v6084 = vmax.f32 %v6046, 0.0
      %v6085 = vmax.f32 %v6047, 0.0
      %v6086 = vmax.f32 %v6048, 0.0
      %v6087 = vmax.f32 %v6049, 0.0
      %v6088 = vmax.f32 %v6050, 0.0
      %v6089 = vmax.f32 %v6051, 0.0
      %v6090 = vmax.f32 %v6052, 0.0
      %v6091 = vmax.f32 %v6053, 0.0
      %v6092 = vmax.f32 %v6054, 0.0
      %6093 = vst [vmem:[%s307] sm:$0xff] %v6055
      %6094 = vst [vmem:[%s307 + $0x8] sm:$0xff] %v6056
      %6095 = vst [vmem:[%s307 + $0x10] sm:$0xff] %v6057
      %6096 = vst [vmem:[%s307 + $0x18] sm:$0xff] %v6058
      %6097 = vst [vmem:[%s307 + $0x20] sm:$0xff] %v6059
      %6098 = vst [vmem:[%s307 + $0x28] sm:$0xff] %v6060
      %6099 = vst [vmem:[%s307 + $0x30] sm:$0xff] %v6061
      %6100 = vst [vmem:[%s307 + $0x38] sm:$0xff] %v6062
      %6101 = vst [vmem:[%s307 + $0x40] sm:$0xff] %v6063
      %6102 = vst [vmem:[%s307 + $0x48] sm:$0xff] %v6064
      %6103 = vst [vmem:[%s307 + $0x50] sm:$0xff] %v6065
      %6104 = vst [vmem:[%s307 + $0x58] sm:$0xff] %v6066
      %6105 = vst [vmem:[%s307 + $0x60] sm:$0xff] %v6067
      %6106 = vst [vmem:[%s307 + $0x68] sm:$0xff] %v6068
      %6107 = vst [vmem:[%s307 + $0x70] sm:$0xff] %v6069
      %6108 = vst [vmem:[%s307 + $0x78] sm:$0xff] %v6070
      %6109 = vst [vmem:[%s307 + $0x80] sm:$0xff] %v6071
      %6110 = vst [vmem:[%s307 + $0x88] sm:$0xff] %v6072
      %6111 = vst [vmem:[%s307 + $0x90] sm:$0xff] %v6073
      %6112 = vst [vmem:[%s307 + $0x98] sm:$0xff] %v6074
      %6113 = vst [vmem:[%s307 + $0xa0] sm:$0xff] %v6075
      %6114 = vst [vmem:[%s307 + $0xa8] sm:$0xff] %v6076
      %6115 = vst [vmem:[%s307 + $0xb0] sm:$0xff] %v6077
      %6116 = vst [vmem:[%s307 + $0xb8] sm:$0xff] %v6078
      %6117 = vst [vmem:[%s307 + $0xc0] sm:$0xff] %v6079
      %6118 = vst [vmem:[%s307 + $0xc8] sm:$0xff] %v6080
      %6119 = vst [vmem:[%s307 + $0xd0] sm:$0xff] %v6081
      %6120 = vst [vmem:[%s307 + $0xd8] sm:$0xff] %v6082
      %6121 = vst [vmem:[%s307 + $0xe0] sm:$0xff] %v6083
      %6122 = vst [vmem:[%s307 + $0xe8] sm:$0xff] %v6084
      %6123 = vst [vmem:[%s307 + $0xf0] sm:$0xff] %v6085
      %6124 = vst [vmem:[%s307 + $0xf8] sm:$0xff] %v6086
      %6125 = vst [vmem:[%s307 + $0x100] sm:$0xff] %v6087
      %6126 = vst [vmem:[%s307 + $0x108] sm:$0xff] %v6088
      %6127 = vst [vmem:[%s307 + $0x110] sm:$0xff] %v6089
      %6128 = vst [vmem:[%s307 + $0x118] sm:$0xff] %v6090
      %6129 = vst [vmem:[%s307 + $0x120] sm:$0xff] %v6091
      %6130 = vst [vmem:[%s307 + $0x128] sm:$0x3] %v6092
      %6131 = vst [vmem:[%s307 + $0x12a] sm:$0xff] 0.0
      %6132 = vst [vmem:[%s307 + $0x132] sm:$0xff] 0.0
      %6133 = vst [vmem:[%s307 + $0x13a] sm:$0xff] 0.0
      %6134 = vst [vmem:[%s307 + $0x142] sm:$0xff] 0.0
      %6135 = vst [vmem:[%s307 + $0x14a] sm:$0x3f] 0.0
      %s6136 = smul.u32 42, %s19
      %p6137 = scmp.lt.s32.totalorder %s6136, 83
      %s6138 = scalar_select %p6137, %s6136, 83
      %s6139 = smul.addr %s6138, 8
      %s6140 = scalar_lea.vmem %s8, %s6139
      // Predicated region
      $region53: #{residual_block_forward.1} parent=51 // pred_check
        %p6141 = pneg %p210
      $region54: #{residual_block_forward.1} parent=51 // pred_check_branch
        %6143 = sbr.rel (%p6141) target = $region56
      $region55: #{residual_block_forward.1} parent=51 // pred_region
        %s6144 = smul.u32 42, %s19
      $region56: #{residual_block_forward.1} parent=51 // pred_fallthru
        _
    $region52: #{residual_block_forward.1} parent=5 // pred_fallthru
      _
    %p6145 = scmp.le.s32.totalorder 2, %s14
    // Predicated region
    $region57: #{residual_block_forward.1} parent=5 // pred_check
      %p6146 = pneg %p6145
    $region58: #{residual_block_forward.1} parent=5 // pred_check_branch
      %6148 = sbr.rel (%p6146) target = $region60
    $region59: #{residual_block_forward.1} parent=5 // pred_region
      %s6149 = ssub.s32 %s14, 2
      // Predicated region
      $region61: #{residual_block_forward.1} parent=59 // pred_check
        %p6150 = pneg %p216
      $region62: #{residual_block_forward.1} parent=59 // pred_check_branch
        %6152 = sbr.rel (%p6150) target = $region64
      $region63: #{residual_block_forward.1} parent=59 // pred_region
        %s6153 = smul.u32 42, %s20
        %p6154 = scmp.lt.s32.totalorder %s6153, 83
        %s6155 = scalar_select %p6154, %s6153, 83
        %s6156 = smul.addr %s6155, 8
        %s6157 = scalar_lea.vmem %s8, %s6156
      $region64: #{residual_block_forward.1} parent=59 // pred_fallthru
        _
    $region60: #{residual_block_forward.1} parent=5 // pred_fallthru
      _
  $region6: #{residual_block_forward.1} parent=0 // loop_footer
    %s18 = sadd.s32 1, %s14
  $region7: #{residual_block_forward.1} parent=0 // loop_footer_branch
    %13 = sbr.rel target = $region3
  $region8: #{residual_block_forward.1} parent=0 // loop_exit
    _

</llo_original>
